<compile_context>
chip_gen: v5e
topology: v5e:2x2
jax: 0.10.0
libtpu: 0.0.40
codegen_flags: <defaults>
</compile_context>

<pallas_src>
import jax
import jax.numpy as jnp
from jax.experimental import pallas as pl
from jax.experimental.pallas import tpu as pltpu


# --------------------------- per-generation knobs ----------------------------

def _vmem_capacity_bytes():
    try:
        return int(pltpu.get_tpu_info().vmem_capacity_bytes)
    except Exception:
        return 64 * 1024 * 1024          # unknown -> conservative (v7x-like)


_VMEM_CAP = _vmem_capacity_bytes()
_BIG_VMEM = _VMEM_CAP >= 100 * 1024 * 1024            # v5e / v6e (128 MiB physical)
_VMEM_LIMIT = (64 if _BIG_VMEM else 32) * 1024 * 1024  # v7x stays at 32 MiB
_MM_TM = 1024 if _BIG_VMEM else 512
_MM_TN = 1024 if _BIG_VMEM else 512
_MM_TK = 512


# ------------------------------- helpers ------------------------------------

def _round_up(x, m):
    return ((x + m - 1) // m) * m


def _pad2(a, rows, cols):
    r, c = a.shape
    if r == rows and c == cols:
        return a
    return jnp.pad(a, ((0, rows - r), (0, cols - c)))


# --------------------------- Pallas kernel bodies ---------------------------

def _mm_bias_kernel(x_ref, w_ref, b_ref, o_ref, acc_ref):
    # (tm, tk) @ (tk, tn) accumulated over the K grid axis; bias added at finalize.
    @pl.when(pl.program_id(2) == 0)
    def _():
        acc_ref[...] = jnp.zeros_like(acc_ref)

    acc_ref[...] += jnp.dot(x_ref[...], w_ref[...], preferred_element_type=jnp.float32)

    @pl.when(pl.program_id(2) == pl.num_programs(2) - 1)
    def _():
        o_ref[...] = (acc_ref[...] + b_ref[...]).astype(o_ref.dtype)


def _mm_bias_add_kernel(x_ref, w_ref, b_ref, a_ref, o_ref, acc_ref):
    # Same, but fuses the bf16 top-down FPN residual before the single store.
    @pl.when(pl.program_id(2) == 0)
    def _():
        acc_ref[...] = jnp.zeros_like(acc_ref)

    acc_ref[...] += jnp.dot(x_ref[...], w_ref[...], preferred_element_type=jnp.float32)

    @pl.when(pl.program_id(2) == pl.num_programs(2) - 1)
    def _():
        o_ref[...] = (acc_ref[...] + b_ref[...]
                      + a_ref[...].astype(jnp.float32)).astype(o_ref.dtype)


def _make_conv3x3_kernel(th, wpp, w_valid):
    # 3x3 / pad-1 / stride-1 conv on one spatial row-tile of one image:
    # 9 shifted (L, Cin)@(Cin, Cout) matmuls accumulated in a VMEM f32 scratch.
    #   x_ref: (1, 1, L=th*wpp, Cin)   bf16 main rows of the padded tile
    #   h_ref: (1, 1, 2*wpp, Cin)      bf16 2-row halo below the tile
    #   w_ref: (9, Cin, Cout)          bf16 taps (kh*3+kw, Cin, Cout), resident
    #   o_ref: (1, th, W, Cout)        bf16, only the W valid columns are stored
    L = th * wpp

    def kernel(x_ref, h_ref, w_ref, b_ref, o_ref, xs_ref, acc_ref):
        cin = xs_ref.shape[-1]
        # Assemble the (th+2)-row padded tile contiguously in VMEM (bf16, cast-free),
        # plus one zero guard row so all shifted tap reads stay inside the allocation.
        xs_ref[pl.ds(0, L), :] = x_ref[0, 0]
        xs_ref[pl.ds(L, 2 * wpp), :] = h_ref[0, 0]
        xs_ref[pl.ds(L + 2 * wpp, wpp), :] = jnp.zeros((wpp, cin), xs_ref.dtype)

        for t in range(9):
            di, dj = divmod(t, 3)
            off = di * wpp + dj
            p = jnp.dot(xs_ref[pl.ds(off, L), :], w_ref[t],
                        preferred_element_type=jnp.float32)
            if t == 0:
                acc_ref[...] = p
            else:
                acc_ref[...] += p

        res = (acc_ref[...] + b_ref[...]).astype(o_ref.dtype)
        # Drop the width padding in VMEM -> lane-dense store of only the valid columns,
        # no post-kernel HBM slice needed.
        o_ref[0] = res.reshape(th, wpp, res.shape[-1])[:, :w_valid, :]

    return kernel


# ------------------------------ call wrappers --------------------------------

def matmul_bias(x, w, b, add=None, tm=None, tn=None, tk=None):
    """out = x @ w + b (+ add); bf16 in/out, f32 VMEM accumulator, (M, N, K) grid."""
    M, K = x.shape
    _, N = w.shape

    tm = min(tm or _MM_TM, _round_up(M, 16))     # 16: bf16 sublane packing
    tn = min(tn or _MM_TN, _round_up(N, 128))
    tk = min(tk or _MM_TK, _round_up(K, 128))
    Mp, Np, Kp = _round_up(M, tm), _round_up(N, tn), _round_up(K, tk)

    xp = _pad2(x.astype(jnp.bfloat16), Mp, Kp)
    wp = _pad2(w.astype(jnp.bfloat16), Kp, Np)
    bp = _pad2(b.reshape(1, N).astype(jnp.float32), 1, Np)

    in_specs = [pl.BlockSpec((tm, tk), lambda i, j, k: (i, k)),
                pl.BlockSpec((tk, tn), lambda i, j, k: (k, j)),
                pl.BlockSpec((1, tn), lambda i, j, k: (0, j))]
    args = [xp, wp, bp]
    if add is None:
        kernel = _mm_bias_kernel
    else:
        kernel = _mm_bias_add_kernel
        # Residual kept bf16: half the HBM + VMEM footprint of the old f32 path.
        in_specs.append(pl.BlockSpec((tm, tn), lambda i, j, k: (i, j)))
        args.append(_pad2(add.astype(jnp.bfloat16), Mp, Np))

    out = pl.pallas_call(
        kernel,
        out_shape=jax.ShapeDtypeStruct((Mp, Np), jnp.bfloat16),
        grid=(Mp // tm, Np // tn, Kp // tk),
        in_specs=in_specs,
        out_specs=pl.BlockSpec((tm, tn), lambda i, j, k: (i, j)),
        scratch_shapes=[pltpu.VMEM((tm, tn), jnp.float32)],
        compiler_params=pltpu.CompilerParams(
            dimension_semantics=("parallel", "parallel", "arbitrary"),
            vmem_limit_bytes=_VMEM_LIMIT),
    )(*args)
    if Mp != M or Np != N:
        out = out[:M, :N]
    return out


def conv3x3_same(x, w9, b, tile_h=8):
    """3x3 / pad-1 / stride-1 conv. x: (B,H,W,Cin) bf16, w9: (9,Cin,Cout) bf16, b: f32."""
    B, H, W, Cin = x.shape
    Cout = w9.shape[-1]
    th = min(tile_h, H)
    n_t = pl.cdiv(H, th)
    wpp = _round_up(W + 2, 8)                      # sublane-aligned padded width
    L = th * wpp
    # Static guard: max shifted read index (L + 2*wpp + 1) must fit the scratch rows.
    assert (th + 3) * wpp >= L + 2 * wpp + 2

    hp = n_t * th + 2                              # padded rows kept in HBM
    xp = jnp.pad(x, ((0, 0), (1, hp - 1 - H), (1, wpp - W - 1), (0, 0)))
    # main rows of each tile (contiguous, metadata-only reshape)
    main = xp[:, :n_t * th].reshape(B, n_t, L, Cin)
    # 2-row halo below each tile (small strided gather in XLA)
    halo = jnp.stack([xp[:, th::th][:, :n_t], xp[:, th + 1::th][:, :n_t]],
                     axis=2).reshape(B, n_t, 2 * wpp, Cin)

    out = pl.pallas_call(
        _make_conv3x3_kernel(th, wpp, W),
        out_shape=jax.ShapeDtypeStruct((B, n_t * th, W, Cout), jnp.bfloat16),
        grid=(B, n_t),
        in_specs=[pl.BlockSpec((1, 1, L, Cin), lambda bi, ri: (bi, ri, 0, 0)),
                  pl.BlockSpec((1, 1, 2 * wpp, Cin), lambda bi, ri: (bi, ri, 0, 0)),
                  pl.BlockSpec((9, Cin, Cout), lambda bi, ri: (0, 0, 0)),
                  pl.BlockSpec((1, Cout), lambda bi, ri: (0, 0))],
        out_specs=pl.BlockSpec((1, th, W, Cout), lambda bi, ri: (bi, ri, 0, 0)),
        scratch_shapes=[pltpu.VMEM(((th + 3) * wpp, Cin), jnp.bfloat16),
                        pltpu.VMEM((L, Cout), jnp.float32)],
        compiler_params=pltpu.CompilerParams(
            dimension_semantics=("parallel", "parallel"),
            vmem_limit_bytes=_VMEM_LIMIT),
    )(main, halo, w9, b.reshape(1, Cout).astype(jnp.float32))
    if n_t * th != H:
        out = out[:, :H]
    return out


# ------------------------------- glue (XLA) ----------------------------------

def upsample2x_nearest(x):
    """NHWC nearest-neighbor 2x upsample (XLA, bf16).
    TODO(synk): fuse into the lateral 1x1 kernel via a halved-index BlockSpec so the
                upsampled map never round-trips HBM (bf16 stopgap per review)."""
    B, H, W, C = x.shape
    x = jnp.broadcast_to(x[:, :, None, :, None, :], (B, H, 2, W, 2, C))
    return x.reshape(B, 2 * H, 2 * W, C)


def im2col3x3(x, stride=1):
    """3x3, pad=1 im2col (bf16) — used only for P6/P7 (tiny stride-32/64 maps)."""
    B, H, W, C = x.shape
    xp = jnp.pad(x, ((0, 0), (1, 1), (1, 1), (0, 0)))
    Ho = (H + 2 - 3) // stride + 1
    Wo = (W + 2 - 3) // stride + 1
    cols = []
    for i in range(3):
        for j in range(3):
            cols.append(xp[:, i:i + stride * (Ho - 1) + 1:stride,
                            j:j + stride * (Wo - 1) + 1:stride, :])
    cols = jnp.concatenate(cols, axis=-1)
    return cols.reshape(B * Ho * Wo, 9 * C), (B, Ho, Wo)


def _conv3x3_ref(x_f32, w9, b):
    """Pure-XLA f32 reference for the 3x3 conv (sanity check only)."""
    w = w9.astype(jnp.float32).reshape(3, 3, w9.shape[1], w9.shape[2])
    y = jax.lax.conv_general_dilated(x_f32, w, window_strides=(1, 1), padding='SAME',
                                     dimension_numbers=('NHWC', 'HWIO', 'NHWC'))
    return y + b.reshape(1, 1, 1, -1).astype(jnp.float32)


# ------------------------------- parameters ----------------------------------

def init_params(key, in_chan=3, patch=4, c0=128, out_ch=128, p67_ch=256):
    # Channels scaled down from ResNet50's [256,512,1024,2048]/out=256/LastLevelP6P7(2048,256)
    # but kept as multiples of 128 for lane-dense stores; structure is identical.
    in_list = [c0, 2 * c0, 4 * c0, 8 * c0]
    keys = iter(jax.random.split(key, 32))

    def nrm(shape, scale=0.02):
        return (scale * jax.random.normal(next(keys), shape, jnp.float32)).astype(jnp.bfloat16)

    p = {
        # body (IntermediateLayerGetter): stage-resolution projections only.
        'patch_embed_w': nrm((patch * patch * in_chan, c0)),
        'patch_embed_b': jnp.zeros((c0,), jnp.float32),
        'merge_w': [nrm((4 * in_list[i], in_list[i + 1])) for i in range(3)],
        'merge_b': [jnp.zeros((in_list[i + 1],), jnp.float32) for i in range(3)],
        # FeaturePyramidNetwork
        'lat_w': [nrm((c, out_ch)) for c in in_list],                 # 1x1 inner blocks
        'lat_b': [jnp.zeros((out_ch,), jnp.float32) for _ in range(4)],
        'out_w': [nrm((9, out_ch, out_ch)) for _ in range(4)],        # 3x3 layer blocks
        'out_b': [jnp.zeros((out_ch,), jnp.float32) for _ in range(4)],
        # LastLevelP6P7(in_channels_list[-1], 256)
        'p6_w': nrm((9 * in_list[-1], p67_ch)),
        'p6_b': jnp.zeros((p67_ch,), jnp.float32),
        'p7_w': nrm((9 * p67_ch, p67_ch)),
        'p7_b': jnp.zeros((p67_ch,), jnp.float32),
    }
    return p, in_list


# ------------------------------- forward pass --------------------------------

def backbone_with_fpn_forward(x_nchw, params, extra_type='maxpool', patch=4):
    # NCHW -> NHWC; activations carried bf16 end-to-end (f32 only in accumulators and
    # biases); final pyramid is cast back to f32 to match the PyTorch module's interface.
    x = jnp.transpose(x_nchw, (0, 2, 3, 1)).astype(jnp.bfloat16)
    B, H, W, Cin = x.shape
    h, w_ = H // patch, W // patch

    # ---- body: multi-scale features at strides 4/8/16/32 ----
    xp = (x.reshape(B, h, patch, w_, patch, Cin)
           .transpose(0, 1, 3, 2, 4, 5)
           .reshape(B * h * w_, patch * patch * Cin))
    cur = matmul_bias(xp, params['patch_embed_w'], params['patch_embed_b']).reshape(B, h, w_, -1)
    feats = [cur]
    for i in range(3):
        Bc, Hc, Wc, Cc = cur.shape
        # TODO(synk): fold the 2x2 space-to-depth gather into the merge matmul's BlockSpec
        #             index_map; bf16 already halves this XLA copy vs the f32 version.
        m = (cur.reshape(Bc, Hc // 2, 2, Wc // 2, 2, Cc)
                .transpose(0, 1, 3, 2, 4, 5)
                .reshape(Bc * (Hc // 2) * (Wc // 2), 4 * Cc))
        cur = matmul_bias(m, params['merge_w'][i], params['merge_b'][i]).reshape(
            Bc, Hc // 2, Wc // 2, -1)
        feats.append(cur)

    out_ch = params['lat_b'][0].shape[0]

    # ---- fpn: lateral 1x1 convs with the top-down add fused into the matmul ----
    inners = [None] * 4
    c3 = feats[3]
    B3, H3, W3, C3 = c3.shape
    inners[3] = matmul_bias(c3.reshape(-1, C3), params['lat_w'][3],
                            params['lat_b'][3]).reshape(B3, H3, W3, out_ch)
    for i in (2, 1, 0):
        ci = feats[i]
        Bc, Hc, Wc, Cc = ci.shape
        up = upsample2x_nearest(inners[i + 1])            # bf16 (stopgap, see TODO)
        inners[i] = matmul_bias(ci.reshape(-1, Cc), params['lat_w'][i], params['lat_b'][i],
                                add=up.reshape(-1, out_ch)).reshape(Bc, Hc, Wc, out_ch)

    # 3x3 output convs (layer blocks): spatially tiled, halo'd, im2col-free
    results = [conv3x3_same(inners[i], params['out_w'][i], params['out_b'][i])
               for i in range(4)]
    names = ['0', '1', '2', '3']

    if extra_type == 'maxpool':
        # MaxpoolOnP5 ~ F.max_pool2d(P5, kernel_size=1, stride=2): pure subsampling.
        results.append(results[-1][:, ::2, ::2, :])
        names.append('pool')
    elif extra_type == 'last':
        # LastLevelP6P7(in_channels_list[-1], p67_ch): stride-2 3x3 convs from C5.
        # im2col kept here on purpose: the stride-32/64 maps are tiny.
        c5 = feats[-1]
        cols6, (B6, H6, W6) = im2col3x3(c5, stride=2)
        p6 = matmul_bias(cols6, params['p6_w'], params['p6_b']).reshape(B6, H6, W6, -1)
        cols7, (B7, H7, W7) = im2col3x3(jnp.maximum(p6, 0), stride=2)
        p7 = matmul_bias(cols7, params['p7_w'], params['p7_b']).reshape(B7, H7, W7, -1)
        results += [p6, p7]
        names += ['p6', 'p7']

    # back to NCHW / f32 to match the PyTorch module's output convention
    return {n: jnp.transpose(o, (0, 3, 1, 2)).astype(jnp.float32)
            for n, o in zip(names, results)}


# ----------------------------------- main -------------------------------------

if __name__ == "__main__":
    key = jax.random.PRNGKey(0)
    kx, kp, kc = jax.random.split(key, 3)
    x = jax.random.normal(kx, (2, 3, 64, 64), jnp.float32)             # NCHW input
    params, in_channels_list = init_params(kp, in_chan=3, patch=4, c0=128, out_ch=128)

    # Sanity-check the trickiest kernel (tiled + halo'd 3x3 conv) against XLA (bf16 tol).
    xc = jax.random.normal(kc, (2, 16, 16, 128), jnp.float32).astype(jnp.bfloat16)
    got = conv3x3_same(xc, params['out_w'][0], params['out_b'][0]).astype(jnp.float32)
    ref = _conv3x3_ref(xc.astype(jnp.float32), params['out_w'][0], params['out_b'][0])
    assert jnp.allclose(got, ref, rtol=5e-2, atol=5e-2), "conv3x3_same mismatch vs XLA"

    fwd = jax.jit(backbone_with_fpn_forward, static_argnames=('extra_type', 'patch'))
    out_maxpool = fwd(x, params, extra_type='maxpool')
    out_last = fwd(x, params, extra_type='last')

    jax.block_until_ready((out_maxpool, out_last))
    print("KERNEL_OK")
</pallas_src>

<mosaic_0001>
module attributes {stable_mosaic.version = 11 : i64} {
  func.func @kernel(%arg0: i32, %arg1: i32, %arg2: memref<1x1x192x128xbf16, #tpu.memory_space<vmem>>, %arg3: memref<1x1x48x128xbf16, #tpu.memory_space<vmem>>, %arg4: memref<9x128x128xbf16, #tpu.memory_space<vmem>>, %arg5: memref<1x128xf32, #tpu.memory_space<vmem>>, %arg6: memref<1x8x16x128xbf16, #tpu.memory_space<vmem>>, %arg7: memref<264x128xbf16, #tpu.memory_space<vmem>>, %arg8: memref<192x128xf32, #tpu.memory_space<vmem>>) attributes {dimension_semantics = [#tpu.dimension_semantics<parallel>, #tpu.dimension_semantics<parallel>], iteration_bounds = array<i64: 2, 2>, scalar_prefetch = 0 : i64, scratch_operands = 2 : i64, tpu.core_type = #tpu.core_type<tc>, window_params = [{transform_indices = @transform_0, window_bounds = array<i64: 1, 1, 192, 128>}, {transform_indices = @transform_1, window_bounds = array<i64: 1, 1, 48, 128>}, {pipeline_mode = #tpu.pipeline_mode<synchronous>, transform_indices = @transform_2, window_bounds = array<i64: 9, 128, 128>}, {pipeline_mode = #tpu.pipeline_mode<synchronous>, transform_indices = @transform_3, window_bounds = array<i64: 1, 128>}, {transform_indices = @transform_4, window_bounds = array<i64: 1, 8, 16, 128>}]} {
    %c0 = arith.constant 0 : index
    %c0_0 = arith.constant 0 : index
    %c0_1 = arith.constant 0 : index
    %c0_2 = arith.constant 0 : index
    %0 = vector.load %arg2[%c0, %c0_0, %c0_1, %c0_2] : memref<1x1x192x128xbf16, #tpu.memory_space<vmem>>, vector<1x1x192x128xbf16>
    %1 = vector.shape_cast %0 : vector<1x1x192x128xbf16> to vector<192x128xbf16>
    %c0_3 = arith.constant 0 : index
    %c0_4 = arith.constant 0 : index
    %2 = vector.load %arg7[%c0_3, %c0_4] : memref<264x128xbf16, #tpu.memory_space<vmem>>, vector<192x128xbf16>
    tpu.vector_store %arg7[%c0_3, %c0_4], %1 {strides = array<i32>} : memref<264x128xbf16, #tpu.memory_space<vmem>>, vector<192x128xbf16>,
    %c0_5 = arith.constant 0 : index
    %c0_6 = arith.constant 0 : index
    %c0_7 = arith.constant 0 : index
    %c0_8 = arith.constant 0 : index
    %3 = vector.load %arg3[%c0_5, %c0_6, %c0_7, %c0_8] : memref<1x1x48x128xbf16, #tpu.memory_space<vmem>>, vector<1x1x48x128xbf16>
    %4 = vector.shape_cast %3 : vector<1x1x48x128xbf16> to vector<48x128xbf16>
    %c192 = arith.constant 192 : index
    %c0_9 = arith.constant 0 : index
    %5 = vector.load %arg7[%c192, %c0_9] : memref<264x128xbf16, #tpu.memory_space<vmem>>, vector<48x128xbf16>
    tpu.vector_store %arg7[%c192, %c0_9], %4 {strides = array<i32>} : memref<264x128xbf16, #tpu.memory_space<vmem>>, vector<48x128xbf16>,
    %cst = arith.constant 0.000000e+00 : bf16
    %6 = vector.broadcast %cst : bf16 to vector<24x128xbf16>
    %c240 = arith.constant 240 : index
    %c0_10 = arith.constant 0 : index
    %7 = vector.load %arg7[%c240, %c0_10] : memref<264x128xbf16, #tpu.memory_space<vmem>>, vector<24x128xbf16>
    tpu.vector_store %arg7[%c240, %c0_10], %6 {strides = array<i32>} : memref<264x128xbf16, #tpu.memory_space<vmem>>, vector<24x128xbf16>,
    %c0_11 = arith.constant 0 : index
    %c0_12 = arith.constant 0 : index
    %8 = vector.load %arg7[%c0_11, %c0_12] : memref<264x128xbf16, #tpu.memory_space<vmem>>, vector<192x128xbf16>
    %c0_13 = arith.constant 0 : index
    %c0_14 = arith.constant 0 : index
    %c0_15 = arith.constant 0 : index
    %9 = vector.load %arg4[%c0_13, %c0_14, %c0_15] : memref<9x128x128xbf16, #tpu.memory_space<vmem>>, vector<1x128x128xbf16>
    %10 = vector.shape_cast %9 : vector<1x128x128xbf16> to vector<128x128xbf16>
    %cst_16 = arith.constant dense<0.000000e+00> : vector<192x128xf32>
    %11 = tpu.matmul %8, %10, %cst_16 {dimension_numbers = #tpu.dot_dimension_numbers<[1], [0], [0], [1], [0, 0, 1, 1], [], []>} : vector<192x128xbf16>, vector<128x128xbf16>, vector<192x128xf32> -> vector<192x128xf32>
    %c0_17 = arith.constant 0 : index
    %c0_18 = arith.constant 0 : index
    %12 = vector.load %arg8[%c0_17, %c0_18] : memref<192x128xf32, #tpu.memory_space<vmem>>, vector<192x128xf32>
    tpu.vector_store %arg8[%c0_17, %c0_18], %11 {strides = array<i32>} : memref<192x128xf32, #tpu.memory_space<vmem>>, vector<192x128xf32>,
    %c1 = arith.constant 1 : index
    %c0_19 = arith.constant 0 : index
    %13 = vector.load %arg7[%c1, %c0_19] : memref<264x128xbf16, #tpu.memory_space<vmem>>, vector<192x128xbf16>
    %c1_20 = arith.constant 1 : index
    %c0_21 = arith.constant 0 : index
    %c0_22 = arith.constant 0 : index
    %14 = vector.load %arg4[%c1_20, %c0_21, %c0_22] : memref<9x128x128xbf16, #tpu.memory_space<vmem>>, vector<1x128x128xbf16>
    %15 = vector.shape_cast %14 : vector<1x128x128xbf16> to vector<128x128xbf16>
    %cst_23 = arith.constant dense<0.000000e+00> : vector<192x128xf32>
    %16 = tpu.matmul %13, %15, %cst_23 {dimension_numbers = #tpu.dot_dimension_numbers<[1], [0], [0], [1], [0, 0, 1, 1], [], []>} : vector<192x128xbf16>, vector<128x128xbf16>, vector<192x128xf32> -> vector<192x128xf32>
    %c0_24 = arith.constant 0 : index
    %c0_25 = arith.constant 0 : index
    %17 = vector.load %arg8[%c0_24, %c0_25] : memref<192x128xf32, #tpu.memory_space<vmem>>, vector<192x128xf32>
    %18 = arith.addf %17, %16 : vector<192x128xf32>
    %c0_26 = arith.constant 0 : index
    %c0_27 = arith.constant 0 : index
    %19 = vector.load %arg8[%c0_26, %c0_27] : memref<192x128xf32, #tpu.memory_space<vmem>>, vector<192x128xf32>
    tpu.vector_store %arg8[%c0_26, %c0_27], %18 {strides = array<i32>} : memref<192x128xf32, #tpu.memory_space<vmem>>, vector<192x128xf32>,
    %c2 = arith.constant 2 : index
    %c0_28 = arith.constant 0 : index
    %20 = vector.load %arg7[%c2, %c0_28] : memref<264x128xbf16, #tpu.memory_space<vmem>>, vector<192x128xbf16>
    %c2_29 = arith.constant 2 : index
    %c0_30 = arith.constant 0 : index
    %c0_31 = arith.constant 0 : index
    %21 = vector.load %arg4[%c2_29, %c0_30, %c0_31] : memref<9x128x128xbf16, #tpu.memory_space<vmem>>, vector<1x128x128xbf16>
    %22 = vector.shape_cast %21 : vector<1x128x128xbf16> to vector<128x128xbf16>
    %cst_32 = arith.constant dense<0.000000e+00> : vector<192x128xf32>
    %23 = tpu.matmul %20, %22, %cst_32 {dimension_numbers = #tpu.dot_dimension_numbers<[1], [0], [0], [1], [0, 0, 1, 1], [], []>} : vector<192x128xbf16>, vector<128x128xbf16>, vector<192x128xf32> -> vector<192x128xf32>
    %c0_33 = arith.constant 0 : index
    %c0_34 = arith.constant 0 : index
    %24 = vector.load %arg8[%c0_33, %c0_34] : memref<192x128xf32, #tpu.memory_space<vmem>>, vector<192x128xf32>
    %25 = arith.addf %24, %23 : vector<192x128xf32>
    %c0_35 = arith.constant 0 : index
    %c0_36 = arith.constant 0 : index
    %26 = vector.load %arg8[%c0_35, %c0_36] : memref<192x128xf32, #tpu.memory_space<vmem>>, vector<192x128xf32>
    tpu.vector_store %arg8[%c0_35, %c0_36], %25 {strides = array<i32>} : memref<192x128xf32, #tpu.memory_space<vmem>>, vector<192x128xf32>,
    %c24 = arith.constant 24 : index
    %c0_37 = arith.constant 0 : index
    %27 = vector.load %arg7[%c24, %c0_37] : memref<264x128xbf16, #tpu.memory_space<vmem>>, vector<192x128xbf16>
    %c3 = arith.constant 3 : index
    %c0_38 = arith.constant 0 : index
    %c0_39 = arith.constant 0 : index
    %28 = vector.load %arg4[%c3, %c0_38, %c0_39] : memref<9x128x128xbf16, #tpu.memory_space<vmem>>, vector<1x128x128xbf16>
    %29 = vector.shape_cast %28 : vector<1x128x128xbf16> to vector<128x128xbf16>
    %cst_40 = arith.constant dense<0.000000e+00> : vector<192x128xf32>
    %30 = tpu.matmul %27, %29, %cst_40 {dimension_numbers = #tpu.dot_dimension_numbers<[1], [0], [0], [1], [0, 0, 1, 1], [], []>} : vector<192x128xbf16>, vector<128x128xbf16>, vector<192x128xf32> -> vector<192x128xf32>
    %c0_41 = arith.constant 0 : index
    %c0_42 = arith.constant 0 : index
    %31 = vector.load %arg8[%c0_41, %c0_42] : memref<192x128xf32, #tpu.memory_space<vmem>>, vector<192x128xf32>
    %32 = arith.addf %31, %30 : vector<192x128xf32>
    %c0_43 = arith.constant 0 : index
    %c0_44 = arith.constant 0 : index
    %33 = vector.load %arg8[%c0_43, %c0_44] : memref<192x128xf32, #tpu.memory_space<vmem>>, vector<192x128xf32>
    tpu.vector_store %arg8[%c0_43, %c0_44], %32 {strides = array<i32>} : memref<192x128xf32, #tpu.memory_space<vmem>>, vector<192x128xf32>,
    %c25 = arith.constant 25 : index
    %c0_45 = arith.constant 0 : index
    %34 = vector.load %arg7[%c25, %c0_45] : memref<264x128xbf16, #tpu.memory_space<vmem>>, vector<192x128xbf16>
    %c4 = arith.constant 4 : index
    %c0_46 = arith.constant 0 : index
    %c0_47 = arith.constant 0 : index
    %35 = vector.load %arg4[%c4, %c0_46, %c0_47] : memref<9x128x128xbf16, #tpu.memory_space<vmem>>, vector<1x128x128xbf16>
    %36 = vector.shape_cast %35 : vector<1x128x128xbf16> to vector<128x128xbf16>
    %cst_48 = arith.constant dense<0.000000e+00> : vector<192x128xf32>
    %37 = tpu.matmul %34, %36, %cst_48 {dimension_numbers = #tpu.dot_dimension_numbers<[1], [0], [0], [1], [0, 0, 1, 1], [], []>} : vector<192x128xbf16>, vector<128x128xbf16>, vector<192x128xf32> -> vector<192x128xf32>
    %c0_49 = arith.constant 0 : index
    %c0_50 = arith.constant 0 : index
    %38 = vector.load %arg8[%c0_49, %c0_50] : memref<192x128xf32, #tpu.memory_space<vmem>>, vector<192x128xf32>
    %39 = arith.addf %38, %37 : vector<192x128xf32>
    %c0_51 = arith.constant 0 : index
    %c0_52 = arith.constant 0 : index
    %40 = vector.load %arg8[%c0_51, %c0_52] : memref<192x128xf32, #tpu.memory_space<vmem>>, vector<192x128xf32>
    tpu.vector_store %arg8[%c0_51, %c0_52], %39 {strides = array<i32>} : memref<192x128xf32, #tpu.memory_space<vmem>>, vector<192x128xf32>,
    %c26 = arith.constant 26 : index
    %c0_53 = arith.constant 0 : index
    %41 = vector.load %arg7[%c26, %c0_53] : memref<264x128xbf16, #tpu.memory_space<vmem>>, vector<192x128xbf16>
    %c5 = arith.constant 5 : index
    %c0_54 = arith.constant 0 : index
    %c0_55 = arith.constant 0 : index
    %42 = vector.load %arg4[%c5, %c0_54, %c0_55] : memref<9x128x128xbf16, #tpu.memory_space<vmem>>, vector<1x128x128xbf16>
    %43 = vector.shape_cast %42 : vector<1x128x128xbf16> to vector<128x128xbf16>
    %cst_56 = arith.constant dense<0.000000e+00> : vector<192x128xf32>
    %44 = tpu.matmul %41, %43, %cst_56 {dimension_numbers = #tpu.dot_dimension_numbers<[1], [0], [0], [1], [0, 0, 1, 1], [], []>} : vector<192x128xbf16>, vector<128x128xbf16>, vector<192x128xf32> -> vector<192x128xf32>
    %c0_57 = arith.constant 0 : index
    %c0_58 = arith.constant 0 : index
    %45 = vector.load %arg8[%c0_57, %c0_58] : memref<192x128xf32, #tpu.memory_space<vmem>>, vector<192x128xf32>
    %46 = arith.addf %45, %44 : vector<192x128xf32>
    %c0_59 = arith.constant 0 : index
    %c0_60 = arith.constant 0 : index
    %47 = vector.load %arg8[%c0_59, %c0_60] : memref<192x128xf32, #tpu.memory_space<vmem>>, vector<192x128xf32>
    tpu.vector_store %arg8[%c0_59, %c0_60], %46 {strides = array<i32>} : memref<192x128xf32, #tpu.memory_space<vmem>>, vector<192x128xf32>,
    %c48 = arith.constant 48 : index
    %c0_61 = arith.constant 0 : index
    %48 = vector.load %arg7[%c48, %c0_61] : memref<264x128xbf16, #tpu.memory_space<vmem>>, vector<192x128xbf16>
    %c6 = arith.constant 6 : index
    %c0_62 = arith.constant 0 : index
    %c0_63 = arith.constant 0 : index
    %49 = vector.load %arg4[%c6, %c0_62, %c0_63] : memref<9x128x128xbf16, #tpu.memory_space<vmem>>, vector<1x128x128xbf16>
    %50 = vector.shape_cast %49 : vector<1x128x128xbf16> to vector<128x128xbf16>
    %cst_64 = arith.constant dense<0.000000e+00> : vector<192x128xf32>
    %51 = tpu.matmul %48, %50, %cst_64 {dimension_numbers = #tpu.dot_dimension_numbers<[1], [0], [0], [1], [0, 0, 1, 1], [], []>} : vector<192x128xbf16>, vector<128x128xbf16>, vector<192x128xf32> -> vector<192x128xf32>
    %c0_65 = arith.constant 0 : index
    %c0_66 = arith.constant 0 : index
    %52 = vector.load %arg8[%c0_65, %c0_66] : memref<192x128xf32, #tpu.memory_space<vmem>>, vector<192x128xf32>
    %53 = arith.addf %52, %51 : vector<192x128xf32>
    %c0_67 = arith.constant 0 : index
    %c0_68 = arith.constant 0 : index
    %54 = vector.load %arg8[%c0_67, %c0_68] : memref<192x128xf32, #tpu.memory_space<vmem>>, vector<192x128xf32>
    tpu.vector_store %arg8[%c0_67, %c0_68], %53 {strides = array<i32>} : memref<192x128xf32, #tpu.memory_space<vmem>>, vector<192x128xf32>,
    %c49 = arith.constant 49 : index
    %c0_69 = arith.constant 0 : index
    %55 = vector.load %arg7[%c49, %c0_69] : memref<264x128xbf16, #tpu.memory_space<vmem>>, vector<192x128xbf16>
    %c7 = arith.constant 7 : index
    %c0_70 = arith.constant 0 : index
    %c0_71 = arith.constant 0 : index
    %56 = vector.load %arg4[%c7, %c0_70, %c0_71] : memref<9x128x128xbf16, #tpu.memory_space<vmem>>, vector<1x128x128xbf16>
    %57 = vector.shape_cast %56 : vector<1x128x128xbf16> to vector<128x128xbf16>
    %cst_72 = arith.constant dense<0.000000e+00> : vector<192x128xf32>
    %58 = tpu.matmul %55, %57, %cst_72 {dimension_numbers = #tpu.dot_dimension_numbers<[1], [0], [0], [1], [0, 0, 1, 1], [], []>} : vector<192x128xbf16>, vector<128x128xbf16>, vector<192x128xf32> -> vector<192x128xf32>
    %c0_73 = arith.constant 0 : index
    %c0_74 = arith.constant 0 : index
    %59 = vector.load %arg8[%c0_73, %c0_74] : memref<192x128xf32, #tpu.memory_space<vmem>>, vector<192x128xf32>
    %60 = arith.addf %59, %58 : vector<192x128xf32>
    %c0_75 = arith.constant 0 : index
    %c0_76 = arith.constant 0 : index
    %61 = vector.load %arg8[%c0_75, %c0_76] : memref<192x128xf32, #tpu.memory_space<vmem>>, vector<192x128xf32>
    tpu.vector_store %arg8[%c0_75, %c0_76], %60 {strides = array<i32>} : memref<192x128xf32, #tpu.memory_space<vmem>>, vector<192x128xf32>,
    %c50 = arith.constant 50 : index
    %c0_77 = arith.constant 0 : index
    %62 = vector.load %arg7[%c50, %c0_77] : memref<264x128xbf16, #tpu.memory_space<vmem>>, vector<192x128xbf16>
    %c8 = arith.constant 8 : index
    %c0_78 = arith.constant 0 : index
    %c0_79 = arith.constant 0 : index
    %63 = vector.load %arg4[%c8, %c0_78, %c0_79] : memref<9x128x128xbf16, #tpu.memory_space<vmem>>, vector<1x128x128xbf16>
    %64 = vector.shape_cast %63 : vector<1x128x128xbf16> to vector<128x128xbf16>
    %cst_80 = arith.constant dense<0.000000e+00> : vector<192x128xf32>
    %65 = tpu.matmul %62, %64, %cst_80 {dimension_numbers = #tpu.dot_dimension_numbers<[1], [0], [0], [1], [0, 0, 1, 1], [], []>} : vector<192x128xbf16>, vector<128x128xbf16>, vector<192x128xf32> -> vector<192x128xf32>
    %c0_81 = arith.constant 0 : index
    %c0_82 = arith.constant 0 : index
    %66 = vector.load %arg8[%c0_81, %c0_82] : memref<192x128xf32, #tpu.memory_space<vmem>>, vector<192x128xf32>
    %67 = arith.addf %66, %65 : vector<192x128xf32>
    %c0_83 = arith.constant 0 : index
    %c0_84 = arith.constant 0 : index
    %68 = vector.load %arg8[%c0_83, %c0_84] : memref<192x128xf32, #tpu.memory_space<vmem>>, vector<192x128xf32>
    tpu.vector_store %arg8[%c0_83, %c0_84], %67 {strides = array<i32>} : memref<192x128xf32, #tpu.memory_space<vmem>>, vector<192x128xf32>,
    %c0_85 = arith.constant 0 : index
    %c0_86 = arith.constant 0 : index
    %69 = vector.load %arg8[%c0_85, %c0_86] : memref<192x128xf32, #tpu.memory_space<vmem>>, vector<192x128xf32>
    %c0_87 = arith.constant 0 : index
    %c0_88 = arith.constant 0 : index
    %70 = vector.load %arg5[%c0_87, %c0_88] : memref<1x128xf32, #tpu.memory_space<vmem>>, vector<1x128xf32>
    %71 = vector.broadcast %70 : vector<1x128xf32> to vector<192x128xf32>
    %72 = arith.addf %69, %71 : vector<192x128xf32>
    %73 = arith.truncf %72 : vector<192x128xf32> to vector<192x128xbf16>
    %74 = vector.shape_cast %73 : vector<192x128xbf16> to vector<8x24x128xbf16>
    %75 = vector.extract_strided_slice %74 {offsets = [0, 0, 0], sizes = [8, 16, 128], strides = [1, 1, 1]} : vector<8x24x128xbf16> to vector<8x16x128xbf16>
    %c0_89 = arith.constant 0 : index
    %c0_90 = arith.constant 0 : index
    %c0_91 = arith.constant 0 : index
    %c0_92 = arith.constant 0 : index
    %76 = vector.load %arg6[%c0_89, %c0_90, %c0_91, %c0_92] : memref<1x8x16x128xbf16, #tpu.memory_space<vmem>>, vector<1x8x16x128xbf16>
    %77 = vector.shape_cast %76 : vector<1x8x16x128xbf16> to vector<8x16x128xbf16>
    %78 = vector.shape_cast %75 : vector<8x16x128xbf16> to vector<1x8x16x128xbf16>
    tpu.vector_store %arg6[%c0_89, %c0_90, %c0_91, %c0_92], %78 {strides = array<i32>} : memref<1x8x16x128xbf16, #tpu.memory_space<vmem>>, vector<1x8x16x128xbf16>,
    return
  }
  func.func @transform_0(%arg0: i32, %arg1: i32) -> (i32, i32, i32, i32) {
    %c0_i32 = arith.constant 0 : i32
    %c0_i32_0 = arith.constant 0 : i32
    %c0_i32_1 = arith.constant 0 : i32
    return %arg0, %arg1, %c0_i32, %c0_i32_0 : i32, i32, i32, i32
  }
  func.func @transform_1(%arg0: i32, %arg1: i32) -> (i32, i32, i32, i32) {
    %c0_i32 = arith.constant 0 : i32
    %c0_i32_0 = arith.constant 0 : i32
    %c0_i32_1 = arith.constant 0 : i32
    return %arg0, %arg1, %c0_i32, %c0_i32_0 : i32, i32, i32, i32
  }
  func.func @transform_2(%arg0: i32, %arg1: i32) -> (i32, i32, i32) {
    %c0_i32 = arith.constant 0 : i32
    %c0_i32_0 = arith.constant 0 : i32
    %c0_i32_1 = arith.constant 0 : i32
    %c0_i32_2 = arith.constant 0 : i32
    return %c0_i32, %c0_i32_0, %c0_i32_1 : i32, i32, i32
  }
  func.func @transform_3(%arg0: i32, %arg1: i32) -> (i32, i32) {
    %c0_i32 = arith.constant 0 : i32
    %c0_i32_0 = arith.constant 0 : i32
    %c0_i32_1 = arith.constant 0 : i32
    return %c0_i32, %c0_i32_0 : i32, i32
  }
  func.func @transform_4(%arg0: i32, %arg1: i32) -> (i32, i32, i32, i32) {
    %c0_i32 = arith.constant 0 : i32
    %c0_i32_0 = arith.constant 0 : i32
    %c0_i32_1 = arith.constant 0 : i32
    return %arg0, %arg1, %c0_i32, %c0_i32_0 : i32, i32, i32, i32
  }
}

</mosaic_0001>

<llo_original>
// kernel: tpu_custom_call.1
$region0: #{tpu_custom_call.1}
  #allocation0 [shape = 'u32[]', space=smem, size = 0x4, offset = 0x4, fixed_abs, tag = 'smem constant byte address 0x4 - core index']
  #allocation1 [shape = 'u32[72,128]{1,0:T(1,128)}', space=vmem, size = 0x9000, scoped, tag = 'internal scratch']
  #allocation2 [shape = 'bf16[264,128]{1,0:T(8,128)(2,1)}', space=vmem, size = 0x10800, scoped, tag = 'scratch operand']
  #allocation3 [shape = 'f32[192,128]{1,0:T(8,128)}', space=vmem, size = 0x18000, scoped, tag = 'scratch operand']
  %s0 = inlined_call_operand.hbm [shape: bf16[2,2,192,128], index: 0, kind: input, shape index: {}]
  %s1 = inlined_call_operand.hbm [shape: bf16[2,2,48,128], index: 1, kind: input, shape index: {}]
  %s2 = inlined_call_operand.hbm [shape: bf16[9,128,128], index: 2, kind: input, shape index: {}]
  %s3 = inlined_call_operand.vmem [shape: f32[1,128], index: 3, kind: input, shape index: {}]
  %s4 = inlined_call_operand.hbm [shape: bf16[2,16,16,128], index: 4, kind: output, shape index: {}]
  %s5 = sld [smem:[#allocation0]]
  $region61: #{tpu_custom_call.1} parent=0
    _
  %s7 = ssub.s32 1, %s5
  %s8 = scalar_select 0, %s7, %s5
  $region1: #{tpu_custom_call.1} parent=0
    #allocation4 [shape = 'u8[98304]{0}', space=vmem, size = 0x18000, scoped, tag = 'input window, operand 0']
    #allocation5 [shape = 's32[2]{0}', space=sflag, size = 0x8, scoped, tag = 'scoped memory for tpu_custom_call.1']
    #allocation6 [shape = 's32[2]{0}', space=sflag, size = 0x8, scoped, tag = 'scoped memory for tpu_custom_call.1']
    #allocation7 [shape = 'u8[24576]{0}', space=vmem, size = 0x6000, scoped, tag = 'input window, operand 1']
    #allocation8 [shape = 's32[2]{0}', space=sflag, size = 0x8, scoped, tag = 'scoped memory for tpu_custom_call.1']
    #allocation9 [shape = 'u8[294912]{0}', space=vmem, size = 0x48000, scoped, tag = 'input window, operand 2, single buffered']
    #allocation10 [shape = 'u8[65536]{0}', space=vmem, size = 0x10000, scoped, tag = 'output window, operand 0']
    %9 = vsyncpa [#allocation5], 0
    %s10 = scalar_lea.sflag [#allocation5], 1
    %11 = vsyncpa %s10, 0
    %12 = vsyncpa [#allocation8], 0
    %s13 = scalar_lea.sflag [#allocation8], 1
    %14 = vsyncpa %s13, 0
    %15 = vsyncpa [#allocation6], 0
    %s16 = scalar_lea.sflag [#allocation6], 1
    %17 = vsyncpa %s16, 0
    loop: start=0, step=1, limit=6
    $region2: #{tpu_custom_call.1} parent=1 // loop_pre_header
      _
    $region3: #{tpu_custom_call.1} parent=1 // loop_header
      %s19 = sphi 0, %s23
      %p20 = scmp.ge.s32.totalorder %s19, 6
      %s26 = sphi 0, %s38
      %s27 = sphi 0, %s34
      %s28 = sphi 0, %s26
      %s29 = sphi 0, %s27
      %s30 = sphi 0, %s28
      %s31 = sphi 0, %s29
      %s43 = sphi 0, %s45
      %s46 = sphi 0, %s43
      %s47 = sphi 0, %s46
      %s63 = sphi 0, %s47
      %s71 = sphi 0, %s73
      %s74 = sphi 0, %s71
      %s75 = sphi 0, %s74
      %s91 = sphi 0, %s75
      %s95 = sphi 0, %s95
      %s97 = sphi 0, %s95
      %s98 = sphi 0, %s97
      %s112 = sphi 0, %s98
      %s116 = sphi 0, %s116
      %s118 = sphi 0, %s116
      %s119 = sphi 0, %s118
      %s133 = sphi 0, %s119
      %s141 = sphi 0, %s143
      %s144 = sphi 0, %s141
      %s145 = sphi 0, %s144
      %s161 = sphi 0, %s145
    $region4: #{tpu_custom_call.1} parent=1 // loop_header_branch
      %22 = sbr.rel (%p20) target = $region8
    $region5: #{tpu_custom_call.1} parent=1 // loop_body
      %s24 = ssub.s32 %s19, 1
      %s25 = ssub.s32 %s19, 2
      %s32 = sadd.s32 1, %s27
      %p33 = scmp.ge.s32.totalorder %s32, 2
      %s34 = scalar_select %p33, 0, %s32
      %s35 = sadd.s32 1, %s26
      %s36 = scalar_select %p33, %s35, %s26
      %p37 = scmp.ge.s32.totalorder %s36, 2
      %s38 = scalar_select %p37, 0, %s36
      %s39 = ssub.s32 %s26, %s38
      %s40 = ssub.s32 %s27, %s34
      %s41 = sor.u32 %s39, %s40
      %p42 = scmp.eq.s32.totalorder %s41, 0
      %s44 = sadd.s32 %s43, 1
      %s45 = scalar_select %p42, %s43, %s44
      %p48 = pneg %p42
      %p49 = scmp.eq.s32.totalorder %s19, 3
      %p50 = por %p48, %p49
      %p51 = scmp.ne.s32.totalorder %s43, %s46
      %p52 = scmp.eq.s32.totalorder %s19, 0
      %p53 = por %p51, %p52
      %p54 = scmp.ne.s32.totalorder %s43, %s46
      %p55 = scmp.eq.s32.totalorder %s24, 3
      %p56 = por %p54, %p55
      %p57 = scmp.ne.s32.totalorder %s46, %s47
      %p58 = scmp.eq.s32.totalorder %s24, 0
      %p59 = por %p57, %p58
      %p60 = scmp.ne.s32.totalorder %s46, %s47
      %p61 = scmp.eq.s32.totalorder %s25, 3
      %p62 = por %p60, %p61
      %p64 = scmp.ne.s32.totalorder %s47, %s63
      %p65 = scmp.eq.s32.totalorder %s25, 0
      %p66 = por %p64, %p65
      %s67 = ssub.s32 %s26, %s38
      %s68 = ssub.s32 %s27, %s34
      %s69 = sor.u32 %s67, %s68
      %p70 = scmp.eq.s32.totalorder %s69, 0
      %s72 = sadd.s32 %s71, 1
      %s73 = scalar_select %p70, %s71, %s72
      %p76 = pneg %p70
      %p77 = scmp.eq.s32.totalorder %s19, 3
      %p78 = por %p76, %p77
      %p79 = scmp.ne.s32.totalorder %s71, %s74
      %p80 = scmp.eq.s32.totalorder %s19, 0
      %p81 = por %p79, %p80
      %p82 = scmp.ne.s32.totalorder %s71, %s74
      %p83 = scmp.eq.s32.totalorder %s24, 3
      %p84 = por %p82, %p83
      %p85 = scmp.ne.s32.totalorder %s74, %s75
      %p86 = scmp.eq.s32.totalorder %s24, 0
      %p87 = por %p85, %p86
      %p88 = scmp.ne.s32.totalorder %s74, %s75
      %p89 = scmp.eq.s32.totalorder %s25, 3
      %p90 = por %p88, %p89
      %p92 = scmp.ne.s32.totalorder %s75, %s91
      %p93 = scmp.eq.s32.totalorder %s25, 0
      %p94 = por %p92, %p93
      %s96 = sadd.s32 %s95, 1
      %p99 = scmp.eq.s32.totalorder %s19, 3
      %p100 = scmp.ne.s32.totalorder %s95, %s97
      %p101 = scmp.eq.s32.totalorder %s19, 0
      %p102 = por %p100, %p101
      %p103 = scmp.ne.s32.totalorder %s95, %s97
      %p104 = scmp.eq.s32.totalorder %s24, 3
      %p105 = por %p103, %p104
      %p106 = scmp.ne.s32.totalorder %s97, %s98
      %p107 = scmp.eq.s32.totalorder %s24, 0
      %p108 = por %p106, %p107
      %p109 = scmp.ne.s32.totalorder %s97, %s98
      %p110 = scmp.eq.s32.totalorder %s25, 3
      %p111 = por %p109, %p110
      %p113 = scmp.ne.s32.totalorder %s98, %s112
      %p114 = scmp.eq.s32.totalorder %s25, 0
      %p115 = por %p113, %p114
      %s117 = sadd.s32 %s116, 1
      %p120 = scmp.eq.s32.totalorder %s19, 3
      %p121 = scmp.ne.s32.totalorder %s116, %s118
      %p122 = scmp.eq.s32.totalorder %s19, 0
      %p123 = por %p121, %p122
      %p124 = scmp.ne.s32.totalorder %s116, %s118
      %p125 = scmp.eq.s32.totalorder %s24, 3
      %p126 = por %p124, %p125
      %p127 = scmp.ne.s32.totalorder %s118, %s119
      %p128 = scmp.eq.s32.totalorder %s24, 0
      %p129 = por %p127, %p128
      %p130 = scmp.ne.s32.totalorder %s118, %s119
      %p131 = scmp.eq.s32.totalorder %s25, 3
      %p132 = por %p130, %p131
      %p134 = scmp.ne.s32.totalorder %s119, %s133
      %p135 = scmp.eq.s32.totalorder %s25, 0
      %p136 = por %p134, %p135
      %s137 = ssub.s32 %s26, %s38
      %s138 = ssub.s32 %s27, %s34
      %s139 = sor.u32 %s137, %s138
      %p140 = scmp.eq.s32.totalorder %s139, 0
      %s142 = sadd.s32 %s141, 1
      %s143 = scalar_select %p140, %s141, %s142
      %p146 = pneg %p140
      %p147 = scmp.eq.s32.totalorder %s19, 3
      %p148 = por %p146, %p147
      %p149 = scmp.ne.s32.totalorder %s141, %s144
      %p150 = scmp.eq.s32.totalorder %s19, 0
      %p151 = por %p149, %p150
      %p152 = scmp.ne.s32.totalorder %s141, %s144
      %p153 = scmp.eq.s32.totalorder %s24, 3
      %p154 = por %p152, %p153
      %p155 = scmp.ne.s32.totalorder %s144, %s145
      %p156 = scmp.eq.s32.totalorder %s24, 0
      %p157 = por %p155, %p156
      %p158 = scmp.ne.s32.totalorder %s144, %s145
      %p159 = scmp.eq.s32.totalorder %s25, 3
      %p160 = por %p158, %p159
      %p162 = scmp.ne.s32.totalorder %s145, %s161
      %p163 = scmp.eq.s32.totalorder %s25, 0
      %p164 = por %p162, %p163
      %p165 = scmp.le.s32.totalorder 1, %s19
      %p166 = scmp.lt.s32.totalorder %s19, 5
      %p167 = pnand %p165, %p166
      %p168 = pneg %p167
      // Predicated region
      $region9: #{tpu_custom_call.1} parent=5 // pred_check
        _
      $region10: #{tpu_custom_call.1} parent=5 // pred_check_branch
        %170 = sbr.rel (%p167) target = $region12
      $region11: #{tpu_custom_call.1} parent=5 // pred_region
        %s171 = ssub.s32 %s19, 1
        // Predicated region
        $region13: #{tpu_custom_call.1} parent=11 // pred_check
          %p172 = pneg %p108
        $region14: #{tpu_custom_call.1} parent=11 // pred_check_branch
          %174 = sbr.rel (%p172) target = $region16
        $region15: #{tpu_custom_call.1} parent=11 // pred_region
          %176 = vsyncadd [#allocation8], 0
          %s177 = sshll.u32 %s2, 4
          %s178 = int_to_ptr.hbm [resolvable:$true] %s177
          %s179 = sshll.u32 [#allocation9], 4
          %s180 = int_to_ptr.vmem [resolvable:$true] %s179
          %185 = dma.hbm_to_vmem [thread:$0]  %s178, 9216, %s180, [#allocation8], 64, 64, 4
        $region16: #{tpu_custom_call.1} parent=11 // pred_fallthru
          _
        // Predicated region
        $region17: #{tpu_custom_call.1} parent=11 // pred_check
          %p186 = pneg %p129
        $region18: #{tpu_custom_call.1} parent=11 // pred_check_branch
          %188 = sbr.rel (%p186) target = $region20
        $region19: #{tpu_custom_call.1} parent=11 // pred_region
          _
        $region20: #{tpu_custom_call.1} parent=11 // pred_fallthru
          _
      $region12: #{tpu_custom_call.1} parent=5 // pred_fallthru
        _
      %p189 = scmp.lt.s32.totalorder %s19, 4
      // Predicated region
      $region21: #{tpu_custom_call.1} parent=5 // pred_check
        %p190 = pneg %p189
      $region22: #{tpu_custom_call.1} parent=5 // pred_check_branch
        %192 = sbr.rel (%p190) target = $region24
      $region23: #{tpu_custom_call.1} parent=5 // pred_region
        // Predicated region
        $region25: #{tpu_custom_call.1} parent=23 // pred_check
          %p193 = pneg %p53
        $region26: #{tpu_custom_call.1} parent=23 // pred_check_branch
          %195 = sbr.rel (%p193) target = $region28
        $region27: #{tpu_custom_call.1} parent=23 // pred_region
          %s196 = sand.u32 %s43, 1
          %s197 = scalar_lea.sflag [#allocation5], %s196
          %s198 = sand.u32 %s43, 1
          %s199 = smul.addr %s198, 96
          %s200 = scalar_lea.vmem [#allocation4], %s199
          %202 = vsyncadd %s197, 0
          %s203 = smul.addr %s27, 24
          %s204 = smul.addr %s26, 48
          %s205 = sadd.s32 %s203, %s204
          %s206 = smul.addr %s205, 4
          %s207 = scalar_lea.hbm %s0, %s206
          %s208 = sshll.u32 %s207, 4
          %s209 = int_to_ptr.hbm [resolvable:$true] %s208
          %s210 = sshll.u32 %s200, 4
          %s211 = int_to_ptr.vmem [resolvable:$true] %s210
          %216 = dma.hbm_to_vmem [thread:$0]  %s209, 1536, %s211, %s197, 64, 64, 4
        $region28: #{tpu_custom_call.1} parent=23 // pred_fallthru
          _
        // Predicated region
        $region29: #{tpu_custom_call.1} parent=23 // pred_check
          %p217 = pneg %p81
        $region30: #{tpu_custom_call.1} parent=23 // pred_check_branch
          %219 = sbr.rel (%p217) target = $region32
        $region31: #{tpu_custom_call.1} parent=23 // pred_region
          %s220 = sand.u32 %s19, 1
          %s221 = scalar_lea.sflag [#allocation8], %s220
          %s222 = sand.u32 %s71, 1
          %s223 = smul.addr %s222, 24
          %s224 = scalar_lea.vmem [#allocation7], %s223
          %226 = vsyncadd %s221, 0
          %s227 = smul.addr %s27, 6
          %s228 = smul.addr %s26, 12
          %s229 = sadd.s32 %s227, %s228
          %s230 = smul.addr %s229, 4
          %s231 = scalar_lea.hbm %s1, %s230
          %s232 = sshll.u32 %s231, 4
          %s233 = int_to_ptr.hbm [resolvable:$true] %s232
          %s234 = sshll.u32 %s224, 4
          %s235 = int_to_ptr.vmem [resolvable:$true] %s234
          %240 = dma.hbm_to_vmem [thread:$0]  %s233, 384, %s235, %s221, 64, 64, 4
        $region32: #{tpu_custom_call.1} parent=23 // pred_fallthru
          _
      $region24: #{tpu_custom_call.1} parent=5 // pred_fallthru
        _
      %p241 = scmp.le.s32.totalorder 1, %s19
      %p242 = scmp.lt.s32.totalorder %s19, 5
      %p243 = pnand %p241, %p242
      %p244 = pneg %p243
      // Predicated region
      $region33: #{tpu_custom_call.1} parent=5 // pred_check
        _
      $region34: #{tpu_custom_call.1} parent=5 // pred_check_branch
        %246 = sbr.rel (%p243) target = $region36
      $region35: #{tpu_custom_call.1} parent=5 // pred_region
        %s247 = ssub.s32 %s19, 1
        %s248 = sand.u32 %s46, 1
        %s249 = scalar_lea.sflag [#allocation5], %s248
        %s250 = sand.u32 %s46, 1
        %s251 = smul.addr %s250, 96
        %s252 = scalar_lea.vmem [#allocation4], %s251
        // Predicated region
        $region37: #{tpu_custom_call.1} parent=35 // pred_check
          %p253 = pneg %p59
        $region38: #{tpu_custom_call.1} parent=35 // pred_check_branch
          %255 = sbr.rel (%p253) target = $region40
        $region39: #{tpu_custom_call.1} parent=35 // pred_region
          %257 = dma.done %s249, 1536
        $region40: #{tpu_custom_call.1} parent=35 // pred_fallthru
          _
        %s258 = sand.u32 %s24, 1
        %s259 = scalar_lea.sflag [#allocation8], %s258
        %s260 = sand.u32 %s74, 1
        %s261 = smul.addr %s260, 24
        %s262 = scalar_lea.vmem [#allocation7], %s261
        // Predicated region
        $region41: #{tpu_custom_call.1} parent=35 // pred_check
          %p263 = pneg %p87
        $region42: #{tpu_custom_call.1} parent=35 // pred_check_branch
          %265 = sbr.rel (%p263) target = $region44
        $region43: #{tpu_custom_call.1} parent=35 // pred_region
          %267 = dma.done %s259, 384
        $region44: #{tpu_custom_call.1} parent=35 // pred_fallthru
          _
        // Predicated region
        $region45: #{tpu_custom_call.1} parent=35 // pred_check
          %p268 = pneg %p108
        $region46: #{tpu_custom_call.1} parent=35 // pred_check_branch
          %270 = sbr.rel (%p268) target = $region48
        $region47: #{tpu_custom_call.1} parent=35 // pred_region
          %272 = dma.done [#allocation8], 9216
        $region48: #{tpu_custom_call.1} parent=35 // pred_fallthru
          _
        %s273 = sand.u32 %s46, 1
        %s274 = scalar_lea.sflag [#allocation5], %s273
        %s275 = sand.u32 %s46, 1
        %s276 = smul.addr %s275, 96
        %s277 = scalar_lea.vmem [#allocation4], %s276
        %p278 = pneg %p59
        %p279 = pneg %p56
        %s280 = sand.u32 %s24, 1
        %s281 = scalar_lea.sflag [#allocation8], %s280
        %s282 = sand.u32 %s74, 1
        %s283 = smul.addr %s282, 24
        %s284 = scalar_lea.vmem [#allocation7], %s283
        %p285 = pneg %p87
        %p286 = pneg %p84
        %p287 = pneg %p108
        %p288 = pneg %p105
        %p289 = pneg %p129
        %p290 = pneg %p126
        %p291 = pneg %p157
        %p292 = pneg %p154
        %s293 = sand.u32 %s144, 1
        %s294 = scalar_lea.sflag [#allocation6], %s293
        %s295 = sand.u32 %s144, 1
        %s296 = smul.addr %s295, 64
        %s297 = scalar_lea.vmem [#allocation10], %s296
        %s298 = smul.u32 8, %s29
        %v300 = vld [vmem:[%s252] sm:$0xf]
        %v301 = vld [vmem:[%s252 + $0x4] sm:$0xf]
        %v302 = vld [vmem:[%s252 + $0x8] sm:$0xf]
        %v303 = vld [vmem:[%s252 + $0xc] sm:$0xf]
        %v304 = vld [vmem:[%s252 + $0x10] sm:$0xf]
        %v305 = vld [vmem:[%s252 + $0x14] sm:$0xf]
        %v306 = vld [vmem:[%s252 + $0x18] sm:$0xf]
        %v307 = vld [vmem:[%s252 + $0x1c] sm:$0xf]
        %v308 = vld [vmem:[%s252 + $0x20] sm:$0xf]
        %v309 = vld [vmem:[%s252 + $0x24] sm:$0xf]
        %v310 = vld [vmem:[%s252 + $0x28] sm:$0xf]
        %v311 = vld [vmem:[%s252 + $0x2c] sm:$0xf]
        %v312 = vld [vmem:[%s252 + $0x30] sm:$0xf]
        %v313 = vld [vmem:[%s252 + $0x34] sm:$0xf]
        %v314 = vld [vmem:[%s252 + $0x38] sm:$0xf]
        %v315 = vld [vmem:[%s252 + $0x3c] sm:$0xf]
        %v316 = vld [vmem:[%s252 + $0x40] sm:$0xf]
        %v317 = vld [vmem:[%s252 + $0x44] sm:$0xf]
        %v318 = vld [vmem:[%s252 + $0x48] sm:$0xf]
        %v319 = vld [vmem:[%s252 + $0x4c] sm:$0xf]
        %v320 = vld [vmem:[%s252 + $0x50] sm:$0xf]
        %v321 = vld [vmem:[%s252 + $0x54] sm:$0xf]
        %v322 = vld [vmem:[%s252 + $0x58] sm:$0xf]
        %v323 = vld [vmem:[%s252 + $0x5c] sm:$0xf]
        %324 = vst [vmem:[#allocation2] sm:$0xf] %v300
        %325 = vst [vmem:[#allocation2 + $0x4] sm:$0xf] %v301
        %326 = vst [vmem:[#allocation2 + $0x8] sm:$0xf] %v302
        %327 = vst [vmem:[#allocation2 + $0xc] sm:$0xf] %v303
        %328 = vst [vmem:[#allocation2 + $0x10] sm:$0xf] %v304
        %329 = vst [vmem:[#allocation2 + $0x14] sm:$0xf] %v305
        %330 = vst [vmem:[#allocation2 + $0x18] sm:$0xf] %v306
        %331 = vst [vmem:[#allocation2 + $0x1c] sm:$0xf] %v307
        %332 = vst [vmem:[#allocation2 + $0x20] sm:$0xf] %v308
        %333 = vst [vmem:[#allocation2 + $0x24] sm:$0xf] %v309
        %334 = vst [vmem:[#allocation2 + $0x28] sm:$0xf] %v310
        %335 = vst [vmem:[#allocation2 + $0x2c] sm:$0xf] %v311
        %336 = vst [vmem:[#allocation2 + $0x30] sm:$0xf] %v312
        %337 = vst [vmem:[#allocation2 + $0x34] sm:$0xf] %v313
        %338 = vst [vmem:[#allocation2 + $0x38] sm:$0xf] %v314
        %339 = vst [vmem:[#allocation2 + $0x3c] sm:$0xf] %v315
        %340 = vst [vmem:[#allocation2 + $0x40] sm:$0xf] %v316
        %341 = vst [vmem:[#allocation2 + $0x44] sm:$0xf] %v317
        %342 = vst [vmem:[#allocation2 + $0x48] sm:$0xf] %v318
        %343 = vst [vmem:[#allocation2 + $0x4c] sm:$0xf] %v319
        %344 = vst [vmem:[#allocation2 + $0x50] sm:$0xf] %v320
        %345 = vst [vmem:[#allocation2 + $0x54] sm:$0xf] %v321
        %346 = vst [vmem:[#allocation2 + $0x58] sm:$0xf] %v322
        %347 = vst [vmem:[#allocation2 + $0x5c] sm:$0xf] %v323
        %v348 = vld [vmem:[%s262] sm:$0xf]
        %v349 = vld [vmem:[%s262 + $0x4] sm:$0xf]
        %v350 = vld [vmem:[%s262 + $0x8] sm:$0xf]
        %v351 = vld [vmem:[%s262 + $0xc] sm:$0xf]
        %v352 = vld [vmem:[%s262 + $0x10] sm:$0xf]
        %v353 = vld [vmem:[%s262 + $0x14] sm:$0xf]
        %354 = vst [vmem:[#allocation2 + $0x60] sm:$0xf] %v348
        %355 = vst [vmem:[#allocation2 + $0x64] sm:$0xf] %v349
        %356 = vst [vmem:[#allocation2 + $0x68] sm:$0xf] %v350
        %357 = vst [vmem:[#allocation2 + $0x6c] sm:$0xf] %v351
        %358 = vst [vmem:[#allocation2 + $0x70] sm:$0xf] %v352
        %359 = vst [vmem:[#allocation2 + $0x74] sm:$0xf] %v353
        %360 = vst [vmem:[#allocation2 + $0x78] sm:$0xf] 0
        %361 = vst [vmem:[#allocation2 + $0x7c] sm:$0xf] 0
        %362 = vst [vmem:[#allocation2 + $0x80] sm:$0xf] 0
        %v363 = vld [vmem:[#allocation2] sm:$0xf]
        %v364 = vld [vmem:[#allocation2 + $0x4] sm:$0xf]
        %v365 = vld [vmem:[#allocation2 + $0x8] sm:$0xf]
        %v366 = vld [vmem:[#allocation2 + $0xc] sm:$0xf]
        %v367 = vld [vmem:[#allocation2 + $0x10] sm:$0xf]
        %v368 = vld [vmem:[#allocation2 + $0x14] sm:$0xf]
        %v369 = vld [vmem:[#allocation2 + $0x18] sm:$0xf]
        %v370 = vld [vmem:[#allocation2 + $0x1c] sm:$0xf]
        %v371 = vld [vmem:[#allocation2 + $0x20] sm:$0xf]
        %v372 = vld [vmem:[#allocation2 + $0x24] sm:$0xf]
        %v373 = vld [vmem:[#allocation2 + $0x28] sm:$0xf]
        %v374 = vld [vmem:[#allocation2 + $0x2c] sm:$0xf]
        %v375 = vld [vmem:[#allocation2 + $0x30] sm:$0xf]
        %v376 = vld [vmem:[#allocation2 + $0x34] sm:$0xf]
        %v377 = vld [vmem:[#allocation2 + $0x38] sm:$0xf]
        %v378 = vld [vmem:[#allocation2 + $0x3c] sm:$0xf]
        %v379 = vld [vmem:[#allocation2 + $0x40] sm:$0xf]
        %v380 = vld [vmem:[#allocation2 + $0x44] sm:$0xf]
        %v381 = vld [vmem:[#allocation2 + $0x48] sm:$0xf]
        %v382 = vld [vmem:[#allocation2 + $0x4c] sm:$0xf]
        %v383 = vld [vmem:[#allocation2 + $0x50] sm:$0xf]
        %v384 = vld [vmem:[#allocation2 + $0x54] sm:$0xf]
        %v385 = vld [vmem:[#allocation2 + $0x58] sm:$0xf]
        %v386 = vld [vmem:[#allocation2 + $0x5c] sm:$0xf]
        %v387 = vld [vmem:[#allocation9] sm:$0xf]
        %v388 = vld [vmem:[#allocation9 + $0x4] sm:$0xf]
        %v389 = vld [vmem:[#allocation9 + $0x8] sm:$0xf]
        %v390 = vld [vmem:[#allocation9 + $0xc] sm:$0xf]
        %v391 = vld [vmem:[#allocation9 + $0x10] sm:$0xf]
        %v392 = vld [vmem:[#allocation9 + $0x14] sm:$0xf]
        %v393 = vld [vmem:[#allocation9 + $0x18] sm:$0xf]
        %v394 = vld [vmem:[#allocation9 + $0x1c] sm:$0xf]
        %v395 = vld [vmem:[#allocation9 + $0x20] sm:$0xf]
        %v396 = vld [vmem:[#allocation9 + $0x24] sm:$0xf]
        %v397 = vld [vmem:[#allocation9 + $0x28] sm:$0xf]
        %v398 = vld [vmem:[#allocation9 + $0x2c] sm:$0xf]
        %v399 = vld [vmem:[#allocation9 + $0x30] sm:$0xf]
        %v400 = vld [vmem:[#allocation9 + $0x34] sm:$0xf]
        %v401 = vld [vmem:[#allocation9 + $0x38] sm:$0xf]
        %v402 = vld [vmem:[#allocation9 + $0x3c] sm:$0xf]
        %v427 = vunpack.c.l.b16 %v363
        %v428 = vunpack.c.l.b16 %v364
        %v429 = vunpack.c.l.b16 %v365
        %v430 = vunpack.c.l.b16 %v366
        %v431 = vunpack.c.l.b16 %v367
        %v432 = vunpack.c.l.b16 %v368
        %v433 = vunpack.c.l.b16 %v369
        %v434 = vunpack.c.l.b16 %v370
        %v435 = vunpack.c.l.b16 %v371
        %v436 = vunpack.c.l.b16 %v372
        %v437 = vunpack.c.l.b16 %v373
        %v438 = vunpack.c.l.b16 %v374
        %v439 = vunpack.c.l.b16 %v375
        %v440 = vunpack.c.l.b16 %v376
        %v441 = vunpack.c.l.b16 %v377
        %v442 = vunpack.c.l.b16 %v378
        %v443 = vunpack.c.l.b16 %v379
        %v444 = vunpack.c.l.b16 %v380
        %v445 = vunpack.c.l.b16 %v381
        %v446 = vunpack.c.l.b16 %v382
        %v447 = vunpack.c.l.b16 %v383
        %v448 = vunpack.c.l.b16 %v384
        %v449 = vunpack.c.l.b16 %v385
        %v450 = vunpack.c.l.b16 %v386
        %v451 = vpack.c.b16 %v428, %v427
        %v452 = vpack.c.b16 %v430, %v429
        %v453 = vpack.c.b16 %v432, %v431
        %v454 = vpack.c.b16 %v434, %v433
        %v455 = vpack.c.b16 %v436, %v435
        %v456 = vpack.c.b16 %v438, %v437
        %v457 = vpack.c.b16 %v440, %v439
        %v458 = vpack.c.b16 %v442, %v441
        %v459 = vpack.c.b16 %v444, %v443
        %v460 = vpack.c.b16 %v446, %v445
        %v461 = vpack.c.b16 %v448, %v447
        %v462 = vpack.c.b16 %v450, %v449
        %v491 = vunpack.c.l.b16 %v387
        %v492 = vunpack.c.l.b16 %v388
        %v493 = vunpack.c.l.b16 %v389
        %v494 = vunpack.c.l.b16 %v390
        %v495 = vunpack.c.l.b16 %v391
        %v496 = vunpack.c.l.b16 %v392
        %v497 = vunpack.c.l.b16 %v393
        %v498 = vunpack.c.l.b16 %v394
        %v499 = vunpack.c.l.b16 %v395
        %v500 = vunpack.c.l.b16 %v396
        %v501 = vunpack.c.l.b16 %v397
        %v502 = vunpack.c.l.b16 %v398
        %v503 = vunpack.c.l.b16 %v399
        %v504 = vunpack.c.l.b16 %v400
        %v505 = vunpack.c.l.b16 %v401
        %v506 = vunpack.c.l.b16 %v402
        %v507 = vpack.c.b16 %v492, %v491
        %v508 = vpack.c.b16 %v494, %v493
        %v509 = vpack.c.b16 %v496, %v495
        %v510 = vpack.c.b16 %v498, %v497
        %v511 = vpack.c.b16 %v500, %v499
        %v512 = vpack.c.b16 %v502, %v501
        %v513 = vpack.c.b16 %v504, %v503
        %v514 = vpack.c.b16 %v506, %v505
        %523 = vmatpush.bf16.msra.mxu0 %v514
        %524 = vmatpush.bf16.msra.mxu0 %v513
        %525 = vmatpush.bf16.msra.mxu0 %v512
        %526 = vmatpush.bf16.msra.mxu0 %v511
        %527 = vmatpush.bf16.msra.mxu0 %v510
        %528 = vmatpush.bf16.msra.mxu0 %v509
        %529 = vmatpush.bf16.msra.mxu0 %v508
        %530 = vmatpush.bf16.msra.mxu0 %v507
        %531 = vmatmul.bf16.gmra.mxu0 %v451
        %v532 = vpop.f32.mrf.mxu0
        %v533 = vadd.f32 0.0, %v532
        %v534 = vpop.f32.mrf.mxu0
        %v535 = vadd.f32 0.0, %v534
        %536 = vmatmul.bf16.gmra.mxu0 %v452
        %v537 = vpop.f32.mrf.mxu0
        %v538 = vadd.f32 0.0, %v537
        %v539 = vpop.f32.mrf.mxu0
        %v540 = vadd.f32 0.0, %v539
        %541 = vmatmul.bf16.gmra.mxu0 %v453
        %v542 = vpop.f32.mrf.mxu0
        %v543 = vadd.f32 0.0, %v542
        %v544 = vpop.f32.mrf.mxu0
        %v545 = vadd.f32 0.0, %v544
        %546 = vmatmul.bf16.gmra.mxu0 %v454
        %v547 = vpop.f32.mrf.mxu0
        %v548 = vadd.f32 0.0, %v547
        %v549 = vpop.f32.mrf.mxu0
        %v550 = vadd.f32 0.0, %v549
        %551 = vmatmul.bf16.gmra.mxu0 %v455
        %v552 = vpop.f32.mrf.mxu0
        %v553 = vadd.f32 0.0, %v552
        %v554 = vpop.f32.mrf.mxu0
        %v555 = vadd.f32 0.0, %v554
        %556 = vmatmul.bf16.gmra.mxu0 %v456
        %v557 = vpop.f32.mrf.mxu0
        %v558 = vadd.f32 0.0, %v557
        %v559 = vpop.f32.mrf.mxu0
        %v560 = vadd.f32 0.0, %v559
        %561 = vmatmul.bf16.gmra.mxu0 %v457
        %v562 = vpop.f32.mrf.mxu0
        %v563 = vadd.f32 0.0, %v562
        %v564 = vpop.f32.mrf.mxu0
        %v565 = vadd.f32 0.0, %v564
        %566 = vmatmul.bf16.gmra.mxu0 %v458
        %v567 = vpop.f32.mrf.mxu0
        %v568 = vadd.f32 0.0, %v567
        %v569 = vpop.f32.mrf.mxu0
        %v570 = vadd.f32 0.0, %v569
        %571 = vmatmul.bf16.gmra.mxu0 %v459
        %v572 = vpop.f32.mrf.mxu0
        %v573 = vadd.f32 0.0, %v572
        %v574 = vpop.f32.mrf.mxu0
        %v575 = vadd.f32 0.0, %v574
        %576 = vmatmul.bf16.gmra.mxu0 %v460
        %v577 = vpop.f32.mrf.mxu0
        %v578 = vadd.f32 0.0, %v577
        %v579 = vpop.f32.mrf.mxu0
        %v580 = vadd.f32 0.0, %v579
        %581 = vmatmul.bf16.gmra.mxu0 %v461
        %v582 = vpop.f32.mrf.mxu0
        %v583 = vadd.f32 0.0, %v582
        %v584 = vpop.f32.mrf.mxu0
        %v585 = vadd.f32 0.0, %v584
        %586 = vmatmul.bf16.gmra.mxu0 %v462
        %v587 = vpop.f32.mrf.mxu0
        %v588 = vadd.f32 0.0, %v587
        %v589 = vpop.f32.mrf.mxu0
        %v590 = vadd.f32 0.0, %v589
        %591 = vdwg.mxu0
        %592 = vst [vmem:[#allocation3] sm:$0xff] %v533
        %593 = vst [vmem:[#allocation3 + $0x8] sm:$0xff] %v535
        %594 = vst [vmem:[#allocation3 + $0x10] sm:$0xff] %v538
        %595 = vst [vmem:[#allocation3 + $0x18] sm:$0xff] %v540
        %596 = vst [vmem:[#allocation3 + $0x20] sm:$0xff] %v543
        %597 = vst [vmem:[#allocation3 + $0x28] sm:$0xff] %v545
        %598 = vst [vmem:[#allocation3 + $0x30] sm:$0xff] %v548
        %599 = vst [vmem:[#allocation3 + $0x38] sm:$0xff] %v550
        %600 = vst [vmem:[#allocation3 + $0x40] sm:$0xff] %v553
        %601 = vst [vmem:[#allocation3 + $0x48] sm:$0xff] %v555
        %602 = vst [vmem:[#allocation3 + $0x50] sm:$0xff] %v558
        %603 = vst [vmem:[#allocation3 + $0x58] sm:$0xff] %v560
        %604 = vst [vmem:[#allocation3 + $0x60] sm:$0xff] %v563
        %605 = vst [vmem:[#allocation3 + $0x68] sm:$0xff] %v565
        %606 = vst [vmem:[#allocation3 + $0x70] sm:$0xff] %v568
        %607 = vst [vmem:[#allocation3 + $0x78] sm:$0xff] %v570
        %608 = vst [vmem:[#allocation3 + $0x80] sm:$0xff] %v573
        %609 = vst [vmem:[#allocation3 + $0x88] sm:$0xff] %v575
        %610 = vst [vmem:[#allocation3 + $0x90] sm:$0xff] %v578
        %611 = vst [vmem:[#allocation3 + $0x98] sm:$0xff] %v580
        %612 = vst [vmem:[#allocation3 + $0xa0] sm:$0xff] %v583
        %613 = vst [vmem:[#allocation3 + $0xa8] sm:$0xff] %v585
        %614 = vst [vmem:[#allocation3 + $0xb0] sm:$0xff] %v588
        %615 = vst [vmem:[#allocation3 + $0xb8] sm:$0xff] %v590
        %v616 = vld [vmem:[#allocation2] sm:$0xf]
        %v617 = vld [vmem:[#allocation2 + $0x4] sm:$0xf]
        %v618 = vld [vmem:[#allocation2 + $0x8] sm:$0xf]
        %v619 = vld [vmem:[#allocation2 + $0xc] sm:$0xf]
        %v620 = vld [vmem:[#allocation2 + $0x10] sm:$0xf]
        %v621 = vld [vmem:[#allocation2 + $0x14] sm:$0xf]
        %v622 = vld [vmem:[#allocation2 + $0x18] sm:$0xf]
        %v623 = vld [vmem:[#allocation2 + $0x1c] sm:$0xf]
        %v624 = vld [vmem:[#allocation2 + $0x20] sm:$0xf]
        %v625 = vld [vmem:[#allocation2 + $0x24] sm:$0xf]
        %v626 = vld [vmem:[#allocation2 + $0x28] sm:$0xf]
        %v627 = vld [vmem:[#allocation2 + $0x2c] sm:$0xf]
        %v628 = vld [vmem:[#allocation2 + $0x30] sm:$0xf]
        %v629 = vld [vmem:[#allocation2 + $0x34] sm:$0xf]
        %v630 = vld [vmem:[#allocation2 + $0x38] sm:$0xf]
        %v631 = vld [vmem:[#allocation2 + $0x3c] sm:$0xf]
        %v632 = vld [vmem:[#allocation2 + $0x40] sm:$0xf]
        %v633 = vld [vmem:[#allocation2 + $0x44] sm:$0xf]
        %v634 = vld [vmem:[#allocation2 + $0x48] sm:$0xf]
        %v635 = vld [vmem:[#allocation2 + $0x4c] sm:$0xf]
        %v636 = vld [vmem:[#allocation2 + $0x50] sm:$0xf]
        %v637 = vld [vmem:[#allocation2 + $0x54] sm:$0xf]
        %v638 = vld [vmem:[#allocation2 + $0x58] sm:$0xf]
        %v639 = vld [vmem:[#allocation2 + $0x5c] sm:$0xf]
        %v640 = vld [vmem:[#allocation2 + $0x60] sm:$0x1]
        %s641 = scalar_lea.vmem [#allocation9], 64
        %v642 = vld [vmem:[%s641] sm:$0xf]
        %v643 = vld [vmem:[%s641 + $0x4] sm:$0xf]
        %v644 = vld [vmem:[%s641 + $0x8] sm:$0xf]
        %v645 = vld [vmem:[%s641 + $0xc] sm:$0xf]
        %v646 = vld [vmem:[%s641 + $0x10] sm:$0xf]
        %v647 = vld [vmem:[%s641 + $0x14] sm:$0xf]
        %v648 = vld [vmem:[%s641 + $0x18] sm:$0xf]
        %v649 = vld [vmem:[%s641 + $0x1c] sm:$0xf]
        %v650 = vld [vmem:[%s641 + $0x20] sm:$0xf]
        %v651 = vld [vmem:[%s641 + $0x24] sm:$0xf]
        %v652 = vld [vmem:[%s641 + $0x28] sm:$0xf]
        %v653 = vld [vmem:[%s641 + $0x2c] sm:$0xf]
        %v654 = vld [vmem:[%s641 + $0x30] sm:$0xf]
        %v655 = vld [vmem:[%s641 + $0x34] sm:$0xf]
        %v656 = vld [vmem:[%s641 + $0x38] sm:$0xf]
        %v657 = vld [vmem:[%s641 + $0x3c] sm:$0xf]
        %v683 = vunpack.c.l.b16 %v616
        %v684 = vunpack.c.l.b16 %v617
        %v685 = vunpack.c.l.b16 %v618
        %v686 = vunpack.c.l.b16 %v619
        %v687 = vunpack.c.l.b16 %v620
        %v688 = vunpack.c.l.b16 %v621
        %v689 = vunpack.c.l.b16 %v622
        %v690 = vunpack.c.l.b16 %v623
        %v691 = vunpack.c.l.b16 %v624
        %v692 = vunpack.c.l.b16 %v625
        %v693 = vunpack.c.l.b16 %v626
        %v694 = vunpack.c.l.b16 %v627
        %v695 = vunpack.c.l.b16 %v628
        %v696 = vunpack.c.l.b16 %v629
        %v697 = vunpack.c.l.b16 %v630
        %v698 = vunpack.c.l.b16 %v631
        %v699 = vunpack.c.l.b16 %v632
        %v700 = vunpack.c.l.b16 %v633
        %v701 = vunpack.c.l.b16 %v634
        %v702 = vunpack.c.l.b16 %v635
        %v703 = vunpack.c.l.b16 %v636
        %v704 = vunpack.c.l.b16 %v637
        %v705 = vunpack.c.l.b16 %v638
        %v706 = vunpack.c.l.b16 %v639
        %v707 = vunpack.c.l.b16 %v640
        %v708 = vpack.c.b16 %v684, %v683
        %v709 = vpack.c.b16 %v686, %v685
        %v710 = vpack.c.b16 %v688, %v687
        %v711 = vpack.c.b16 %v690, %v689
        %v712 = vpack.c.b16 %v692, %v691
        %v713 = vpack.c.b16 %v694, %v693
        %v714 = vpack.c.b16 %v696, %v695
        %v715 = vpack.c.b16 %v698, %v697
        %v716 = vpack.c.b16 %v700, %v699
        %v717 = vpack.c.b16 %v702, %v701
        %v718 = vpack.c.b16 %v704, %v703
        %v719 = vpack.c.b16 %v706, %v705
        %v720 = vpack.c.b16 %v707, %v707
        %vm721 = vsmask.f32 7424
        %v723 = vshrl.u32 %v708, 16
        %v725 = vshll.u32 %v708, 16
        %v727 = vrot.slane %v725, 1
        %v728 = vor.u32 %v723, %v727
        %v730 = vshll.u32 %v709, 16
        %v732 = vrot.slane %v730, 1
        %v733 = vsel %vm721, %v728, %v732
        %v734 = vshrl.u32 %v709, 16
        %v736 = vor.u32 %v734, %v732
        %v738 = vshll.u32 %v710, 16
        %v740 = vrot.slane %v738, 1
        %v741 = vsel %vm721, %v736, %v740
        %v742 = vshrl.u32 %v710, 16
        %v744 = vor.u32 %v742, %v740
        %v746 = vshll.u32 %v711, 16
        %v748 = vrot.slane %v746, 1
        %v749 = vsel %vm721, %v744, %v748
        %v750 = vshrl.u32 %v711, 16
        %v752 = vor.u32 %v750, %v748
        %v754 = vshll.u32 %v712, 16
        %v756 = vrot.slane %v754, 1
        %v757 = vsel %vm721, %v752, %v756
        %v758 = vshrl.u32 %v712, 16
        %v760 = vor.u32 %v758, %v756
        %v762 = vshll.u32 %v713, 16
        %v764 = vrot.slane %v762, 1
        %v765 = vsel %vm721, %v760, %v764
        %v766 = vshrl.u32 %v713, 16
        %v768 = vor.u32 %v766, %v764
        %v770 = vshll.u32 %v714, 16
        %v772 = vrot.slane %v770, 1
        %v773 = vsel %vm721, %v768, %v772
        %v774 = vshrl.u32 %v714, 16
        %v776 = vor.u32 %v774, %v772
        %v778 = vshll.u32 %v715, 16
        %v780 = vrot.slane %v778, 1
        %v781 = vsel %vm721, %v776, %v780
        %v782 = vshrl.u32 %v715, 16
        %v784 = vor.u32 %v782, %v780
        %v786 = vshll.u32 %v716, 16
        %v788 = vrot.slane %v786, 1
        %v789 = vsel %vm721, %v784, %v788
        %v790 = vshrl.u32 %v716, 16
        %v792 = vor.u32 %v790, %v788
        %v794 = vshll.u32 %v717, 16
        %v796 = vrot.slane %v794, 1
        %v797 = vsel %vm721, %v792, %v796
        %v798 = vshrl.u32 %v717, 16
        %v800 = vor.u32 %v798, %v796
        %v802 = vshll.u32 %v718, 16
        %v804 = vrot.slane %v802, 1
        %v805 = vsel %vm721, %v800, %v804
        %v806 = vshrl.u32 %v718, 16
        %v808 = vor.u32 %v806, %v804
        %v810 = vshll.u32 %v719, 16
        %v812 = vrot.slane %v810, 1
        %v813 = vsel %vm721, %v808, %v812
        %v814 = vshrl.u32 %v719, 16
        %v816 = vor.u32 %v814, %v812
        %v818 = vshll.u32 %v720, 16
        %v820 = vrot.slane %v818, 1
        %v821 = vsel %vm721, %v816, %v820
        %v850 = vunpack.c.l.b16 %v642
        %v851 = vunpack.c.l.b16 %v643
        %v852 = vunpack.c.l.b16 %v644
        %v853 = vunpack.c.l.b16 %v645
        %v854 = vunpack.c.l.b16 %v646
        %v855 = vunpack.c.l.b16 %v647
        %v856 = vunpack.c.l.b16 %v648
        %v857 = vunpack.c.l.b16 %v649
        %v858 = vunpack.c.l.b16 %v650
        %v859 = vunpack.c.l.b16 %v651
        %v860 = vunpack.c.l.b16 %v652
        %v861 = vunpack.c.l.b16 %v653
        %v862 = vunpack.c.l.b16 %v654
        %v863 = vunpack.c.l.b16 %v655
        %v864 = vunpack.c.l.b16 %v656
        %v865 = vunpack.c.l.b16 %v657
        %v866 = vpack.c.b16 %v851, %v850
        %v867 = vpack.c.b16 %v853, %v852
        %v868 = vpack.c.b16 %v855, %v854
        %v869 = vpack.c.b16 %v857, %v856
        %v870 = vpack.c.b16 %v859, %v858
        %v871 = vpack.c.b16 %v861, %v860
        %v872 = vpack.c.b16 %v863, %v862
        %v873 = vpack.c.b16 %v865, %v864
        %882 = vmatpush.bf16.msra.mxu0 %v873
        %883 = vmatpush.bf16.msra.mxu0 %v872
        %884 = vmatpush.bf16.msra.mxu0 %v871
        %885 = vmatpush.bf16.msra.mxu0 %v870
        %886 = vmatpush.bf16.msra.mxu0 %v869
        %887 = vmatpush.bf16.msra.mxu0 %v868
        %888 = vmatpush.bf16.msra.mxu0 %v867
        %889 = vmatpush.bf16.msra.mxu0 %v866
        %890 = vmatmul.bf16.gmra.mxu0 %v733
        %v891 = vpop.f32.mrf.mxu0
        %v892 = vadd.f32 0.0, %v891
        %v893 = vpop.f32.mrf.mxu0
        %v894 = vadd.f32 0.0, %v893
        %895 = vmatmul.bf16.gmra.mxu0 %v741
        %v896 = vpop.f32.mrf.mxu0
        %v897 = vadd.f32 0.0, %v896
        %v898 = vpop.f32.mrf.mxu0
        %v899 = vadd.f32 0.0, %v898
        %900 = vmatmul.bf16.gmra.mxu0 %v749
        %v901 = vpop.f32.mrf.mxu0
        %v902 = vadd.f32 0.0, %v901
        %v903 = vpop.f32.mrf.mxu0
        %v904 = vadd.f32 0.0, %v903
        %905 = vmatmul.bf16.gmra.mxu0 %v757
        %v906 = vpop.f32.mrf.mxu0
        %v907 = vadd.f32 0.0, %v906
        %v908 = vpop.f32.mrf.mxu0
        %v909 = vadd.f32 0.0, %v908
        %910 = vmatmul.bf16.gmra.mxu0 %v765
        %v911 = vpop.f32.mrf.mxu0
        %v912 = vadd.f32 0.0, %v911
        %v913 = vpop.f32.mrf.mxu0
        %v914 = vadd.f32 0.0, %v913
        %915 = vmatmul.bf16.gmra.mxu0 %v773
        %v916 = vpop.f32.mrf.mxu0
        %v917 = vadd.f32 0.0, %v916
        %v918 = vpop.f32.mrf.mxu0
        %v919 = vadd.f32 0.0, %v918
        %920 = vmatmul.bf16.gmra.mxu0 %v781
        %v921 = vpop.f32.mrf.mxu0
        %v922 = vadd.f32 0.0, %v921
        %v923 = vpop.f32.mrf.mxu0
        %v924 = vadd.f32 0.0, %v923
        %925 = vmatmul.bf16.gmra.mxu0 %v789
        %v926 = vpop.f32.mrf.mxu0
        %v927 = vadd.f32 0.0, %v926
        %v928 = vpop.f32.mrf.mxu0
        %v929 = vadd.f32 0.0, %v928
        %930 = vmatmul.bf16.gmra.mxu0 %v797
        %v931 = vpop.f32.mrf.mxu0
        %v932 = vadd.f32 0.0, %v931
        %v933 = vpop.f32.mrf.mxu0
        %v934 = vadd.f32 0.0, %v933
        %935 = vmatmul.bf16.gmra.mxu0 %v805
        %v936 = vpop.f32.mrf.mxu0
        %v937 = vadd.f32 0.0, %v936
        %v938 = vpop.f32.mrf.mxu0
        %v939 = vadd.f32 0.0, %v938
        %940 = vmatmul.bf16.gmra.mxu0 %v813
        %v941 = vpop.f32.mrf.mxu0
        %v942 = vadd.f32 0.0, %v941
        %v943 = vpop.f32.mrf.mxu0
        %v944 = vadd.f32 0.0, %v943
        %945 = vmatmul.bf16.gmra.mxu0 %v821
        %v946 = vpop.f32.mrf.mxu0
        %v947 = vadd.f32 0.0, %v946
        %v948 = vpop.f32.mrf.mxu0
        %v949 = vadd.f32 0.0, %v948
        %950 = vdwg.mxu0
        %v951 = vld [vmem:[#allocation3] sm:$0xff]
        %v952 = vld [vmem:[#allocation3 + $0x8] sm:$0xff]
        %v953 = vld [vmem:[#allocation3 + $0x10] sm:$0xff]
        %v954 = vld [vmem:[#allocation3 + $0x18] sm:$0xff]
        %v955 = vld [vmem:[#allocation3 + $0x20] sm:$0xff]
        %v956 = vld [vmem:[#allocation3 + $0x28] sm:$0xff]
        %v957 = vld [vmem:[#allocation3 + $0x30] sm:$0xff]
        %v958 = vld [vmem:[#allocation3 + $0x38] sm:$0xff]
        %v959 = vld [vmem:[#allocation3 + $0x40] sm:$0xff]
        %v960 = vld [vmem:[#allocation3 + $0x48] sm:$0xff]
        %v961 = vld [vmem:[#allocation3 + $0x50] sm:$0xff]
        %v962 = vld [vmem:[#allocation3 + $0x58] sm:$0xff]
        %v963 = vld [vmem:[#allocation3 + $0x60] sm:$0xff]
        %v964 = vld [vmem:[#allocation3 + $0x68] sm:$0xff]
        %v965 = vld [vmem:[#allocation3 + $0x70] sm:$0xff]
        %v966 = vld [vmem:[#allocation3 + $0x78] sm:$0xff]
        %v967 = vld [vmem:[#allocation3 + $0x80] sm:$0xff]
        %v968 = vld [vmem:[#allocation3 + $0x88] sm:$0xff]
        %v969 = vld [vmem:[#allocation3 + $0x90] sm:$0xff]
        %v970 = vld [vmem:[#allocation3 + $0x98] sm:$0xff]
        %v971 = vld [vmem:[#allocation3 + $0xa0] sm:$0xff]
        %v972 = vld [vmem:[#allocation3 + $0xa8] sm:$0xff]
        %v973 = vld [vmem:[#allocation3 + $0xb0] sm:$0xff]
        %v974 = vld [vmem:[#allocation3 + $0xb8] sm:$0xff]
        %v975 = vadd.f32 %v951, %v892
        %v976 = vadd.f32 %v952, %v894
        %v977 = vadd.f32 %v953, %v897
        %v978 = vadd.f32 %v954, %v899
        %v979 = vadd.f32 %v955, %v902
        %v980 = vadd.f32 %v956, %v904
        %v981 = vadd.f32 %v957, %v907
        %v982 = vadd.f32 %v958, %v909
        %v983 = vadd.f32 %v959, %v912
        %v984 = vadd.f32 %v960, %v914
        %v985 = vadd.f32 %v961, %v917
        %v986 = vadd.f32 %v962, %v919
        %v987 = vadd.f32 %v963, %v922
        %v988 = vadd.f32 %v964, %v924
        %v989 = vadd.f32 %v965, %v927
        %v990 = vadd.f32 %v966, %v929
        %v991 = vadd.f32 %v967, %v932
        %v992 = vadd.f32 %v968, %v934
        %v993 = vadd.f32 %v969, %v937
        %v994 = vadd.f32 %v970, %v939
        %v995 = vadd.f32 %v971, %v942
        %v996 = vadd.f32 %v972, %v944
        %v997 = vadd.f32 %v973, %v947
        %v998 = vadd.f32 %v974, %v949
        %999 = vst [vmem:[#allocation3] sm:$0xff] %v975
        %1000 = vst [vmem:[#allocation3 + $0x8] sm:$0xff] %v976
        %1001 = vst [vmem:[#allocation3 + $0x10] sm:$0xff] %v977
        %1002 = vst [vmem:[#allocation3 + $0x18] sm:$0xff] %v978
        %1003 = vst [vmem:[#allocation3 + $0x20] sm:$0xff] %v979
        %1004 = vst [vmem:[#allocation3 + $0x28] sm:$0xff] %v980
        %1005 = vst [vmem:[#allocation3 + $0x30] sm:$0xff] %v981
        %1006 = vst [vmem:[#allocation3 + $0x38] sm:$0xff] %v982
        %1007 = vst [vmem:[#allocation3 + $0x40] sm:$0xff] %v983
        %1008 = vst [vmem:[#allocation3 + $0x48] sm:$0xff] %v984
        %1009 = vst [vmem:[#allocation3 + $0x50] sm:$0xff] %v985
        %1010 = vst [vmem:[#allocation3 + $0x58] sm:$0xff] %v986
        %1011 = vst [vmem:[#allocation3 + $0x60] sm:$0xff] %v987
        %1012 = vst [vmem:[#allocation3 + $0x68] sm:$0xff] %v988
        %1013 = vst [vmem:[#allocation3 + $0x70] sm:$0xff] %v989
        %1014 = vst [vmem:[#allocation3 + $0x78] sm:$0xff] %v990
        %1015 = vst [vmem:[#allocation3 + $0x80] sm:$0xff] %v991
        %1016 = vst [vmem:[#allocation3 + $0x88] sm:$0xff] %v992
        %1017 = vst [vmem:[#allocation3 + $0x90] sm:$0xff] %v993
        %1018 = vst [vmem:[#allocation3 + $0x98] sm:$0xff] %v994
        %1019 = vst [vmem:[#allocation3 + $0xa0] sm:$0xff] %v995
        %1020 = vst [vmem:[#allocation3 + $0xa8] sm:$0xff] %v996
        %1021 = vst [vmem:[#allocation3 + $0xb0] sm:$0xff] %v997
        %1022 = vst [vmem:[#allocation3 + $0xb8] sm:$0xff] %v998
        %v1023 = vld [vmem:[#allocation2] sm:$0xe]
        %v1024 = vld [vmem:[#allocation2 + $0x4] sm:$0xf]
        %v1025 = vld [vmem:[#allocation2 + $0x8] sm:$0xf]
        %v1026 = vld [vmem:[#allocation2 + $0xc] sm:$0xf]
        %v1027 = vld [vmem:[#allocation2 + $0x10] sm:$0xf]
        %v1028 = vld [vmem:[#allocation2 + $0x14] sm:$0xf]
        %v1029 = vld [vmem:[#allocation2 + $0x18] sm:$0xf]
        %v1030 = vld [vmem:[#allocation2 + $0x1c] sm:$0xf]
        %v1031 = vld [vmem:[#allocation2 + $0x20] sm:$0xf]
        %v1032 = vld [vmem:[#allocation2 + $0x24] sm:$0xf]
        %v1033 = vld [vmem:[#allocation2 + $0x28] sm:$0xf]
        %v1034 = vld [vmem:[#allocation2 + $0x2c] sm:$0xf]
        %v1035 = vld [vmem:[#allocation2 + $0x30] sm:$0xf]
        %v1036 = vld [vmem:[#allocation2 + $0x34] sm:$0xf]
        %v1037 = vld [vmem:[#allocation2 + $0x38] sm:$0xf]
        %v1038 = vld [vmem:[#allocation2 + $0x3c] sm:$0xf]
        %v1039 = vld [vmem:[#allocation2 + $0x40] sm:$0xf]
        %v1040 = vld [vmem:[#allocation2 + $0x44] sm:$0xf]
        %v1041 = vld [vmem:[#allocation2 + $0x48] sm:$0xf]
        %v1042 = vld [vmem:[#allocation2 + $0x4c] sm:$0xf]
        %v1043 = vld [vmem:[#allocation2 + $0x50] sm:$0xf]
        %v1044 = vld [vmem:[#allocation2 + $0x54] sm:$0xf]
        %v1045 = vld [vmem:[#allocation2 + $0x58] sm:$0xf]
        %v1046 = vld [vmem:[#allocation2 + $0x5c] sm:$0xf]
        %v1047 = vld [vmem:[#allocation2 + $0x60] sm:$0x1]
        %s1048 = scalar_lea.vmem [#allocation9], 128
        %v1049 = vld [vmem:[%s1048] sm:$0xf]
        %v1050 = vld [vmem:[%s1048 + $0x4] sm:$0xf]
        %v1051 = vld [vmem:[%s1048 + $0x8] sm:$0xf]
        %v1052 = vld [vmem:[%s1048 + $0xc] sm:$0xf]
        %v1053 = vld [vmem:[%s1048 + $0x10] sm:$0xf]
        %v1054 = vld [vmem:[%s1048 + $0x14] sm:$0xf]
        %v1055 = vld [vmem:[%s1048 + $0x18] sm:$0xf]
        %v1056 = vld [vmem:[%s1048 + $0x1c] sm:$0xf]
        %v1057 = vld [vmem:[%s1048 + $0x20] sm:$0xf]
        %v1058 = vld [vmem:[%s1048 + $0x24] sm:$0xf]
        %v1059 = vld [vmem:[%s1048 + $0x28] sm:$0xf]
        %v1060 = vld [vmem:[%s1048 + $0x2c] sm:$0xf]
        %v1061 = vld [vmem:[%s1048 + $0x30] sm:$0xf]
        %v1062 = vld [vmem:[%s1048 + $0x34] sm:$0xf]
        %v1063 = vld [vmem:[%s1048 + $0x38] sm:$0xf]
        %v1064 = vld [vmem:[%s1048 + $0x3c] sm:$0xf]
        %v1090 = vunpack.c.l.b16 %v1023
        %v1091 = vunpack.c.l.b16 %v1024
        %v1092 = vunpack.c.l.b16 %v1025
        %v1093 = vunpack.c.l.b16 %v1026
        %v1094 = vunpack.c.l.b16 %v1027
        %v1095 = vunpack.c.l.b16 %v1028
        %v1096 = vunpack.c.l.b16 %v1029
        %v1097 = vunpack.c.l.b16 %v1030
        %v1098 = vunpack.c.l.b16 %v1031
        %v1099 = vunpack.c.l.b16 %v1032
        %v1100 = vunpack.c.l.b16 %v1033
        %v1101 = vunpack.c.l.b16 %v1034
        %v1102 = vunpack.c.l.b16 %v1035
        %v1103 = vunpack.c.l.b16 %v1036
        %v1104 = vunpack.c.l.b16 %v1037
        %v1105 = vunpack.c.l.b16 %v1038
        %v1106 = vunpack.c.l.b16 %v1039
        %v1107 = vunpack.c.l.b16 %v1040
        %v1108 = vunpack.c.l.b16 %v1041
        %v1109 = vunpack.c.l.b16 %v1042
        %v1110 = vunpack.c.l.b16 %v1043
        %v1111 = vunpack.c.l.b16 %v1044
        %v1112 = vunpack.c.l.b16 %v1045
        %v1113 = vunpack.c.l.b16 %v1046
        %v1114 = vunpack.c.l.b16 %v1047
        %v1115 = vpack.c.b16 %v1091, %v1090
        %v1116 = vpack.c.b16 %v1093, %v1092
        %v1117 = vpack.c.b16 %v1095, %v1094
        %v1118 = vpack.c.b16 %v1097, %v1096
        %v1119 = vpack.c.b16 %v1099, %v1098
        %v1120 = vpack.c.b16 %v1101, %v1100
        %v1121 = vpack.c.b16 %v1103, %v1102
        %v1122 = vpack.c.b16 %v1105, %v1104
        %v1123 = vpack.c.b16 %v1107, %v1106
        %v1124 = vpack.c.b16 %v1109, %v1108
        %v1125 = vpack.c.b16 %v1111, %v1110
        %v1126 = vpack.c.b16 %v1113, %v1112
        %v1127 = vpack.c.b16 %v1114, %v1114
        %vm1128 = vcmask 1046528
        %v1129 = vrot.slane %v1115, 1
        %v1130 = vrot.slane %v1116, 1
        %v1131 = vsel %vm1128, %v1129, %v1130
        %v1132 = vrot.slane %v1117, 1
        %v1133 = vsel %vm1128, %v1130, %v1132
        %v1134 = vrot.slane %v1118, 1
        %v1135 = vsel %vm1128, %v1132, %v1134
        %v1136 = vrot.slane %v1119, 1
        %v1137 = vsel %vm1128, %v1134, %v1136
        %v1138 = vrot.slane %v1120, 1
        %v1139 = vsel %vm1128, %v1136, %v1138
        %v1140 = vrot.slane %v1121, 1
        %v1141 = vsel %vm1128, %v1138, %v1140
        %v1142 = vrot.slane %v1122, 1
        %v1143 = vsel %vm1128, %v1140, %v1142
        %v1144 = vrot.slane %v1123, 1
        %v1145 = vsel %vm1128, %v1142, %v1144
        %v1146 = vrot.slane %v1124, 1
        %v1147 = vsel %vm1128, %v1144, %v1146
        %v1148 = vrot.slane %v1125, 1
        %v1149 = vsel %vm1128, %v1146, %v1148
        %v1150 = vrot.slane %v1126, 1
        %v1151 = vsel %vm1128, %v1148, %v1150
        %v1152 = vrot.slane %v1127, 1
        %v1153 = vsel %vm1128, %v1150, %v1152
        %v1182 = vunpack.c.l.b16 %v1049
        %v1183 = vunpack.c.l.b16 %v1050
        %v1184 = vunpack.c.l.b16 %v1051
        %v1185 = vunpack.c.l.b16 %v1052
        %v1186 = vunpack.c.l.b16 %v1053
        %v1187 = vunpack.c.l.b16 %v1054
        %v1188 = vunpack.c.l.b16 %v1055
        %v1189 = vunpack.c.l.b16 %v1056
        %v1190 = vunpack.c.l.b16 %v1057
        %v1191 = vunpack.c.l.b16 %v1058
        %v1192 = vunpack.c.l.b16 %v1059
        %v1193 = vunpack.c.l.b16 %v1060
        %v1194 = vunpack.c.l.b16 %v1061
        %v1195 = vunpack.c.l.b16 %v1062
        %v1196 = vunpack.c.l.b16 %v1063
        %v1197 = vunpack.c.l.b16 %v1064
        %v1198 = vpack.c.b16 %v1183, %v1182
        %v1199 = vpack.c.b16 %v1185, %v1184
        %v1200 = vpack.c.b16 %v1187, %v1186
        %v1201 = vpack.c.b16 %v1189, %v1188
        %v1202 = vpack.c.b16 %v1191, %v1190
        %v1203 = vpack.c.b16 %v1193, %v1192
        %v1204 = vpack.c.b16 %v1195, %v1194
        %v1205 = vpack.c.b16 %v1197, %v1196
        %1214 = vmatpush.bf16.msra.mxu0 %v1205
        %1215 = vmatpush.bf16.msra.mxu0 %v1204
        %1216 = vmatpush.bf16.msra.mxu0 %v1203
        %1217 = vmatpush.bf16.msra.mxu0 %v1202
        %1218 = vmatpush.bf16.msra.mxu0 %v1201
        %1219 = vmatpush.bf16.msra.mxu0 %v1200
        %1220 = vmatpush.bf16.msra.mxu0 %v1199
        %1221 = vmatpush.bf16.msra.mxu0 %v1198
        %1222 = vmatmul.bf16.gmra.mxu0 %v1131
        %v1223 = vpop.f32.mrf.mxu0
        %v1224 = vadd.f32 0.0, %v1223
        %v1225 = vpop.f32.mrf.mxu0
        %v1226 = vadd.f32 0.0, %v1225
        %1227 = vmatmul.bf16.gmra.mxu0 %v1133
        %v1228 = vpop.f32.mrf.mxu0
        %v1229 = vadd.f32 0.0, %v1228
        %v1230 = vpop.f32.mrf.mxu0
        %v1231 = vadd.f32 0.0, %v1230
        %1232 = vmatmul.bf16.gmra.mxu0 %v1135
        %v1233 = vpop.f32.mrf.mxu0
        %v1234 = vadd.f32 0.0, %v1233
        %v1235 = vpop.f32.mrf.mxu0
        %v1236 = vadd.f32 0.0, %v1235
        %1237 = vmatmul.bf16.gmra.mxu0 %v1137
        %v1238 = vpop.f32.mrf.mxu0
        %v1239 = vadd.f32 0.0, %v1238
        %v1240 = vpop.f32.mrf.mxu0
        %v1241 = vadd.f32 0.0, %v1240
        %1242 = vmatmul.bf16.gmra.mxu0 %v1139
        %v1243 = vpop.f32.mrf.mxu0
        %v1244 = vadd.f32 0.0, %v1243
        %v1245 = vpop.f32.mrf.mxu0
        %v1246 = vadd.f32 0.0, %v1245
        %1247 = vmatmul.bf16.gmra.mxu0 %v1141
        %v1248 = vpop.f32.mrf.mxu0
        %v1249 = vadd.f32 0.0, %v1248
        %v1250 = vpop.f32.mrf.mxu0
        %v1251 = vadd.f32 0.0, %v1250
        %1252 = vmatmul.bf16.gmra.mxu0 %v1143
        %v1253 = vpop.f32.mrf.mxu0
        %v1254 = vadd.f32 0.0, %v1253
        %v1255 = vpop.f32.mrf.mxu0
        %v1256 = vadd.f32 0.0, %v1255
        %1257 = vmatmul.bf16.gmra.mxu0 %v1145
        %v1258 = vpop.f32.mrf.mxu0
        %v1259 = vadd.f32 0.0, %v1258
        %v1260 = vpop.f32.mrf.mxu0
        %v1261 = vadd.f32 0.0, %v1260
        %1262 = vmatmul.bf16.gmra.mxu0 %v1147
        %v1263 = vpop.f32.mrf.mxu0
        %v1264 = vadd.f32 0.0, %v1263
        %v1265 = vpop.f32.mrf.mxu0
        %v1266 = vadd.f32 0.0, %v1265
        %1267 = vmatmul.bf16.gmra.mxu0 %v1149
        %v1268 = vpop.f32.mrf.mxu0
        %v1269 = vadd.f32 0.0, %v1268
        %v1270 = vpop.f32.mrf.mxu0
        %v1271 = vadd.f32 0.0, %v1270
        %1272 = vmatmul.bf16.gmra.mxu0 %v1151
        %v1273 = vpop.f32.mrf.mxu0
        %v1274 = vadd.f32 0.0, %v1273
        %v1275 = vpop.f32.mrf.mxu0
        %v1276 = vadd.f32 0.0, %v1275
        %1277 = vmatmul.bf16.gmra.mxu0 %v1153
        %v1278 = vpop.f32.mrf.mxu0
        %v1279 = vadd.f32 0.0, %v1278
        %v1280 = vpop.f32.mrf.mxu0
        %v1281 = vadd.f32 0.0, %v1280
        %1282 = vdwg.mxu0
        %v1283 = vld [vmem:[#allocation3] sm:$0xff]
        %v1284 = vld [vmem:[#allocation3 + $0x8] sm:$0xff]
        %v1285 = vld [vmem:[#allocation3 + $0x10] sm:$0xff]
        %v1286 = vld [vmem:[#allocation3 + $0x18] sm:$0xff]
        %v1287 = vld [vmem:[#allocation3 + $0x20] sm:$0xff]
        %v1288 = vld [vmem:[#allocation3 + $0x28] sm:$0xff]
        %v1289 = vld [vmem:[#allocation3 + $0x30] sm:$0xff]
        %v1290 = vld [vmem:[#allocation3 + $0x38] sm:$0xff]
        %v1291 = vld [vmem:[#allocation3 + $0x40] sm:$0xff]
        %v1292 = vld [vmem:[#allocation3 + $0x48] sm:$0xff]
        %v1293 = vld [vmem:[#allocation3 + $0x50] sm:$0xff]
        %v1294 = vld [vmem:[#allocation3 + $0x58] sm:$0xff]
        %v1295 = vld [vmem:[#allocation3 + $0x60] sm:$0xff]
        %v1296 = vld [vmem:[#allocation3 + $0x68] sm:$0xff]
        %v1297 = vld [vmem:[#allocation3 + $0x70] sm:$0xff]
        %v1298 = vld [vmem:[#allocation3 + $0x78] sm:$0xff]
        %v1299 = vld [vmem:[#allocation3 + $0x80] sm:$0xff]
        %v1300 = vld [vmem:[#allocation3 + $0x88] sm:$0xff]
        %v1301 = vld [vmem:[#allocation3 + $0x90] sm:$0xff]
        %v1302 = vld [vmem:[#allocation3 + $0x98] sm:$0xff]
        %v1303 = vld [vmem:[#allocation3 + $0xa0] sm:$0xff]
        %v1304 = vld [vmem:[#allocation3 + $0xa8] sm:$0xff]
        %v1305 = vld [vmem:[#allocation3 + $0xb0] sm:$0xff]
        %v1306 = vld [vmem:[#allocation3 + $0xb8] sm:$0xff]
        %v1307 = vadd.f32 %v1283, %v1224
        %v1308 = vadd.f32 %v1284, %v1226
        %v1309 = vadd.f32 %v1285, %v1229
        %v1310 = vadd.f32 %v1286, %v1231
        %v1311 = vadd.f32 %v1287, %v1234
        %v1312 = vadd.f32 %v1288, %v1236
        %v1313 = vadd.f32 %v1289, %v1239
        %v1314 = vadd.f32 %v1290, %v1241
        %v1315 = vadd.f32 %v1291, %v1244
        %v1316 = vadd.f32 %v1292, %v1246
        %v1317 = vadd.f32 %v1293, %v1249
        %v1318 = vadd.f32 %v1294, %v1251
        %v1319 = vadd.f32 %v1295, %v1254
        %v1320 = vadd.f32 %v1296, %v1256
        %v1321 = vadd.f32 %v1297, %v1259
        %v1322 = vadd.f32 %v1298, %v1261
        %v1323 = vadd.f32 %v1299, %v1264
        %v1324 = vadd.f32 %v1300, %v1266
        %v1325 = vadd.f32 %v1301, %v1269
        %v1326 = vadd.f32 %v1302, %v1271
        %v1327 = vadd.f32 %v1303, %v1274
        %v1328 = vadd.f32 %v1304, %v1276
        %v1329 = vadd.f32 %v1305, %v1279
        %v1330 = vadd.f32 %v1306, %v1281
        %1331 = vst [vmem:[#allocation3] sm:$0xff] %v1307
        %1332 = vst [vmem:[#allocation3 + $0x8] sm:$0xff] %v1308
        %1333 = vst [vmem:[#allocation3 + $0x10] sm:$0xff] %v1309
        %1334 = vst [vmem:[#allocation3 + $0x18] sm:$0xff] %v1310
        %1335 = vst [vmem:[#allocation3 + $0x20] sm:$0xff] %v1311
        %1336 = vst [vmem:[#allocation3 + $0x28] sm:$0xff] %v1312
        %1337 = vst [vmem:[#allocation3 + $0x30] sm:$0xff] %v1313
        %1338 = vst [vmem:[#allocation3 + $0x38] sm:$0xff] %v1314
        %1339 = vst [vmem:[#allocation3 + $0x40] sm:$0xff] %v1315
        %1340 = vst [vmem:[#allocation3 + $0x48] sm:$0xff] %v1316
        %1341 = vst [vmem:[#allocation3 + $0x50] sm:$0xff] %v1317
        %1342 = vst [vmem:[#allocation3 + $0x58] sm:$0xff] %v1318
        %1343 = vst [vmem:[#allocation3 + $0x60] sm:$0xff] %v1319
        %1344 = vst [vmem:[#allocation3 + $0x68] sm:$0xff] %v1320
        %1345 = vst [vmem:[#allocation3 + $0x70] sm:$0xff] %v1321
        %1346 = vst [vmem:[#allocation3 + $0x78] sm:$0xff] %v1322
        %1347 = vst [vmem:[#allocation3 + $0x80] sm:$0xff] %v1323
        %1348 = vst [vmem:[#allocation3 + $0x88] sm:$0xff] %v1324
        %1349 = vst [vmem:[#allocation3 + $0x90] sm:$0xff] %v1325
        %1350 = vst [vmem:[#allocation3 + $0x98] sm:$0xff] %v1326
        %1351 = vst [vmem:[#allocation3 + $0xa0] sm:$0xff] %v1327
        %1352 = vst [vmem:[#allocation3 + $0xa8] sm:$0xff] %v1328
        %1353 = vst [vmem:[#allocation3 + $0xb0] sm:$0xff] %v1329
        %1354 = vst [vmem:[#allocation3 + $0xb8] sm:$0xff] %v1330
        %v1355 = vld [vmem:[#allocation2 + $0xc] sm:$0xf]
        %v1356 = vld [vmem:[#allocation2 + $0x10] sm:$0xf]
        %v1357 = vld [vmem:[#allocation2 + $0x14] sm:$0xf]
        %v1358 = vld [vmem:[#allocation2 + $0x18] sm:$0xf]
        %v1359 = vld [vmem:[#allocation2 + $0x1c] sm:$0xf]
        %v1360 = vld [vmem:[#allocation2 + $0x20] sm:$0xf]
        %v1361 = vld [vmem:[#allocation2 + $0x24] sm:$0xf]
        %v1362 = vld [vmem:[#allocation2 + $0x28] sm:$0xf]
        %v1363 = vld [vmem:[#allocation2 + $0x2c] sm:$0xf]
        %v1364 = vld [vmem:[#allocation2 + $0x30] sm:$0xf]
        %v1365 = vld [vmem:[#allocation2 + $0x34] sm:$0xf]
        %v1366 = vld [vmem:[#allocation2 + $0x38] sm:$0xf]
        %v1367 = vld [vmem:[#allocation2 + $0x3c] sm:$0xf]
        %v1368 = vld [vmem:[#allocation2 + $0x40] sm:$0xf]
        %v1369 = vld [vmem:[#allocation2 + $0x44] sm:$0xf]
        %v1370 = vld [vmem:[#allocation2 + $0x48] sm:$0xf]
        %v1371 = vld [vmem:[#allocation2 + $0x4c] sm:$0xf]
        %v1372 = vld [vmem:[#allocation2 + $0x50] sm:$0xf]
        %v1373 = vld [vmem:[#allocation2 + $0x54] sm:$0xf]
        %v1374 = vld [vmem:[#allocation2 + $0x58] sm:$0xf]
        %v1375 = vld [vmem:[#allocation2 + $0x5c] sm:$0xf]
        %v1376 = vld [vmem:[#allocation2 + $0x60] sm:$0xf]
        %v1377 = vld [vmem:[#allocation2 + $0x64] sm:$0xf]
        %v1378 = vld [vmem:[#allocation2 + $0x68] sm:$0xf]
        %s1379 = scalar_lea.vmem [#allocation9], 192
        %v1380 = vld [vmem:[%s1379] sm:$0xf]
        %v1381 = vld [vmem:[%s1379 + $0x4] sm:$0xf]
        %v1382 = vld [vmem:[%s1379 + $0x8] sm:$0xf]
        %v1383 = vld [vmem:[%s1379 + $0xc] sm:$0xf]
        %v1384 = vld [vmem:[%s1379 + $0x10] sm:$0xf]
        %v1385 = vld [vmem:[%s1379 + $0x14] sm:$0xf]
        %v1386 = vld [vmem:[%s1379 + $0x18] sm:$0xf]
        %v1387 = vld [vmem:[%s1379 + $0x1c] sm:$0xf]
        %v1388 = vld [vmem:[%s1379 + $0x20] sm:$0xf]
        %v1389 = vld [vmem:[%s1379 + $0x24] sm:$0xf]
        %v1390 = vld [vmem:[%s1379 + $0x28] sm:$0xf]
        %v1391 = vld [vmem:[%s1379 + $0x2c] sm:$0xf]
        %v1392 = vld [vmem:[%s1379 + $0x30] sm:$0xf]
        %v1393 = vld [vmem:[%s1379 + $0x34] sm:$0xf]
        %v1394 = vld [vmem:[%s1379 + $0x38] sm:$0xf]
        %v1395 = vld [vmem:[%s1379 + $0x3c] sm:$0xf]
        %v1420 = vunpack.c.l.b16 %v1355
        %v1421 = vunpack.c.l.b16 %v1356
        %v1422 = vunpack.c.l.b16 %v1357
        %v1423 = vunpack.c.l.b16 %v1358
        %v1424 = vunpack.c.l.b16 %v1359
        %v1425 = vunpack.c.l.b16 %v1360
        %v1426 = vunpack.c.l.b16 %v1361
        %v1427 = vunpack.c.l.b16 %v1362
        %v1428 = vunpack.c.l.b16 %v1363
        %v1429 = vunpack.c.l.b16 %v1364
        %v1430 = vunpack.c.l.b16 %v1365
        %v1431 = vunpack.c.l.b16 %v1366
        %v1432 = vunpack.c.l.b16 %v1367
        %v1433 = vunpack.c.l.b16 %v1368
        %v1434 = vunpack.c.l.b16 %v1369
        %v1435 = vunpack.c.l.b16 %v1370
        %v1436 = vunpack.c.l.b16 %v1371
        %v1437 = vunpack.c.l.b16 %v1372
        %v1438 = vunpack.c.l.b16 %v1373
        %v1439 = vunpack.c.l.b16 %v1374
        %v1440 = vunpack.c.l.b16 %v1375
        %v1441 = vunpack.c.l.b16 %v1376
        %v1442 = vunpack.c.l.b16 %v1377
        %v1443 = vunpack.c.l.b16 %v1378
        %v1444 = vpack.c.b16 %v1421, %v1420
        %v1445 = vpack.c.b16 %v1423, %v1422
        %v1446 = vpack.c.b16 %v1425, %v1424
        %v1447 = vpack.c.b16 %v1427, %v1426
        %v1448 = vpack.c.b16 %v1429, %v1428
        %v1449 = vpack.c.b16 %v1431, %v1430
        %v1450 = vpack.c.b16 %v1433, %v1432
        %v1451 = vpack.c.b16 %v1435, %v1434
        %v1452 = vpack.c.b16 %v1437, %v1436
        %v1453 = vpack.c.b16 %v1439, %v1438
        %v1454 = vpack.c.b16 %v1441, %v1440
        %v1455 = vpack.c.b16 %v1443, %v1442
        %v1484 = vunpack.c.l.b16 %v1380
        %v1485 = vunpack.c.l.b16 %v1381
        %v1486 = vunpack.c.l.b16 %v1382
        %v1487 = vunpack.c.l.b16 %v1383
        %v1488 = vunpack.c.l.b16 %v1384
        %v1489 = vunpack.c.l.b16 %v1385
        %v1490 = vunpack.c.l.b16 %v1386
        %v1491 = vunpack.c.l.b16 %v1387
        %v1492 = vunpack.c.l.b16 %v1388
        %v1493 = vunpack.c.l.b16 %v1389
        %v1494 = vunpack.c.l.b16 %v1390
        %v1495 = vunpack.c.l.b16 %v1391
        %v1496 = vunpack.c.l.b16 %v1392
        %v1497 = vunpack.c.l.b16 %v1393
        %v1498 = vunpack.c.l.b16 %v1394
        %v1499 = vunpack.c.l.b16 %v1395
        %v1500 = vpack.c.b16 %v1485, %v1484
        %v1501 = vpack.c.b16 %v1487, %v1486
        %v1502 = vpack.c.b16 %v1489, %v1488
        %v1503 = vpack.c.b16 %v1491, %v1490
        %v1504 = vpack.c.b16 %v1493, %v1492
        %v1505 = vpack.c.b16 %v1495, %v1494
        %v1506 = vpack.c.b16 %v1497, %v1496
        %v1507 = vpack.c.b16 %v1499, %v1498
        %1516 = vmatpush.bf16.msra.mxu0 %v1507
        %1517 = vmatpush.bf16.msra.mxu0 %v1506
        %1518 = vmatpush.bf16.msra.mxu0 %v1505
        %1519 = vmatpush.bf16.msra.mxu0 %v1504
        %1520 = vmatpush.bf16.msra.mxu0 %v1503
        %1521 = vmatpush.bf16.msra.mxu0 %v1502
        %1522 = vmatpush.bf16.msra.mxu0 %v1501
        %1523 = vmatpush.bf16.msra.mxu0 %v1500
        %1524 = vmatmul.bf16.gmra.mxu0 %v1444
        %v1525 = vpop.f32.mrf.mxu0
        %v1526 = vadd.f32 0.0, %v1525
        %v1527 = vpop.f32.mrf.mxu0
        %v1528 = vadd.f32 0.0, %v1527
        %1529 = vmatmul.bf16.gmra.mxu0 %v1445
        %v1530 = vpop.f32.mrf.mxu0
        %v1531 = vadd.f32 0.0, %v1530
        %v1532 = vpop.f32.mrf.mxu0
        %v1533 = vadd.f32 0.0, %v1532
        %1534 = vmatmul.bf16.gmra.mxu0 %v1446
        %v1535 = vpop.f32.mrf.mxu0
        %v1536 = vadd.f32 0.0, %v1535
        %v1537 = vpop.f32.mrf.mxu0
        %v1538 = vadd.f32 0.0, %v1537
        %1539 = vmatmul.bf16.gmra.mxu0 %v1447
        %v1540 = vpop.f32.mrf.mxu0
        %v1541 = vadd.f32 0.0, %v1540
        %v1542 = vpop.f32.mrf.mxu0
        %v1543 = vadd.f32 0.0, %v1542
        %1544 = vmatmul.bf16.gmra.mxu0 %v1448
        %v1545 = vpop.f32.mrf.mxu0
        %v1546 = vadd.f32 0.0, %v1545
        %v1547 = vpop.f32.mrf.mxu0
        %v1548 = vadd.f32 0.0, %v1547
        %1549 = vmatmul.bf16.gmra.mxu0 %v1449
        %v1550 = vpop.f32.mrf.mxu0
        %v1551 = vadd.f32 0.0, %v1550
        %v1552 = vpop.f32.mrf.mxu0
        %v1553 = vadd.f32 0.0, %v1552
        %1554 = vmatmul.bf16.gmra.mxu0 %v1450
        %v1555 = vpop.f32.mrf.mxu0
        %v1556 = vadd.f32 0.0, %v1555
        %v1557 = vpop.f32.mrf.mxu0
        %v1558 = vadd.f32 0.0, %v1557
        %1559 = vmatmul.bf16.gmra.mxu0 %v1451
        %v1560 = vpop.f32.mrf.mxu0
        %v1561 = vadd.f32 0.0, %v1560
        %v1562 = vpop.f32.mrf.mxu0
        %v1563 = vadd.f32 0.0, %v1562
        %1564 = vmatmul.bf16.gmra.mxu0 %v1452
        %v1565 = vpop.f32.mrf.mxu0
        %v1566 = vadd.f32 0.0, %v1565
        %v1567 = vpop.f32.mrf.mxu0
        %v1568 = vadd.f32 0.0, %v1567
        %1569 = vmatmul.bf16.gmra.mxu0 %v1453
        %v1570 = vpop.f32.mrf.mxu0
        %v1571 = vadd.f32 0.0, %v1570
        %v1572 = vpop.f32.mrf.mxu0
        %v1573 = vadd.f32 0.0, %v1572
        %1574 = vmatmul.bf16.gmra.mxu0 %v1454
        %v1575 = vpop.f32.mrf.mxu0
        %v1576 = vadd.f32 0.0, %v1575
        %v1577 = vpop.f32.mrf.mxu0
        %v1578 = vadd.f32 0.0, %v1577
        %1579 = vmatmul.bf16.gmra.mxu0 %v1455
        %v1580 = vpop.f32.mrf.mxu0
        %v1581 = vadd.f32 0.0, %v1580
        %v1582 = vpop.f32.mrf.mxu0
        %v1583 = vadd.f32 0.0, %v1582
        %1584 = vdwg.mxu0
        %v1585 = vld [vmem:[#allocation3] sm:$0xff]
        %v1586 = vld [vmem:[#allocation3 + $0x8] sm:$0xff]
        %v1587 = vld [vmem:[#allocation3 + $0x10] sm:$0xff]
        %v1588 = vld [vmem:[#allocation3 + $0x18] sm:$0xff]
        %v1589 = vld [vmem:[#allocation3 + $0x20] sm:$0xff]
        %v1590 = vld [vmem:[#allocation3 + $0x28] sm:$0xff]
        %v1591 = vld [vmem:[#allocation3 + $0x30] sm:$0xff]
        %v1592 = vld [vmem:[#allocation3 + $0x38] sm:$0xff]
        %v1593 = vld [vmem:[#allocation3 + $0x40] sm:$0xff]
        %v1594 = vld [vmem:[#allocation3 + $0x48] sm:$0xff]
        %v1595 = vld [vmem:[#allocation3 + $0x50] sm:$0xff]
        %v1596 = vld [vmem:[#allocation3 + $0x58] sm:$0xff]
        %v1597 = vld [vmem:[#allocation3 + $0x60] sm:$0xff]
        %v1598 = vld [vmem:[#allocation3 + $0x68] sm:$0xff]
        %v1599 = vld [vmem:[#allocation3 + $0x70] sm:$0xff]
        %v1600 = vld [vmem:[#allocation3 + $0x78] sm:$0xff]
        %v1601 = vld [vmem:[#allocation3 + $0x80] sm:$0xff]
        %v1602 = vld [vmem:[#allocation3 + $0x88] sm:$0xff]
        %v1603 = vld [vmem:[#allocation3 + $0x90] sm:$0xff]
        %v1604 = vld [vmem:[#allocation3 + $0x98] sm:$0xff]
        %v1605 = vld [vmem:[#allocation3 + $0xa0] sm:$0xff]
        %v1606 = vld [vmem:[#allocation3 + $0xa8] sm:$0xff]
        %v1607 = vld [vmem:[#allocation3 + $0xb0] sm:$0xff]
        %v1608 = vld [vmem:[#allocation3 + $0xb8] sm:$0xff]
        %v1609 = vadd.f32 %v1585, %v1526
        %v1610 = vadd.f32 %v1586, %v1528
        %v1611 = vadd.f32 %v1587, %v1531
        %v1612 = vadd.f32 %v1588, %v1533
        %v1613 = vadd.f32 %v1589, %v1536
        %v1614 = vadd.f32 %v1590, %v1538
        %v1615 = vadd.f32 %v1591, %v1541
        %v1616 = vadd.f32 %v1592, %v1543
        %v1617 = vadd.f32 %v1593, %v1546
        %v1618 = vadd.f32 %v1594, %v1548
        %v1619 = vadd.f32 %v1595, %v1551
        %v1620 = vadd.f32 %v1596, %v1553
        %v1621 = vadd.f32 %v1597, %v1556
        %v1622 = vadd.f32 %v1598, %v1558
        %v1623 = vadd.f32 %v1599, %v1561
        %v1624 = vadd.f32 %v1600, %v1563
        %v1625 = vadd.f32 %v1601, %v1566
        %v1626 = vadd.f32 %v1602, %v1568
        %v1627 = vadd.f32 %v1603, %v1571
        %v1628 = vadd.f32 %v1604, %v1573
        %v1629 = vadd.f32 %v1605, %v1576
        %v1630 = vadd.f32 %v1606, %v1578
        %v1631 = vadd.f32 %v1607, %v1581
        %v1632 = vadd.f32 %v1608, %v1583
        %1633 = vst [vmem:[#allocation3] sm:$0xff] %v1609
        %1634 = vst [vmem:[#allocation3 + $0x8] sm:$0xff] %v1610
        %1635 = vst [vmem:[#allocation3 + $0x10] sm:$0xff] %v1611
        %1636 = vst [vmem:[#allocation3 + $0x18] sm:$0xff] %v1612
        %1637 = vst [vmem:[#allocation3 + $0x20] sm:$0xff] %v1613
        %1638 = vst [vmem:[#allocation3 + $0x28] sm:$0xff] %v1614
        %1639 = vst [vmem:[#allocation3 + $0x30] sm:$0xff] %v1615
        %1640 = vst [vmem:[#allocation3 + $0x38] sm:$0xff] %v1616
        %1641 = vst [vmem:[#allocation3 + $0x40] sm:$0xff] %v1617
        %1642 = vst [vmem:[#allocation3 + $0x48] sm:$0xff] %v1618
        %1643 = vst [vmem:[#allocation3 + $0x50] sm:$0xff] %v1619
        %1644 = vst [vmem:[#allocation3 + $0x58] sm:$0xff] %v1620
        %1645 = vst [vmem:[#allocation3 + $0x60] sm:$0xff] %v1621
        %1646 = vst [vmem:[#allocation3 + $0x68] sm:$0xff] %v1622
        %1647 = vst [vmem:[#allocation3 + $0x70] sm:$0xff] %v1623
        %1648 = vst [vmem:[#allocation3 + $0x78] sm:$0xff] %v1624
        %1649 = vst [vmem:[#allocation3 + $0x80] sm:$0xff] %v1625
        %1650 = vst [vmem:[#allocation3 + $0x88] sm:$0xff] %v1626
        %1651 = vst [vmem:[#allocation3 + $0x90] sm:$0xff] %v1627
        %1652 = vst [vmem:[#allocation3 + $0x98] sm:$0xff] %v1628
        %1653 = vst [vmem:[#allocation3 + $0xa0] sm:$0xff] %v1629
        %1654 = vst [vmem:[#allocation3 + $0xa8] sm:$0xff] %v1630
        %1655 = vst [vmem:[#allocation3 + $0xb0] sm:$0xff] %v1631
        %1656 = vst [vmem:[#allocation3 + $0xb8] sm:$0xff] %v1632
        %v1657 = vld [vmem:[#allocation2 + $0xc] sm:$0xf]
        %v1658 = vld [vmem:[#allocation2 + $0x10] sm:$0xf]
        %v1659 = vld [vmem:[#allocation2 + $0x14] sm:$0xf]
        %v1660 = vld [vmem:[#allocation2 + $0x18] sm:$0xf]
        %v1661 = vld [vmem:[#allocation2 + $0x1c] sm:$0xf]
        %v1662 = vld [vmem:[#allocation2 + $0x20] sm:$0xf]
        %v1663 = vld [vmem:[#allocation2 + $0x24] sm:$0xf]
        %v1664 = vld [vmem:[#allocation2 + $0x28] sm:$0xf]
        %v1665 = vld [vmem:[#allocation2 + $0x2c] sm:$0xf]
        %v1666 = vld [vmem:[#allocation2 + $0x30] sm:$0xf]
        %v1667 = vld [vmem:[#allocation2 + $0x34] sm:$0xf]
        %v1668 = vld [vmem:[#allocation2 + $0x38] sm:$0xf]
        %v1669 = vld [vmem:[#allocation2 + $0x3c] sm:$0xf]
        %v1670 = vld [vmem:[#allocation2 + $0x40] sm:$0xf]
        %v1671 = vld [vmem:[#allocation2 + $0x44] sm:$0xf]
        %v1672 = vld [vmem:[#allocation2 + $0x48] sm:$0xf]
        %v1673 = vld [vmem:[#allocation2 + $0x4c] sm:$0xf]
        %v1674 = vld [vmem:[#allocation2 + $0x50] sm:$0xf]
        %v1675 = vld [vmem:[#allocation2 + $0x54] sm:$0xf]
        %v1676 = vld [vmem:[#allocation2 + $0x58] sm:$0xf]
        %v1677 = vld [vmem:[#allocation2 + $0x5c] sm:$0xf]
        %v1678 = vld [vmem:[#allocation2 + $0x60] sm:$0xf]
        %v1679 = vld [vmem:[#allocation2 + $0x64] sm:$0xf]
        %v1680 = vld [vmem:[#allocation2 + $0x68] sm:$0xf]
        %v1681 = vld [vmem:[#allocation2 + $0x6c] sm:$0x1]
        %s1682 = scalar_lea.vmem [#allocation9], 256
        %v1683 = vld [vmem:[%s1682] sm:$0xf]
        %v1684 = vld [vmem:[%s1682 + $0x4] sm:$0xf]
        %v1685 = vld [vmem:[%s1682 + $0x8] sm:$0xf]
        %v1686 = vld [vmem:[%s1682 + $0xc] sm:$0xf]
        %v1687 = vld [vmem:[%s1682 + $0x10] sm:$0xf]
        %v1688 = vld [vmem:[%s1682 + $0x14] sm:$0xf]
        %v1689 = vld [vmem:[%s1682 + $0x18] sm:$0xf]
        %v1690 = vld [vmem:[%s1682 + $0x1c] sm:$0xf]
        %v1691 = vld [vmem:[%s1682 + $0x20] sm:$0xf]
        %v1692 = vld [vmem:[%s1682 + $0x24] sm:$0xf]
        %v1693 = vld [vmem:[%s1682 + $0x28] sm:$0xf]
        %v1694 = vld [vmem:[%s1682 + $0x2c] sm:$0xf]
        %v1695 = vld [vmem:[%s1682 + $0x30] sm:$0xf]
        %v1696 = vld [vmem:[%s1682 + $0x34] sm:$0xf]
        %v1697 = vld [vmem:[%s1682 + $0x38] sm:$0xf]
        %v1698 = vld [vmem:[%s1682 + $0x3c] sm:$0xf]
        %v1724 = vunpack.c.l.b16 %v1657
        %v1725 = vunpack.c.l.b16 %v1658
        %v1726 = vunpack.c.l.b16 %v1659
        %v1727 = vunpack.c.l.b16 %v1660
        %v1728 = vunpack.c.l.b16 %v1661
        %v1729 = vunpack.c.l.b16 %v1662
        %v1730 = vunpack.c.l.b16 %v1663
        %v1731 = vunpack.c.l.b16 %v1664
        %v1732 = vunpack.c.l.b16 %v1665
        %v1733 = vunpack.c.l.b16 %v1666
        %v1734 = vunpack.c.l.b16 %v1667
        %v1735 = vunpack.c.l.b16 %v1668
        %v1736 = vunpack.c.l.b16 %v1669
        %v1737 = vunpack.c.l.b16 %v1670
        %v1738 = vunpack.c.l.b16 %v1671
        %v1739 = vunpack.c.l.b16 %v1672
        %v1740 = vunpack.c.l.b16 %v1673
        %v1741 = vunpack.c.l.b16 %v1674
        %v1742 = vunpack.c.l.b16 %v1675
        %v1743 = vunpack.c.l.b16 %v1676
        %v1744 = vunpack.c.l.b16 %v1677
        %v1745 = vunpack.c.l.b16 %v1678
        %v1746 = vunpack.c.l.b16 %v1679
        %v1747 = vunpack.c.l.b16 %v1680
        %v1748 = vunpack.c.l.b16 %v1681
        %v1749 = vpack.c.b16 %v1725, %v1724
        %v1750 = vpack.c.b16 %v1727, %v1726
        %v1751 = vpack.c.b16 %v1729, %v1728
        %v1752 = vpack.c.b16 %v1731, %v1730
        %v1753 = vpack.c.b16 %v1733, %v1732
        %v1754 = vpack.c.b16 %v1735, %v1734
        %v1755 = vpack.c.b16 %v1737, %v1736
        %v1756 = vpack.c.b16 %v1739, %v1738
        %v1757 = vpack.c.b16 %v1741, %v1740
        %v1758 = vpack.c.b16 %v1743, %v1742
        %v1759 = vpack.c.b16 %v1745, %v1744
        %v1760 = vpack.c.b16 %v1747, %v1746
        %v1761 = vpack.c.b16 %v1748, %v1748
        %v1763 = vshrl.u32 %v1749, 16
        %v1765 = vshll.u32 %v1749, 16
        %v1767 = vrot.slane %v1765, 1
        %v1768 = vor.u32 %v1763, %v1767
        %v1770 = vshll.u32 %v1750, 16
        %v1772 = vrot.slane %v1770, 1
        %v1773 = vsel %vm721, %v1768, %v1772
        %v1774 = vshrl.u32 %v1750, 16
        %v1776 = vor.u32 %v1774, %v1772
        %v1778 = vshll.u32 %v1751, 16
        %v1780 = vrot.slane %v1778, 1
        %v1781 = vsel %vm721, %v1776, %v1780
        %v1782 = vshrl.u32 %v1751, 16
        %v1784 = vor.u32 %v1782, %v1780
        %v1786 = vshll.u32 %v1752, 16
        %v1788 = vrot.slane %v1786, 1
        %v1789 = vsel %vm721, %v1784, %v1788
        %v1790 = vshrl.u32 %v1752, 16
        %v1792 = vor.u32 %v1790, %v1788
        %v1794 = vshll.u32 %v1753, 16
        %v1796 = vrot.slane %v1794, 1
        %v1797 = vsel %vm721, %v1792, %v1796
        %v1798 = vshrl.u32 %v1753, 16
        %v1800 = vor.u32 %v1798, %v1796
        %v1802 = vshll.u32 %v1754, 16
        %v1804 = vrot.slane %v1802, 1
        %v1805 = vsel %vm721, %v1800, %v1804
        %v1806 = vshrl.u32 %v1754, 16
        %v1808 = vor.u32 %v1806, %v1804
        %v1810 = vshll.u32 %v1755, 16
        %v1812 = vrot.slane %v1810, 1
        %v1813 = vsel %vm721, %v1808, %v1812
        %v1814 = vshrl.u32 %v1755, 16
        %v1816 = vor.u32 %v1814, %v1812
        %v1818 = vshll.u32 %v1756, 16
        %v1820 = vrot.slane %v1818, 1
        %v1821 = vsel %vm721, %v1816, %v1820
        %v1822 = vshrl.u32 %v1756, 16
        %v1824 = vor.u32 %v1822, %v1820
        %v1826 = vshll.u32 %v1757, 16
        %v1828 = vrot.slane %v1826, 1
        %v1829 = vsel %vm721, %v1824, %v1828
        %v1830 = vshrl.u32 %v1757, 16
        %v1832 = vor.u32 %v1830, %v1828
        %v1834 = vshll.u32 %v1758, 16
        %v1836 = vrot.slane %v1834, 1
        %v1837 = vsel %vm721, %v1832, %v1836
        %v1838 = vshrl.u32 %v1758, 16
        %v1840 = vor.u32 %v1838, %v1836
        %v1842 = vshll.u32 %v1759, 16
        %v1844 = vrot.slane %v1842, 1
        %v1845 = vsel %vm721, %v1840, %v1844
        %v1846 = vshrl.u32 %v1759, 16
        %v1848 = vor.u32 %v1846, %v1844
        %v1850 = vshll.u32 %v1760, 16
        %v1852 = vrot.slane %v1850, 1
        %v1853 = vsel %vm721, %v1848, %v1852
        %v1854 = vshrl.u32 %v1760, 16
        %v1856 = vor.u32 %v1854, %v1852
        %v1858 = vshll.u32 %v1761, 16
        %v1860 = vrot.slane %v1858, 1
        %v1861 = vsel %vm721, %v1856, %v1860
        %v1890 = vunpack.c.l.b16 %v1683
        %v1891 = vunpack.c.l.b16 %v1684
        %v1892 = vunpack.c.l.b16 %v1685
        %v1893 = vunpack.c.l.b16 %v1686
        %v1894 = vunpack.c.l.b16 %v1687
        %v1895 = vunpack.c.l.b16 %v1688
        %v1896 = vunpack.c.l.b16 %v1689
        %v1897 = vunpack.c.l.b16 %v1690
        %v1898 = vunpack.c.l.b16 %v1691
        %v1899 = vunpack.c.l.b16 %v1692
        %v1900 = vunpack.c.l.b16 %v1693
        %v1901 = vunpack.c.l.b16 %v1694
        %v1902 = vunpack.c.l.b16 %v1695
        %v1903 = vunpack.c.l.b16 %v1696
        %v1904 = vunpack.c.l.b16 %v1697
        %v1905 = vunpack.c.l.b16 %v1698
        %v1906 = vpack.c.b16 %v1891, %v1890
        %v1907 = vpack.c.b16 %v1893, %v1892
        %v1908 = vpack.c.b16 %v1895, %v1894
        %v1909 = vpack.c.b16 %v1897, %v1896
        %v1910 = vpack.c.b16 %v1899, %v1898
        %v1911 = vpack.c.b16 %v1901, %v1900
        %v1912 = vpack.c.b16 %v1903, %v1902
        %v1913 = vpack.c.b16 %v1905, %v1904
        %1922 = vmatpush.bf16.msra.mxu0 %v1913
        %1923 = vmatpush.bf16.msra.mxu0 %v1912
        %1924 = vmatpush.bf16.msra.mxu0 %v1911
        %1925 = vmatpush.bf16.msra.mxu0 %v1910
        %1926 = vmatpush.bf16.msra.mxu0 %v1909
        %1927 = vmatpush.bf16.msra.mxu0 %v1908
        %1928 = vmatpush.bf16.msra.mxu0 %v1907
        %1929 = vmatpush.bf16.msra.mxu0 %v1906
        %1930 = vmatmul.bf16.gmra.mxu0 %v1773
        %v1931 = vpop.f32.mrf.mxu0
        %v1932 = vadd.f32 0.0, %v1931
        %v1933 = vpop.f32.mrf.mxu0
        %v1934 = vadd.f32 0.0, %v1933
        %1935 = vmatmul.bf16.gmra.mxu0 %v1781
        %v1936 = vpop.f32.mrf.mxu0
        %v1937 = vadd.f32 0.0, %v1936
        %v1938 = vpop.f32.mrf.mxu0
        %v1939 = vadd.f32 0.0, %v1938
        %1940 = vmatmul.bf16.gmra.mxu0 %v1789
        %v1941 = vpop.f32.mrf.mxu0
        %v1942 = vadd.f32 0.0, %v1941
        %v1943 = vpop.f32.mrf.mxu0
        %v1944 = vadd.f32 0.0, %v1943
        %1945 = vmatmul.bf16.gmra.mxu0 %v1797
        %v1946 = vpop.f32.mrf.mxu0
        %v1947 = vadd.f32 0.0, %v1946
        %v1948 = vpop.f32.mrf.mxu0
        %v1949 = vadd.f32 0.0, %v1948
        %1950 = vmatmul.bf16.gmra.mxu0 %v1805
        %v1951 = vpop.f32.mrf.mxu0
        %v1952 = vadd.f32 0.0, %v1951
        %v1953 = vpop.f32.mrf.mxu0
        %v1954 = vadd.f32 0.0, %v1953
        %1955 = vmatmul.bf16.gmra.mxu0 %v1813
        %v1956 = vpop.f32.mrf.mxu0
        %v1957 = vadd.f32 0.0, %v1956
        %v1958 = vpop.f32.mrf.mxu0
        %v1959 = vadd.f32 0.0, %v1958
        %1960 = vmatmul.bf16.gmra.mxu0 %v1821
        %v1961 = vpop.f32.mrf.mxu0
        %v1962 = vadd.f32 0.0, %v1961
        %v1963 = vpop.f32.mrf.mxu0
        %v1964 = vadd.f32 0.0, %v1963
        %1965 = vmatmul.bf16.gmra.mxu0 %v1829
        %v1966 = vpop.f32.mrf.mxu0
        %v1967 = vadd.f32 0.0, %v1966
        %v1968 = vpop.f32.mrf.mxu0
        %v1969 = vadd.f32 0.0, %v1968
        %1970 = vmatmul.bf16.gmra.mxu0 %v1837
        %v1971 = vpop.f32.mrf.mxu0
        %v1972 = vadd.f32 0.0, %v1971
        %v1973 = vpop.f32.mrf.mxu0
        %v1974 = vadd.f32 0.0, %v1973
        %1975 = vmatmul.bf16.gmra.mxu0 %v1845
        %v1976 = vpop.f32.mrf.mxu0
        %v1977 = vadd.f32 0.0, %v1976
        %v1978 = vpop.f32.mrf.mxu0
        %v1979 = vadd.f32 0.0, %v1978
        %1980 = vmatmul.bf16.gmra.mxu0 %v1853
        %v1981 = vpop.f32.mrf.mxu0
        %v1982 = vadd.f32 0.0, %v1981
        %v1983 = vpop.f32.mrf.mxu0
        %v1984 = vadd.f32 0.0, %v1983
        %1985 = vmatmul.bf16.gmra.mxu0 %v1861
        %v1986 = vpop.f32.mrf.mxu0
        %v1987 = vadd.f32 0.0, %v1986
        %v1988 = vpop.f32.mrf.mxu0
        %v1989 = vadd.f32 0.0, %v1988
        %1990 = vdwg.mxu0
        %v1991 = vld [vmem:[#allocation3] sm:$0xff]
        %v1992 = vld [vmem:[#allocation3 + $0x8] sm:$0xff]
        %v1993 = vld [vmem:[#allocation3 + $0x10] sm:$0xff]
        %v1994 = vld [vmem:[#allocation3 + $0x18] sm:$0xff]
        %v1995 = vld [vmem:[#allocation3 + $0x20] sm:$0xff]
        %v1996 = vld [vmem:[#allocation3 + $0x28] sm:$0xff]
        %v1997 = vld [vmem:[#allocation3 + $0x30] sm:$0xff]
        %v1998 = vld [vmem:[#allocation3 + $0x38] sm:$0xff]
        %v1999 = vld [vmem:[#allocation3 + $0x40] sm:$0xff]
        %v2000 = vld [vmem:[#allocation3 + $0x48] sm:$0xff]
        %v2001 = vld [vmem:[#allocation3 + $0x50] sm:$0xff]
        %v2002 = vld [vmem:[#allocation3 + $0x58] sm:$0xff]
        %v2003 = vld [vmem:[#allocation3 + $0x60] sm:$0xff]
        %v2004 = vld [vmem:[#allocation3 + $0x68] sm:$0xff]
        %v2005 = vld [vmem:[#allocation3 + $0x70] sm:$0xff]
        %v2006 = vld [vmem:[#allocation3 + $0x78] sm:$0xff]
        %v2007 = vld [vmem:[#allocation3 + $0x80] sm:$0xff]
        %v2008 = vld [vmem:[#allocation3 + $0x88] sm:$0xff]
        %v2009 = vld [vmem:[#allocation3 + $0x90] sm:$0xff]
        %v2010 = vld [vmem:[#allocation3 + $0x98] sm:$0xff]
        %v2011 = vld [vmem:[#allocation3 + $0xa0] sm:$0xff]
        %v2012 = vld [vmem:[#allocation3 + $0xa8] sm:$0xff]
        %v2013 = vld [vmem:[#allocation3 + $0xb0] sm:$0xff]
        %v2014 = vld [vmem:[#allocation3 + $0xb8] sm:$0xff]
        %v2015 = vadd.f32 %v1991, %v1932
        %v2016 = vadd.f32 %v1992, %v1934
        %v2017 = vadd.f32 %v1993, %v1937
        %v2018 = vadd.f32 %v1994, %v1939
        %v2019 = vadd.f32 %v1995, %v1942
        %v2020 = vadd.f32 %v1996, %v1944
        %v2021 = vadd.f32 %v1997, %v1947
        %v2022 = vadd.f32 %v1998, %v1949
        %v2023 = vadd.f32 %v1999, %v1952
        %v2024 = vadd.f32 %v2000, %v1954
        %v2025 = vadd.f32 %v2001, %v1957
        %v2026 = vadd.f32 %v2002, %v1959
        %v2027 = vadd.f32 %v2003, %v1962
        %v2028 = vadd.f32 %v2004, %v1964
        %v2029 = vadd.f32 %v2005, %v1967
        %v2030 = vadd.f32 %v2006, %v1969
        %v2031 = vadd.f32 %v2007, %v1972
        %v2032 = vadd.f32 %v2008, %v1974
        %v2033 = vadd.f32 %v2009, %v1977
        %v2034 = vadd.f32 %v2010, %v1979
        %v2035 = vadd.f32 %v2011, %v1982
        %v2036 = vadd.f32 %v2012, %v1984
        %v2037 = vadd.f32 %v2013, %v1987
        %v2038 = vadd.f32 %v2014, %v1989
        %2039 = vst [vmem:[#allocation3] sm:$0xff] %v2015
        %2040 = vst [vmem:[#allocation3 + $0x8] sm:$0xff] %v2016
        %2041 = vst [vmem:[#allocation3 + $0x10] sm:$0xff] %v2017
        %2042 = vst [vmem:[#allocation3 + $0x18] sm:$0xff] %v2018
        %2043 = vst [vmem:[#allocation3 + $0x20] sm:$0xff] %v2019
        %2044 = vst [vmem:[#allocation3 + $0x28] sm:$0xff] %v2020
        %2045 = vst [vmem:[#allocation3 + $0x30] sm:$0xff] %v2021
        %2046 = vst [vmem:[#allocation3 + $0x38] sm:$0xff] %v2022
        %2047 = vst [vmem:[#allocation3 + $0x40] sm:$0xff] %v2023
        %2048 = vst [vmem:[#allocation3 + $0x48] sm:$0xff] %v2024
        %2049 = vst [vmem:[#allocation3 + $0x50] sm:$0xff] %v2025
        %2050 = vst [vmem:[#allocation3 + $0x58] sm:$0xff] %v2026
        %2051 = vst [vmem:[#allocation3 + $0x60] sm:$0xff] %v2027
        %2052 = vst [vmem:[#allocation3 + $0x68] sm:$0xff] %v2028
        %2053 = vst [vmem:[#allocation3 + $0x70] sm:$0xff] %v2029
        %2054 = vst [vmem:[#allocation3 + $0x78] sm:$0xff] %v2030
        %2055 = vst [vmem:[#allocation3 + $0x80] sm:$0xff] %v2031
        %2056 = vst [vmem:[#allocation3 + $0x88] sm:$0xff] %v2032
        %2057 = vst [vmem:[#allocation3 + $0x90] sm:$0xff] %v2033
        %2058 = vst [vmem:[#allocation3 + $0x98] sm:$0xff] %v2034
        %2059 = vst [vmem:[#allocation3 + $0xa0] sm:$0xff] %v2035
        %2060 = vst [vmem:[#allocation3 + $0xa8] sm:$0xff] %v2036
        %2061 = vst [vmem:[#allocation3 + $0xb0] sm:$0xff] %v2037
        %2062 = vst [vmem:[#allocation3 + $0xb8] sm:$0xff] %v2038
        %v2063 = vld [vmem:[#allocation2 + $0xc] sm:$0xe]
        %v2064 = vld [vmem:[#allocation2 + $0x10] sm:$0xf]
        %v2065 = vld [vmem:[#allocation2 + $0x14] sm:$0xf]
        %v2066 = vld [vmem:[#allocation2 + $0x18] sm:$0xf]
        %v2067 = vld [vmem:[#allocation2 + $0x1c] sm:$0xf]
        %v2068 = vld [vmem:[#allocation2 + $0x20] sm:$0xf]
        %v2069 = vld [vmem:[#allocation2 + $0x24] sm:$0xf]
        %v2070 = vld [vmem:[#allocation2 + $0x28] sm:$0xf]
        %v2071 = vld [vmem:[#allocation2 + $0x2c] sm:$0xf]
        %v2072 = vld [vmem:[#allocation2 + $0x30] sm:$0xf]
        %v2073 = vld [vmem:[#allocation2 + $0x34] sm:$0xf]
        %v2074 = vld [vmem:[#allocation2 + $0x38] sm:$0xf]
        %v2075 = vld [vmem:[#allocation2 + $0x3c] sm:$0xf]
        %v2076 = vld [vmem:[#allocation2 + $0x40] sm:$0xf]
        %v2077 = vld [vmem:[#allocation2 + $0x44] sm:$0xf]
        %v2078 = vld [vmem:[#allocation2 + $0x48] sm:$0xf]
        %v2079 = vld [vmem:[#allocation2 + $0x4c] sm:$0xf]
        %v2080 = vld [vmem:[#allocation2 + $0x50] sm:$0xf]
        %v2081 = vld [vmem:[#allocation2 + $0x54] sm:$0xf]
        %v2082 = vld [vmem:[#allocation2 + $0x58] sm:$0xf]
        %v2083 = vld [vmem:[#allocation2 + $0x5c] sm:$0xf]
        %v2084 = vld [vmem:[#allocation2 + $0x60] sm:$0xf]
        %v2085 = vld [vmem:[#allocation2 + $0x64] sm:$0xf]
        %v2086 = vld [vmem:[#allocation2 + $0x68] sm:$0xf]
        %v2087 = vld [vmem:[#allocation2 + $0x6c] sm:$0x1]
        %s2088 = scalar_lea.vmem [#allocation9], 320
        %v2089 = vld [vmem:[%s2088] sm:$0xf]
        %v2090 = vld [vmem:[%s2088 + $0x4] sm:$0xf]
        %v2091 = vld [vmem:[%s2088 + $0x8] sm:$0xf]
        %v2092 = vld [vmem:[%s2088 + $0xc] sm:$0xf]
        %v2093 = vld [vmem:[%s2088 + $0x10] sm:$0xf]
        %v2094 = vld [vmem:[%s2088 + $0x14] sm:$0xf]
        %v2095 = vld [vmem:[%s2088 + $0x18] sm:$0xf]
        %v2096 = vld [vmem:[%s2088 + $0x1c] sm:$0xf]
        %v2097 = vld [vmem:[%s2088 + $0x20] sm:$0xf]
        %v2098 = vld [vmem:[%s2088 + $0x24] sm:$0xf]
        %v2099 = vld [vmem:[%s2088 + $0x28] sm:$0xf]
        %v2100 = vld [vmem:[%s2088 + $0x2c] sm:$0xf]
        %v2101 = vld [vmem:[%s2088 + $0x30] sm:$0xf]
        %v2102 = vld [vmem:[%s2088 + $0x34] sm:$0xf]
        %v2103 = vld [vmem:[%s2088 + $0x38] sm:$0xf]
        %v2104 = vld [vmem:[%s2088 + $0x3c] sm:$0xf]
        %v2130 = vunpack.c.l.b16 %v2063
        %v2131 = vunpack.c.l.b16 %v2064
        %v2132 = vunpack.c.l.b16 %v2065
        %v2133 = vunpack.c.l.b16 %v2066
        %v2134 = vunpack.c.l.b16 %v2067
        %v2135 = vunpack.c.l.b16 %v2068
        %v2136 = vunpack.c.l.b16 %v2069
        %v2137 = vunpack.c.l.b16 %v2070
        %v2138 = vunpack.c.l.b16 %v2071
        %v2139 = vunpack.c.l.b16 %v2072
        %v2140 = vunpack.c.l.b16 %v2073
        %v2141 = vunpack.c.l.b16 %v2074
        %v2142 = vunpack.c.l.b16 %v2075
        %v2143 = vunpack.c.l.b16 %v2076
        %v2144 = vunpack.c.l.b16 %v2077
        %v2145 = vunpack.c.l.b16 %v2078
        %v2146 = vunpack.c.l.b16 %v2079
        %v2147 = vunpack.c.l.b16 %v2080
        %v2148 = vunpack.c.l.b16 %v2081
        %v2149 = vunpack.c.l.b16 %v2082
        %v2150 = vunpack.c.l.b16 %v2083
        %v2151 = vunpack.c.l.b16 %v2084
        %v2152 = vunpack.c.l.b16 %v2085
        %v2153 = vunpack.c.l.b16 %v2086
        %v2154 = vunpack.c.l.b16 %v2087
        %v2155 = vpack.c.b16 %v2131, %v2130
        %v2156 = vpack.c.b16 %v2133, %v2132
        %v2157 = vpack.c.b16 %v2135, %v2134
        %v2158 = vpack.c.b16 %v2137, %v2136
        %v2159 = vpack.c.b16 %v2139, %v2138
        %v2160 = vpack.c.b16 %v2141, %v2140
        %v2161 = vpack.c.b16 %v2143, %v2142
        %v2162 = vpack.c.b16 %v2145, %v2144
        %v2163 = vpack.c.b16 %v2147, %v2146
        %v2164 = vpack.c.b16 %v2149, %v2148
        %v2165 = vpack.c.b16 %v2151, %v2150
        %v2166 = vpack.c.b16 %v2153, %v2152
        %v2167 = vpack.c.b16 %v2154, %v2154
        %v2168 = vrot.slane %v2155, 1
        %v2169 = vrot.slane %v2156, 1
        %v2170 = vsel %vm1128, %v2168, %v2169
        %v2171 = vrot.slane %v2157, 1
        %v2172 = vsel %vm1128, %v2169, %v2171
        %v2173 = vrot.slane %v2158, 1
        %v2174 = vsel %vm1128, %v2171, %v2173
        %v2175 = vrot.slane %v2159, 1
        %v2176 = vsel %vm1128, %v2173, %v2175
        %v2177 = vrot.slane %v2160, 1
        %v2178 = vsel %vm1128, %v2175, %v2177
        %v2179 = vrot.slane %v2161, 1
        %v2180 = vsel %vm1128, %v2177, %v2179
        %v2181 = vrot.slane %v2162, 1
        %v2182 = vsel %vm1128, %v2179, %v2181
        %v2183 = vrot.slane %v2163, 1
        %v2184 = vsel %vm1128, %v2181, %v2183
        %v2185 = vrot.slane %v2164, 1
        %v2186 = vsel %vm1128, %v2183, %v2185
        %v2187 = vrot.slane %v2165, 1
        %v2188 = vsel %vm1128, %v2185, %v2187
        %v2189 = vrot.slane %v2166, 1
        %v2190 = vsel %vm1128, %v2187, %v2189
        %v2191 = vrot.slane %v2167, 1
        %v2192 = vsel %vm1128, %v2189, %v2191
        %v2221 = vunpack.c.l.b16 %v2089
        %v2222 = vunpack.c.l.b16 %v2090
        %v2223 = vunpack.c.l.b16 %v2091
        %v2224 = vunpack.c.l.b16 %v2092
        %v2225 = vunpack.c.l.b16 %v2093
        %v2226 = vunpack.c.l.b16 %v2094
        %v2227 = vunpack.c.l.b16 %v2095
        %v2228 = vunpack.c.l.b16 %v2096
        %v2229 = vunpack.c.l.b16 %v2097
        %v2230 = vunpack.c.l.b16 %v2098
        %v2231 = vunpack.c.l.b16 %v2099
        %v2232 = vunpack.c.l.b16 %v2100
        %v2233 = vunpack.c.l.b16 %v2101
        %v2234 = vunpack.c.l.b16 %v2102
        %v2235 = vunpack.c.l.b16 %v2103
        %v2236 = vunpack.c.l.b16 %v2104
        %v2237 = vpack.c.b16 %v2222, %v2221
        %v2238 = vpack.c.b16 %v2224, %v2223
        %v2239 = vpack.c.b16 %v2226, %v2225
        %v2240 = vpack.c.b16 %v2228, %v2227
        %v2241 = vpack.c.b16 %v2230, %v2229
        %v2242 = vpack.c.b16 %v2232, %v2231
        %v2243 = vpack.c.b16 %v2234, %v2233
        %v2244 = vpack.c.b16 %v2236, %v2235
        %2253 = vmatpush.bf16.msra.mxu0 %v2244
        %2254 = vmatpush.bf16.msra.mxu0 %v2243
        %2255 = vmatpush.bf16.msra.mxu0 %v2242
        %2256 = vmatpush.bf16.msra.mxu0 %v2241
        %2257 = vmatpush.bf16.msra.mxu0 %v2240
        %2258 = vmatpush.bf16.msra.mxu0 %v2239
        %2259 = vmatpush.bf16.msra.mxu0 %v2238
        %2260 = vmatpush.bf16.msra.mxu0 %v2237
        %2261 = vmatmul.bf16.gmra.mxu0 %v2170
        %v2262 = vpop.f32.mrf.mxu0
        %v2263 = vadd.f32 0.0, %v2262
        %v2264 = vpop.f32.mrf.mxu0
        %v2265 = vadd.f32 0.0, %v2264
        %2266 = vmatmul.bf16.gmra.mxu0 %v2172
        %v2267 = vpop.f32.mrf.mxu0
        %v2268 = vadd.f32 0.0, %v2267
        %v2269 = vpop.f32.mrf.mxu0
        %v2270 = vadd.f32 0.0, %v2269
        %2271 = vmatmul.bf16.gmra.mxu0 %v2174
        %v2272 = vpop.f32.mrf.mxu0
        %v2273 = vadd.f32 0.0, %v2272
        %v2274 = vpop.f32.mrf.mxu0
        %v2275 = vadd.f32 0.0, %v2274
        %2276 = vmatmul.bf16.gmra.mxu0 %v2176
        %v2277 = vpop.f32.mrf.mxu0
        %v2278 = vadd.f32 0.0, %v2277
        %v2279 = vpop.f32.mrf.mxu0
        %v2280 = vadd.f32 0.0, %v2279
        %2281 = vmatmul.bf16.gmra.mxu0 %v2178
        %v2282 = vpop.f32.mrf.mxu0
        %v2283 = vadd.f32 0.0, %v2282
        %v2284 = vpop.f32.mrf.mxu0
        %v2285 = vadd.f32 0.0, %v2284
        %2286 = vmatmul.bf16.gmra.mxu0 %v2180
        %v2287 = vpop.f32.mrf.mxu0
        %v2288 = vadd.f32 0.0, %v2287
        %v2289 = vpop.f32.mrf.mxu0
        %v2290 = vadd.f32 0.0, %v2289
        %2291 = vmatmul.bf16.gmra.mxu0 %v2182
        %v2292 = vpop.f32.mrf.mxu0
        %v2293 = vadd.f32 0.0, %v2292
        %v2294 = vpop.f32.mrf.mxu0
        %v2295 = vadd.f32 0.0, %v2294
        %2296 = vmatmul.bf16.gmra.mxu0 %v2184
        %v2297 = vpop.f32.mrf.mxu0
        %v2298 = vadd.f32 0.0, %v2297
        %v2299 = vpop.f32.mrf.mxu0
        %v2300 = vadd.f32 0.0, %v2299
        %2301 = vmatmul.bf16.gmra.mxu0 %v2186
        %v2302 = vpop.f32.mrf.mxu0
        %v2303 = vadd.f32 0.0, %v2302
        %v2304 = vpop.f32.mrf.mxu0
        %v2305 = vadd.f32 0.0, %v2304
        %2306 = vmatmul.bf16.gmra.mxu0 %v2188
        %v2307 = vpop.f32.mrf.mxu0
        %v2308 = vadd.f32 0.0, %v2307
        %v2309 = vpop.f32.mrf.mxu0
        %v2310 = vadd.f32 0.0, %v2309
        %2311 = vmatmul.bf16.gmra.mxu0 %v2190
        %v2312 = vpop.f32.mrf.mxu0
        %v2313 = vadd.f32 0.0, %v2312
        %v2314 = vpop.f32.mrf.mxu0
        %v2315 = vadd.f32 0.0, %v2314
        %2316 = vmatmul.bf16.gmra.mxu0 %v2192
        %v2317 = vpop.f32.mrf.mxu0
        %v2318 = vadd.f32 0.0, %v2317
        %v2319 = vpop.f32.mrf.mxu0
        %v2320 = vadd.f32 0.0, %v2319
        %2321 = vdwg.mxu0
        %v2322 = vld [vmem:[#allocation3] sm:$0xff]
        %v2323 = vld [vmem:[#allocation3 + $0x8] sm:$0xff]
        %v2324 = vld [vmem:[#allocation3 + $0x10] sm:$0xff]
        %v2325 = vld [vmem:[#allocation3 + $0x18] sm:$0xff]
        %v2326 = vld [vmem:[#allocation3 + $0x20] sm:$0xff]
        %v2327 = vld [vmem:[#allocation3 + $0x28] sm:$0xff]
        %v2328 = vld [vmem:[#allocation3 + $0x30] sm:$0xff]
        %v2329 = vld [vmem:[#allocation3 + $0x38] sm:$0xff]
        %v2330 = vld [vmem:[#allocation3 + $0x40] sm:$0xff]
        %v2331 = vld [vmem:[#allocation3 + $0x48] sm:$0xff]
        %v2332 = vld [vmem:[#allocation3 + $0x50] sm:$0xff]
        %v2333 = vld [vmem:[#allocation3 + $0x58] sm:$0xff]
        %v2334 = vld [vmem:[#allocation3 + $0x60] sm:$0xff]
        %v2335 = vld [vmem:[#allocation3 + $0x68] sm:$0xff]
        %v2336 = vld [vmem:[#allocation3 + $0x70] sm:$0xff]
        %v2337 = vld [vmem:[#allocation3 + $0x78] sm:$0xff]
        %v2338 = vld [vmem:[#allocation3 + $0x80] sm:$0xff]
        %v2339 = vld [vmem:[#allocation3 + $0x88] sm:$0xff]
        %v2340 = vld [vmem:[#allocation3 + $0x90] sm:$0xff]
        %v2341 = vld [vmem:[#allocation3 + $0x98] sm:$0xff]
        %v2342 = vld [vmem:[#allocation3 + $0xa0] sm:$0xff]
        %v2343 = vld [vmem:[#allocation3 + $0xa8] sm:$0xff]
        %v2344 = vld [vmem:[#allocation3 + $0xb0] sm:$0xff]
        %v2345 = vld [vmem:[#allocation3 + $0xb8] sm:$0xff]
        %v2346 = vadd.f32 %v2322, %v2263
        %v2347 = vadd.f32 %v2323, %v2265
        %v2348 = vadd.f32 %v2324, %v2268
        %v2349 = vadd.f32 %v2325, %v2270
        %v2350 = vadd.f32 %v2326, %v2273
        %v2351 = vadd.f32 %v2327, %v2275
        %v2352 = vadd.f32 %v2328, %v2278
        %v2353 = vadd.f32 %v2329, %v2280
        %v2354 = vadd.f32 %v2330, %v2283
        %v2355 = vadd.f32 %v2331, %v2285
        %v2356 = vadd.f32 %v2332, %v2288
        %v2357 = vadd.f32 %v2333, %v2290
        %v2358 = vadd.f32 %v2334, %v2293
        %v2359 = vadd.f32 %v2335, %v2295
        %v2360 = vadd.f32 %v2336, %v2298
        %v2361 = vadd.f32 %v2337, %v2300
        %v2362 = vadd.f32 %v2338, %v2303
        %v2363 = vadd.f32 %v2339, %v2305
        %v2364 = vadd.f32 %v2340, %v2308
        %v2365 = vadd.f32 %v2341, %v2310
        %v2366 = vadd.f32 %v2342, %v2313
        %v2367 = vadd.f32 %v2343, %v2315
        %v2368 = vadd.f32 %v2344, %v2318
        %v2369 = vadd.f32 %v2345, %v2320
        %2370 = vst [vmem:[#allocation3] sm:$0xff] %v2346
        %2371 = vst [vmem:[#allocation3 + $0x8] sm:$0xff] %v2347
        %2372 = vst [vmem:[#allocation3 + $0x10] sm:$0xff] %v2348
        %2373 = vst [vmem:[#allocation3 + $0x18] sm:$0xff] %v2349
        %2374 = vst [vmem:[#allocation3 + $0x20] sm:$0xff] %v2350
        %2375 = vst [vmem:[#allocation3 + $0x28] sm:$0xff] %v2351
        %2376 = vst [vmem:[#allocation3 + $0x30] sm:$0xff] %v2352
        %2377 = vst [vmem:[#allocation3 + $0x38] sm:$0xff] %v2353
        %2378 = vst [vmem:[#allocation3 + $0x40] sm:$0xff] %v2354
        %2379 = vst [vmem:[#allocation3 + $0x48] sm:$0xff] %v2355
        %2380 = vst [vmem:[#allocation3 + $0x50] sm:$0xff] %v2356
        %2381 = vst [vmem:[#allocation3 + $0x58] sm:$0xff] %v2357
        %2382 = vst [vmem:[#allocation3 + $0x60] sm:$0xff] %v2358
        %2383 = vst [vmem:[#allocation3 + $0x68] sm:$0xff] %v2359
        %2384 = vst [vmem:[#allocation3 + $0x70] sm:$0xff] %v2360
        %2385 = vst [vmem:[#allocation3 + $0x78] sm:$0xff] %v2361
        %2386 = vst [vmem:[#allocation3 + $0x80] sm:$0xff] %v2362
        %2387 = vst [vmem:[#allocation3 + $0x88] sm:$0xff] %v2363
        %2388 = vst [vmem:[#allocation3 + $0x90] sm:$0xff] %v2364
        %2389 = vst [vmem:[#allocation3 + $0x98] sm:$0xff] %v2365
        %2390 = vst [vmem:[#allocation3 + $0xa0] sm:$0xff] %v2366
        %2391 = vst [vmem:[#allocation3 + $0xa8] sm:$0xff] %v2367
        %2392 = vst [vmem:[#allocation3 + $0xb0] sm:$0xff] %v2368
        %2393 = vst [vmem:[#allocation3 + $0xb8] sm:$0xff] %v2369
        %v2394 = vld [vmem:[#allocation2 + $0x18] sm:$0xf]
        %v2395 = vld [vmem:[#allocation2 + $0x1c] sm:$0xf]
        %v2396 = vld [vmem:[#allocation2 + $0x20] sm:$0xf]
        %v2397 = vld [vmem:[#allocation2 + $0x24] sm:$0xf]
        %v2398 = vld [vmem:[#allocation2 + $0x28] sm:$0xf]
        %v2399 = vld [vmem:[#allocation2 + $0x2c] sm:$0xf]
        %v2400 = vld [vmem:[#allocation2 + $0x30] sm:$0xf]
        %v2401 = vld [vmem:[#allocation2 + $0x34] sm:$0xf]
        %v2402 = vld [vmem:[#allocation2 + $0x38] sm:$0xf]
        %v2403 = vld [vmem:[#allocation2 + $0x3c] sm:$0xf]
        %v2404 = vld [vmem:[#allocation2 + $0x40] sm:$0xf]
        %v2405 = vld [vmem:[#allocation2 + $0x44] sm:$0xf]
        %v2406 = vld [vmem:[#allocation2 + $0x48] sm:$0xf]
        %v2407 = vld [vmem:[#allocation2 + $0x4c] sm:$0xf]
        %v2408 = vld [vmem:[#allocation2 + $0x50] sm:$0xf]
        %v2409 = vld [vmem:[#allocation2 + $0x54] sm:$0xf]
        %v2410 = vld [vmem:[#allocation2 + $0x58] sm:$0xf]
        %v2411 = vld [vmem:[#allocation2 + $0x5c] sm:$0xf]
        %v2412 = vld [vmem:[#allocation2 + $0x60] sm:$0xf]
        %v2413 = vld [vmem:[#allocation2 + $0x64] sm:$0xf]
        %v2414 = vld [vmem:[#allocation2 + $0x68] sm:$0xf]
        %v2415 = vld [vmem:[#allocation2 + $0x6c] sm:$0xf]
        %v2416 = vld [vmem:[#allocation2 + $0x70] sm:$0xf]
        %v2417 = vld [vmem:[#allocation2 + $0x74] sm:$0xf]
        %s2418 = scalar_lea.vmem [#allocation9], 384
        %v2419 = vld [vmem:[%s2418] sm:$0xf]
        %v2420 = vld [vmem:[%s2418 + $0x4] sm:$0xf]
        %v2421 = vld [vmem:[%s2418 + $0x8] sm:$0xf]
        %v2422 = vld [vmem:[%s2418 + $0xc] sm:$0xf]
        %v2423 = vld [vmem:[%s2418 + $0x10] sm:$0xf]
        %v2424 = vld [vmem:[%s2418 + $0x14] sm:$0xf]
        %v2425 = vld [vmem:[%s2418 + $0x18] sm:$0xf]
        %v2426 = vld [vmem:[%s2418 + $0x1c] sm:$0xf]
        %v2427 = vld [vmem:[%s2418 + $0x20] sm:$0xf]
        %v2428 = vld [vmem:[%s2418 + $0x24] sm:$0xf]
        %v2429 = vld [vmem:[%s2418 + $0x28] sm:$0xf]
        %v2430 = vld [vmem:[%s2418 + $0x2c] sm:$0xf]
        %v2431 = vld [vmem:[%s2418 + $0x30] sm:$0xf]
        %v2432 = vld [vmem:[%s2418 + $0x34] sm:$0xf]
        %v2433 = vld [vmem:[%s2418 + $0x38] sm:$0xf]
        %v2434 = vld [vmem:[%s2418 + $0x3c] sm:$0xf]
        %v2459 = vunpack.c.l.b16 %v2394
        %v2460 = vunpack.c.l.b16 %v2395
        %v2461 = vunpack.c.l.b16 %v2396
        %v2462 = vunpack.c.l.b16 %v2397
        %v2463 = vunpack.c.l.b16 %v2398
        %v2464 = vunpack.c.l.b16 %v2399
        %v2465 = vunpack.c.l.b16 %v2400
        %v2466 = vunpack.c.l.b16 %v2401
        %v2467 = vunpack.c.l.b16 %v2402
        %v2468 = vunpack.c.l.b16 %v2403
        %v2469 = vunpack.c.l.b16 %v2404
        %v2470 = vunpack.c.l.b16 %v2405
        %v2471 = vunpack.c.l.b16 %v2406
        %v2472 = vunpack.c.l.b16 %v2407
        %v2473 = vunpack.c.l.b16 %v2408
        %v2474 = vunpack.c.l.b16 %v2409
        %v2475 = vunpack.c.l.b16 %v2410
        %v2476 = vunpack.c.l.b16 %v2411
        %v2477 = vunpack.c.l.b16 %v2412
        %v2478 = vunpack.c.l.b16 %v2413
        %v2479 = vunpack.c.l.b16 %v2414
        %v2480 = vunpack.c.l.b16 %v2415
        %v2481 = vunpack.c.l.b16 %v2416
        %v2482 = vunpack.c.l.b16 %v2417
        %v2483 = vpack.c.b16 %v2460, %v2459
        %v2484 = vpack.c.b16 %v2462, %v2461
        %v2485 = vpack.c.b16 %v2464, %v2463
        %v2486 = vpack.c.b16 %v2466, %v2465
        %v2487 = vpack.c.b16 %v2468, %v2467
        %v2488 = vpack.c.b16 %v2470, %v2469
        %v2489 = vpack.c.b16 %v2472, %v2471
        %v2490 = vpack.c.b16 %v2474, %v2473
        %v2491 = vpack.c.b16 %v2476, %v2475
        %v2492 = vpack.c.b16 %v2478, %v2477
        %v2493 = vpack.c.b16 %v2480, %v2479
        %v2494 = vpack.c.b16 %v2482, %v2481
        %v2523 = vunpack.c.l.b16 %v2419
        %v2524 = vunpack.c.l.b16 %v2420
        %v2525 = vunpack.c.l.b16 %v2421
        %v2526 = vunpack.c.l.b16 %v2422
        %v2527 = vunpack.c.l.b16 %v2423
        %v2528 = vunpack.c.l.b16 %v2424
        %v2529 = vunpack.c.l.b16 %v2425
        %v2530 = vunpack.c.l.b16 %v2426
        %v2531 = vunpack.c.l.b16 %v2427
        %v2532 = vunpack.c.l.b16 %v2428
        %v2533 = vunpack.c.l.b16 %v2429
        %v2534 = vunpack.c.l.b16 %v2430
        %v2535 = vunpack.c.l.b16 %v2431
        %v2536 = vunpack.c.l.b16 %v2432
        %v2537 = vunpack.c.l.b16 %v2433
        %v2538 = vunpack.c.l.b16 %v2434
        %v2539 = vpack.c.b16 %v2524, %v2523
        %v2540 = vpack.c.b16 %v2526, %v2525
        %v2541 = vpack.c.b16 %v2528, %v2527
        %v2542 = vpack.c.b16 %v2530, %v2529
        %v2543 = vpack.c.b16 %v2532, %v2531
        %v2544 = vpack.c.b16 %v2534, %v2533
        %v2545 = vpack.c.b16 %v2536, %v2535
        %v2546 = vpack.c.b16 %v2538, %v2537
        %2555 = vmatpush.bf16.msra.mxu0 %v2546
        %2556 = vmatpush.bf16.msra.mxu0 %v2545
        %2557 = vmatpush.bf16.msra.mxu0 %v2544
        %2558 = vmatpush.bf16.msra.mxu0 %v2543
        %2559 = vmatpush.bf16.msra.mxu0 %v2542
        %2560 = vmatpush.bf16.msra.mxu0 %v2541
        %2561 = vmatpush.bf16.msra.mxu0 %v2540
        %2562 = vmatpush.bf16.msra.mxu0 %v2539
        %2563 = vmatmul.bf16.gmra.mxu0 %v2483
        %v2564 = vpop.f32.mrf.mxu0
        %v2565 = vadd.f32 0.0, %v2564
        %v2566 = vpop.f32.mrf.mxu0
        %v2567 = vadd.f32 0.0, %v2566
        %2568 = vmatmul.bf16.gmra.mxu0 %v2484
        %v2569 = vpop.f32.mrf.mxu0
        %v2570 = vadd.f32 0.0, %v2569
        %v2571 = vpop.f32.mrf.mxu0
        %v2572 = vadd.f32 0.0, %v2571
        %2573 = vmatmul.bf16.gmra.mxu0 %v2485
        %v2574 = vpop.f32.mrf.mxu0
        %v2575 = vadd.f32 0.0, %v2574
        %v2576 = vpop.f32.mrf.mxu0
        %v2577 = vadd.f32 0.0, %v2576
        %2578 = vmatmul.bf16.gmra.mxu0 %v2486
        %v2579 = vpop.f32.mrf.mxu0
        %v2580 = vadd.f32 0.0, %v2579
        %v2581 = vpop.f32.mrf.mxu0
        %v2582 = vadd.f32 0.0, %v2581
        %2583 = vmatmul.bf16.gmra.mxu0 %v2487
        %v2584 = vpop.f32.mrf.mxu0
        %v2585 = vadd.f32 0.0, %v2584
        %v2586 = vpop.f32.mrf.mxu0
        %v2587 = vadd.f32 0.0, %v2586
        %2588 = vmatmul.bf16.gmra.mxu0 %v2488
        %v2589 = vpop.f32.mrf.mxu0
        %v2590 = vadd.f32 0.0, %v2589
        %v2591 = vpop.f32.mrf.mxu0
        %v2592 = vadd.f32 0.0, %v2591
        %2593 = vmatmul.bf16.gmra.mxu0 %v2489
        %v2594 = vpop.f32.mrf.mxu0
        %v2595 = vadd.f32 0.0, %v2594
        %v2596 = vpop.f32.mrf.mxu0
        %v2597 = vadd.f32 0.0, %v2596
        %2598 = vmatmul.bf16.gmra.mxu0 %v2490
        %v2599 = vpop.f32.mrf.mxu0
        %v2600 = vadd.f32 0.0, %v2599
        %v2601 = vpop.f32.mrf.mxu0
        %v2602 = vadd.f32 0.0, %v2601
        %2603 = vmatmul.bf16.gmra.mxu0 %v2491
        %v2604 = vpop.f32.mrf.mxu0
        %v2605 = vadd.f32 0.0, %v2604
        %v2606 = vpop.f32.mrf.mxu0
        %v2607 = vadd.f32 0.0, %v2606
        %2608 = vmatmul.bf16.gmra.mxu0 %v2492
        %v2609 = vpop.f32.mrf.mxu0
        %v2610 = vadd.f32 0.0, %v2609
        %v2611 = vpop.f32.mrf.mxu0
        %v2612 = vadd.f32 0.0, %v2611
        %2613 = vmatmul.bf16.gmra.mxu0 %v2493
        %v2614 = vpop.f32.mrf.mxu0
        %v2615 = vadd.f32 0.0, %v2614
        %v2616 = vpop.f32.mrf.mxu0
        %v2617 = vadd.f32 0.0, %v2616
        %2618 = vmatmul.bf16.gmra.mxu0 %v2494
        %v2619 = vpop.f32.mrf.mxu0
        %v2620 = vadd.f32 0.0, %v2619
        %v2621 = vpop.f32.mrf.mxu0
        %v2622 = vadd.f32 0.0, %v2621
        %2623 = vdwg.mxu0
        %v2624 = vld [vmem:[#allocation3] sm:$0xff]
        %v2625 = vld [vmem:[#allocation3 + $0x8] sm:$0xff]
        %v2626 = vld [vmem:[#allocation3 + $0x10] sm:$0xff]
        %v2627 = vld [vmem:[#allocation3 + $0x18] sm:$0xff]
        %v2628 = vld [vmem:[#allocation3 + $0x20] sm:$0xff]
        %v2629 = vld [vmem:[#allocation3 + $0x28] sm:$0xff]
        %v2630 = vld [vmem:[#allocation3 + $0x30] sm:$0xff]
        %v2631 = vld [vmem:[#allocation3 + $0x38] sm:$0xff]
        %v2632 = vld [vmem:[#allocation3 + $0x40] sm:$0xff]
        %v2633 = vld [vmem:[#allocation3 + $0x48] sm:$0xff]
        %v2634 = vld [vmem:[#allocation3 + $0x50] sm:$0xff]
        %v2635 = vld [vmem:[#allocation3 + $0x58] sm:$0xff]
        %v2636 = vld [vmem:[#allocation3 + $0x60] sm:$0xff]
        %v2637 = vld [vmem:[#allocation3 + $0x68] sm:$0xff]
        %v2638 = vld [vmem:[#allocation3 + $0x70] sm:$0xff]
        %v2639 = vld [vmem:[#allocation3 + $0x78] sm:$0xff]
        %v2640 = vld [vmem:[#allocation3 + $0x80] sm:$0xff]
        %v2641 = vld [vmem:[#allocation3 + $0x88] sm:$0xff]
        %v2642 = vld [vmem:[#allocation3 + $0x90] sm:$0xff]
        %v2643 = vld [vmem:[#allocation3 + $0x98] sm:$0xff]
        %v2644 = vld [vmem:[#allocation3 + $0xa0] sm:$0xff]
        %v2645 = vld [vmem:[#allocation3 + $0xa8] sm:$0xff]
        %v2646 = vld [vmem:[#allocation3 + $0xb0] sm:$0xff]
        %v2647 = vld [vmem:[#allocation3 + $0xb8] sm:$0xff]
        %v2648 = vadd.f32 %v2624, %v2565
        %v2649 = vadd.f32 %v2625, %v2567
        %v2650 = vadd.f32 %v2626, %v2570
        %v2651 = vadd.f32 %v2627, %v2572
        %v2652 = vadd.f32 %v2628, %v2575
        %v2653 = vadd.f32 %v2629, %v2577
        %v2654 = vadd.f32 %v2630, %v2580
        %v2655 = vadd.f32 %v2631, %v2582
        %v2656 = vadd.f32 %v2632, %v2585
        %v2657 = vadd.f32 %v2633, %v2587
        %v2658 = vadd.f32 %v2634, %v2590
        %v2659 = vadd.f32 %v2635, %v2592
        %v2660 = vadd.f32 %v2636, %v2595
        %v2661 = vadd.f32 %v2637, %v2597
        %v2662 = vadd.f32 %v2638, %v2600
        %v2663 = vadd.f32 %v2639, %v2602
        %v2664 = vadd.f32 %v2640, %v2605
        %v2665 = vadd.f32 %v2641, %v2607
        %v2666 = vadd.f32 %v2642, %v2610
        %v2667 = vadd.f32 %v2643, %v2612
        %v2668 = vadd.f32 %v2644, %v2615
        %v2669 = vadd.f32 %v2645, %v2617
        %v2670 = vadd.f32 %v2646, %v2620
        %v2671 = vadd.f32 %v2647, %v2622
        %2672 = vst [vmem:[#allocation3] sm:$0xff] %v2648
        %2673 = vst [vmem:[#allocation3 + $0x8] sm:$0xff] %v2649
        %2674 = vst [vmem:[#allocation3 + $0x10] sm:$0xff] %v2650
        %2675 = vst [vmem:[#allocation3 + $0x18] sm:$0xff] %v2651
        %2676 = vst [vmem:[#allocation3 + $0x20] sm:$0xff] %v2652
        %2677 = vst [vmem:[#allocation3 + $0x28] sm:$0xff] %v2653
        %2678 = vst [vmem:[#allocation3 + $0x30] sm:$0xff] %v2654
        %2679 = vst [vmem:[#allocation3 + $0x38] sm:$0xff] %v2655
        %2680 = vst [vmem:[#allocation3 + $0x40] sm:$0xff] %v2656
        %2681 = vst [vmem:[#allocation3 + $0x48] sm:$0xff] %v2657
        %2682 = vst [vmem:[#allocation3 + $0x50] sm:$0xff] %v2658
        %2683 = vst [vmem:[#allocation3 + $0x58] sm:$0xff] %v2659
        %2684 = vst [vmem:[#allocation3 + $0x60] sm:$0xff] %v2660
        %2685 = vst [vmem:[#allocation3 + $0x68] sm:$0xff] %v2661
        %2686 = vst [vmem:[#allocation3 + $0x70] sm:$0xff] %v2662
        %2687 = vst [vmem:[#allocation3 + $0x78] sm:$0xff] %v2663
        %2688 = vst [vmem:[#allocation3 + $0x80] sm:$0xff] %v2664
        %2689 = vst [vmem:[#allocation3 + $0x88] sm:$0xff] %v2665
        %2690 = vst [vmem:[#allocation3 + $0x90] sm:$0xff] %v2666
        %2691 = vst [vmem:[#allocation3 + $0x98] sm:$0xff] %v2667
        %2692 = vst [vmem:[#allocation3 + $0xa0] sm:$0xff] %v2668
        %2693 = vst [vmem:[#allocation3 + $0xa8] sm:$0xff] %v2669
        %2694 = vst [vmem:[#allocation3 + $0xb0] sm:$0xff] %v2670
        %2695 = vst [vmem:[#allocation3 + $0xb8] sm:$0xff] %v2671
        %v2696 = vld [vmem:[#allocation2 + $0x18] sm:$0xf]
        %v2697 = vld [vmem:[#allocation2 + $0x1c] sm:$0xf]
        %v2698 = vld [vmem:[#allocation2 + $0x20] sm:$0xf]
        %v2699 = vld [vmem:[#allocation2 + $0x24] sm:$0xf]
        %v2700 = vld [vmem:[#allocation2 + $0x28] sm:$0xf]
        %v2701 = vld [vmem:[#allocation2 + $0x2c] sm:$0xf]
        %v2702 = vld [vmem:[#allocation2 + $0x30] sm:$0xf]
        %v2703 = vld [vmem:[#allocation2 + $0x34] sm:$0xf]
        %v2704 = vld [vmem:[#allocation2 + $0x38] sm:$0xf]
        %v2705 = vld [vmem:[#allocation2 + $0x3c] sm:$0xf]
        %v2706 = vld [vmem:[#allocation2 + $0x40] sm:$0xf]
        %v2707 = vld [vmem:[#allocation2 + $0x44] sm:$0xf]
        %v2708 = vld [vmem:[#allocation2 + $0x48] sm:$0xf]
        %v2709 = vld [vmem:[#allocation2 + $0x4c] sm:$0xf]
        %v2710 = vld [vmem:[#allocation2 + $0x50] sm:$0xf]
        %v2711 = vld [vmem:[#allocation2 + $0x54] sm:$0xf]
        %v2712 = vld [vmem:[#allocation2 + $0x58] sm:$0xf]
        %v2713 = vld [vmem:[#allocation2 + $0x5c] sm:$0xf]
        %v2714 = vld [vmem:[#allocation2 + $0x60] sm:$0xf]
        %v2715 = vld [vmem:[#allocation2 + $0x64] sm:$0xf]
        %v2716 = vld [vmem:[#allocation2 + $0x68] sm:$0xf]
        %v2717 = vld [vmem:[#allocation2 + $0x6c] sm:$0xf]
        %v2718 = vld [vmem:[#allocation2 + $0x70] sm:$0xf]
        %v2719 = vld [vmem:[#allocation2 + $0x74] sm:$0xf]
        %v2720 = vld [vmem:[#allocation2 + $0x78] sm:$0x1]
        %s2721 = scalar_lea.vmem [#allocation9], 448
        %v2722 = vld [vmem:[%s2721] sm:$0xf]
        %v2723 = vld [vmem:[%s2721 + $0x4] sm:$0xf]
        %v2724 = vld [vmem:[%s2721 + $0x8] sm:$0xf]
        %v2725 = vld [vmem:[%s2721 + $0xc] sm:$0xf]
        %v2726 = vld [vmem:[%s2721 + $0x10] sm:$0xf]
        %v2727 = vld [vmem:[%s2721 + $0x14] sm:$0xf]
        %v2728 = vld [vmem:[%s2721 + $0x18] sm:$0xf]
        %v2729 = vld [vmem:[%s2721 + $0x1c] sm:$0xf]
        %v2730 = vld [vmem:[%s2721 + $0x20] sm:$0xf]
        %v2731 = vld [vmem:[%s2721 + $0x24] sm:$0xf]
        %v2732 = vld [vmem:[%s2721 + $0x28] sm:$0xf]
        %v2733 = vld [vmem:[%s2721 + $0x2c] sm:$0xf]
        %v2734 = vld [vmem:[%s2721 + $0x30] sm:$0xf]
        %v2735 = vld [vmem:[%s2721 + $0x34] sm:$0xf]
        %v2736 = vld [vmem:[%s2721 + $0x38] sm:$0xf]
        %v2737 = vld [vmem:[%s2721 + $0x3c] sm:$0xf]
        %v2763 = vunpack.c.l.b16 %v2696
        %v2764 = vunpack.c.l.b16 %v2697
        %v2765 = vunpack.c.l.b16 %v2698
        %v2766 = vunpack.c.l.b16 %v2699
        %v2767 = vunpack.c.l.b16 %v2700
        %v2768 = vunpack.c.l.b16 %v2701
        %v2769 = vunpack.c.l.b16 %v2702
        %v2770 = vunpack.c.l.b16 %v2703
        %v2771 = vunpack.c.l.b16 %v2704
        %v2772 = vunpack.c.l.b16 %v2705
        %v2773 = vunpack.c.l.b16 %v2706
        %v2774 = vunpack.c.l.b16 %v2707
        %v2775 = vunpack.c.l.b16 %v2708
        %v2776 = vunpack.c.l.b16 %v2709
        %v2777 = vunpack.c.l.b16 %v2710
        %v2778 = vunpack.c.l.b16 %v2711
        %v2779 = vunpack.c.l.b16 %v2712
        %v2780 = vunpack.c.l.b16 %v2713
        %v2781 = vunpack.c.l.b16 %v2714
        %v2782 = vunpack.c.l.b16 %v2715
        %v2783 = vunpack.c.l.b16 %v2716
        %v2784 = vunpack.c.l.b16 %v2717
        %v2785 = vunpack.c.l.b16 %v2718
        %v2786 = vunpack.c.l.b16 %v2719
        %v2787 = vunpack.c.l.b16 %v2720
        %v2788 = vpack.c.b16 %v2764, %v2763
        %v2789 = vpack.c.b16 %v2766, %v2765
        %v2790 = vpack.c.b16 %v2768, %v2767
        %v2791 = vpack.c.b16 %v2770, %v2769
        %v2792 = vpack.c.b16 %v2772, %v2771
        %v2793 = vpack.c.b16 %v2774, %v2773
        %v2794 = vpack.c.b16 %v2776, %v2775
        %v2795 = vpack.c.b16 %v2778, %v2777
        %v2796 = vpack.c.b16 %v2780, %v2779
        %v2797 = vpack.c.b16 %v2782, %v2781
        %v2798 = vpack.c.b16 %v2784, %v2783
        %v2799 = vpack.c.b16 %v2786, %v2785
        %v2800 = vpack.c.b16 %v2787, %v2787
        %v2802 = vshrl.u32 %v2788, 16
        %v2804 = vshll.u32 %v2788, 16
        %v2806 = vrot.slane %v2804, 1
        %v2807 = vor.u32 %v2802, %v2806
        %v2809 = vshll.u32 %v2789, 16
        %v2811 = vrot.slane %v2809, 1
        %v2812 = vsel %vm721, %v2807, %v2811
        %v2813 = vshrl.u32 %v2789, 16
        %v2815 = vor.u32 %v2813, %v2811
        %v2817 = vshll.u32 %v2790, 16
        %v2819 = vrot.slane %v2817, 1
        %v2820 = vsel %vm721, %v2815, %v2819
        %v2821 = vshrl.u32 %v2790, 16
        %v2823 = vor.u32 %v2821, %v2819
        %v2825 = vshll.u32 %v2791, 16
        %v2827 = vrot.slane %v2825, 1
        %v2828 = vsel %vm721, %v2823, %v2827
        %v2829 = vshrl.u32 %v2791, 16
        %v2831 = vor.u32 %v2829, %v2827
        %v2833 = vshll.u32 %v2792, 16
        %v2835 = vrot.slane %v2833, 1
        %v2836 = vsel %vm721, %v2831, %v2835
        %v2837 = vshrl.u32 %v2792, 16
        %v2839 = vor.u32 %v2837, %v2835
        %v2841 = vshll.u32 %v2793, 16
        %v2843 = vrot.slane %v2841, 1
        %v2844 = vsel %vm721, %v2839, %v2843
        %v2845 = vshrl.u32 %v2793, 16
        %v2847 = vor.u32 %v2845, %v2843
        %v2849 = vshll.u32 %v2794, 16
        %v2851 = vrot.slane %v2849, 1
        %v2852 = vsel %vm721, %v2847, %v2851
        %v2853 = vshrl.u32 %v2794, 16
        %v2855 = vor.u32 %v2853, %v2851
        %v2857 = vshll.u32 %v2795, 16
        %v2859 = vrot.slane %v2857, 1
        %v2860 = vsel %vm721, %v2855, %v2859
        %v2861 = vshrl.u32 %v2795, 16
        %v2863 = vor.u32 %v2861, %v2859
        %v2865 = vshll.u32 %v2796, 16
        %v2867 = vrot.slane %v2865, 1
        %v2868 = vsel %vm721, %v2863, %v2867
        %v2869 = vshrl.u32 %v2796, 16
        %v2871 = vor.u32 %v2869, %v2867
        %v2873 = vshll.u32 %v2797, 16
        %v2875 = vrot.slane %v2873, 1
        %v2876 = vsel %vm721, %v2871, %v2875
        %v2877 = vshrl.u32 %v2797, 16
        %v2879 = vor.u32 %v2877, %v2875
        %v2881 = vshll.u32 %v2798, 16
        %v2883 = vrot.slane %v2881, 1
        %v2884 = vsel %vm721, %v2879, %v2883
        %v2885 = vshrl.u32 %v2798, 16
        %v2887 = vor.u32 %v2885, %v2883
        %v2889 = vshll.u32 %v2799, 16
        %v2891 = vrot.slane %v2889, 1
        %v2892 = vsel %vm721, %v2887, %v2891
        %v2893 = vshrl.u32 %v2799, 16
        %v2895 = vor.u32 %v2893, %v2891
        %v2897 = vshll.u32 %v2800, 16
        %v2899 = vrot.slane %v2897, 1
        %v2900 = vsel %vm721, %v2895, %v2899
        %v2929 = vunpack.c.l.b16 %v2722
        %v2930 = vunpack.c.l.b16 %v2723
        %v2931 = vunpack.c.l.b16 %v2724
        %v2932 = vunpack.c.l.b16 %v2725
        %v2933 = vunpack.c.l.b16 %v2726
        %v2934 = vunpack.c.l.b16 %v2727
        %v2935 = vunpack.c.l.b16 %v2728
        %v2936 = vunpack.c.l.b16 %v2729
        %v2937 = vunpack.c.l.b16 %v2730
        %v2938 = vunpack.c.l.b16 %v2731
        %v2939 = vunpack.c.l.b16 %v2732
        %v2940 = vunpack.c.l.b16 %v2733
        %v2941 = vunpack.c.l.b16 %v2734
        %v2942 = vunpack.c.l.b16 %v2735
        %v2943 = vunpack.c.l.b16 %v2736
        %v2944 = vunpack.c.l.b16 %v2737
        %v2945 = vpack.c.b16 %v2930, %v2929
        %v2946 = vpack.c.b16 %v2932, %v2931
        %v2947 = vpack.c.b16 %v2934, %v2933
        %v2948 = vpack.c.b16 %v2936, %v2935
        %v2949 = vpack.c.b16 %v2938, %v2937
        %v2950 = vpack.c.b16 %v2940, %v2939
        %v2951 = vpack.c.b16 %v2942, %v2941
        %v2952 = vpack.c.b16 %v2944, %v2943
        %2961 = vmatpush.bf16.msra.mxu0 %v2952
        %2962 = vmatpush.bf16.msra.mxu0 %v2951
        %2963 = vmatpush.bf16.msra.mxu0 %v2950
        %2964 = vmatpush.bf16.msra.mxu0 %v2949
        %2965 = vmatpush.bf16.msra.mxu0 %v2948
        %2966 = vmatpush.bf16.msra.mxu0 %v2947
        %2967 = vmatpush.bf16.msra.mxu0 %v2946
        %2968 = vmatpush.bf16.msra.mxu0 %v2945
        %2969 = vmatmul.bf16.gmra.mxu0 %v2812
        %v2970 = vpop.f32.mrf.mxu0
        %v2971 = vadd.f32 0.0, %v2970
        %v2972 = vpop.f32.mrf.mxu0
        %v2973 = vadd.f32 0.0, %v2972
        %2974 = vmatmul.bf16.gmra.mxu0 %v2820
        %v2975 = vpop.f32.mrf.mxu0
        %v2976 = vadd.f32 0.0, %v2975
        %v2977 = vpop.f32.mrf.mxu0
        %v2978 = vadd.f32 0.0, %v2977
        %2979 = vmatmul.bf16.gmra.mxu0 %v2828
        %v2980 = vpop.f32.mrf.mxu0
        %v2981 = vadd.f32 0.0, %v2980
        %v2982 = vpop.f32.mrf.mxu0
        %v2983 = vadd.f32 0.0, %v2982
        %2984 = vmatmul.bf16.gmra.mxu0 %v2836
        %v2985 = vpop.f32.mrf.mxu0
        %v2986 = vadd.f32 0.0, %v2985
        %v2987 = vpop.f32.mrf.mxu0
        %v2988 = vadd.f32 0.0, %v2987
        %2989 = vmatmul.bf16.gmra.mxu0 %v2844
        %v2990 = vpop.f32.mrf.mxu0
        %v2991 = vadd.f32 0.0, %v2990
        %v2992 = vpop.f32.mrf.mxu0
        %v2993 = vadd.f32 0.0, %v2992
        %2994 = vmatmul.bf16.gmra.mxu0 %v2852
        %v2995 = vpop.f32.mrf.mxu0
        %v2996 = vadd.f32 0.0, %v2995
        %v2997 = vpop.f32.mrf.mxu0
        %v2998 = vadd.f32 0.0, %v2997
        %2999 = vmatmul.bf16.gmra.mxu0 %v2860
        %v3000 = vpop.f32.mrf.mxu0
        %v3001 = vadd.f32 0.0, %v3000
        %v3002 = vpop.f32.mrf.mxu0
        %v3003 = vadd.f32 0.0, %v3002
        %3004 = vmatmul.bf16.gmra.mxu0 %v2868
        %v3005 = vpop.f32.mrf.mxu0
        %v3006 = vadd.f32 0.0, %v3005
        %v3007 = vpop.f32.mrf.mxu0
        %v3008 = vadd.f32 0.0, %v3007
        %3009 = vmatmul.bf16.gmra.mxu0 %v2876
        %v3010 = vpop.f32.mrf.mxu0
        %v3011 = vadd.f32 0.0, %v3010
        %v3012 = vpop.f32.mrf.mxu0
        %v3013 = vadd.f32 0.0, %v3012
        %3014 = vmatmul.bf16.gmra.mxu0 %v2884
        %v3015 = vpop.f32.mrf.mxu0
        %v3016 = vadd.f32 0.0, %v3015
        %v3017 = vpop.f32.mrf.mxu0
        %v3018 = vadd.f32 0.0, %v3017
        %3019 = vmatmul.bf16.gmra.mxu0 %v2892
        %v3020 = vpop.f32.mrf.mxu0
        %v3021 = vadd.f32 0.0, %v3020
        %v3022 = vpop.f32.mrf.mxu0
        %v3023 = vadd.f32 0.0, %v3022
        %3024 = vmatmul.bf16.gmra.mxu0 %v2900
        %v3025 = vpop.f32.mrf.mxu0
        %v3026 = vadd.f32 0.0, %v3025
        %v3027 = vpop.f32.mrf.mxu0
        %v3028 = vadd.f32 0.0, %v3027
        %3029 = vdwg.mxu0
        %v3030 = vld [vmem:[#allocation3] sm:$0xff]
        %v3031 = vld [vmem:[#allocation3 + $0x8] sm:$0xff]
        %v3032 = vld [vmem:[#allocation3 + $0x10] sm:$0xff]
        %v3033 = vld [vmem:[#allocation3 + $0x18] sm:$0xff]
        %v3034 = vld [vmem:[#allocation3 + $0x20] sm:$0xff]
        %v3035 = vld [vmem:[#allocation3 + $0x28] sm:$0xff]
        %v3036 = vld [vmem:[#allocation3 + $0x30] sm:$0xff]
        %v3037 = vld [vmem:[#allocation3 + $0x38] sm:$0xff]
        %v3038 = vld [vmem:[#allocation3 + $0x40] sm:$0xff]
        %v3039 = vld [vmem:[#allocation3 + $0x48] sm:$0xff]
        %v3040 = vld [vmem:[#allocation3 + $0x50] sm:$0xff]
        %v3041 = vld [vmem:[#allocation3 + $0x58] sm:$0xff]
        %v3042 = vld [vmem:[#allocation3 + $0x60] sm:$0xff]
        %v3043 = vld [vmem:[#allocation3 + $0x68] sm:$0xff]
        %v3044 = vld [vmem:[#allocation3 + $0x70] sm:$0xff]
        %v3045 = vld [vmem:[#allocation3 + $0x78] sm:$0xff]
        %v3046 = vld [vmem:[#allocation3 + $0x80] sm:$0xff]
        %v3047 = vld [vmem:[#allocation3 + $0x88] sm:$0xff]
        %v3048 = vld [vmem:[#allocation3 + $0x90] sm:$0xff]
        %v3049 = vld [vmem:[#allocation3 + $0x98] sm:$0xff]
        %v3050 = vld [vmem:[#allocation3 + $0xa0] sm:$0xff]
        %v3051 = vld [vmem:[#allocation3 + $0xa8] sm:$0xff]
        %v3052 = vld [vmem:[#allocation3 + $0xb0] sm:$0xff]
        %v3053 = vld [vmem:[#allocation3 + $0xb8] sm:$0xff]
        %v3054 = vadd.f32 %v3030, %v2971
        %v3055 = vadd.f32 %v3031, %v2973
        %v3056 = vadd.f32 %v3032, %v2976
        %v3057 = vadd.f32 %v3033, %v2978
        %v3058 = vadd.f32 %v3034, %v2981
        %v3059 = vadd.f32 %v3035, %v2983
        %v3060 = vadd.f32 %v3036, %v2986
        %v3061 = vadd.f32 %v3037, %v2988
        %v3062 = vadd.f32 %v3038, %v2991
        %v3063 = vadd.f32 %v3039, %v2993
        %v3064 = vadd.f32 %v3040, %v2996
        %v3065 = vadd.f32 %v3041, %v2998
        %v3066 = vadd.f32 %v3042, %v3001
        %v3067 = vadd.f32 %v3043, %v3003
        %v3068 = vadd.f32 %v3044, %v3006
        %v3069 = vadd.f32 %v3045, %v3008
        %v3070 = vadd.f32 %v3046, %v3011
        %v3071 = vadd.f32 %v3047, %v3013
        %v3072 = vadd.f32 %v3048, %v3016
        %v3073 = vadd.f32 %v3049, %v3018
        %v3074 = vadd.f32 %v3050, %v3021
        %v3075 = vadd.f32 %v3051, %v3023
        %v3076 = vadd.f32 %v3052, %v3026
        %v3077 = vadd.f32 %v3053, %v3028
        %3078 = vst [vmem:[#allocation3] sm:$0xff] %v3054
        %3079 = vst [vmem:[#allocation3 + $0x8] sm:$0xff] %v3055
        %3080 = vst [vmem:[#allocation3 + $0x10] sm:$0xff] %v3056
        %3081 = vst [vmem:[#allocation3 + $0x18] sm:$0xff] %v3057
        %3082 = vst [vmem:[#allocation3 + $0x20] sm:$0xff] %v3058
        %3083 = vst [vmem:[#allocation3 + $0x28] sm:$0xff] %v3059
        %3084 = vst [vmem:[#allocation3 + $0x30] sm:$0xff] %v3060
        %3085 = vst [vmem:[#allocation3 + $0x38] sm:$0xff] %v3061
        %3086 = vst [vmem:[#allocation3 + $0x40] sm:$0xff] %v3062
        %3087 = vst [vmem:[#allocation3 + $0x48] sm:$0xff] %v3063
        %3088 = vst [vmem:[#allocation3 + $0x50] sm:$0xff] %v3064
        %3089 = vst [vmem:[#allocation3 + $0x58] sm:$0xff] %v3065
        %3090 = vst [vmem:[#allocation3 + $0x60] sm:$0xff] %v3066
        %3091 = vst [vmem:[#allocation3 + $0x68] sm:$0xff] %v3067
        %3092 = vst [vmem:[#allocation3 + $0x70] sm:$0xff] %v3068
        %3093 = vst [vmem:[#allocation3 + $0x78] sm:$0xff] %v3069
        %3094 = vst [vmem:[#allocation3 + $0x80] sm:$0xff] %v3070
        %3095 = vst [vmem:[#allocation3 + $0x88] sm:$0xff] %v3071
        %3096 = vst [vmem:[#allocation3 + $0x90] sm:$0xff] %v3072
        %3097 = vst [vmem:[#allocation3 + $0x98] sm:$0xff] %v3073
        %3098 = vst [vmem:[#allocation3 + $0xa0] sm:$0xff] %v3074
        %3099 = vst [vmem:[#allocation3 + $0xa8] sm:$0xff] %v3075
        %3100 = vst [vmem:[#allocation3 + $0xb0] sm:$0xff] %v3076
        %3101 = vst [vmem:[#allocation3 + $0xb8] sm:$0xff] %v3077
        %v3102 = vld [vmem:[#allocation2 + $0x18] sm:$0xe]
        %v3103 = vld [vmem:[#allocation2 + $0x1c] sm:$0xf]
        %v3104 = vld [vmem:[#allocation2 + $0x20] sm:$0xf]
        %v3105 = vld [vmem:[#allocation2 + $0x24] sm:$0xf]
        %v3106 = vld [vmem:[#allocation2 + $0x28] sm:$0xf]
        %v3107 = vld [vmem:[#allocation2 + $0x2c] sm:$0xf]
        %v3108 = vld [vmem:[#allocation2 + $0x30] sm:$0xf]
        %v3109 = vld [vmem:[#allocation2 + $0x34] sm:$0xf]
        %v3110 = vld [vmem:[#allocation2 + $0x38] sm:$0xf]
        %v3111 = vld [vmem:[#allocation2 + $0x3c] sm:$0xf]
        %v3112 = vld [vmem:[#allocation2 + $0x40] sm:$0xf]
        %v3113 = vld [vmem:[#allocation2 + $0x44] sm:$0xf]
        %v3114 = vld [vmem:[#allocation2 + $0x48] sm:$0xf]
        %v3115 = vld [vmem:[#allocation2 + $0x4c] sm:$0xf]
        %v3116 = vld [vmem:[#allocation2 + $0x50] sm:$0xf]
        %v3117 = vld [vmem:[#allocation2 + $0x54] sm:$0xf]
        %v3118 = vld [vmem:[#allocation2 + $0x58] sm:$0xf]
        %v3119 = vld [vmem:[#allocation2 + $0x5c] sm:$0xf]
        %v3120 = vld [vmem:[#allocation2 + $0x60] sm:$0xf]
        %v3121 = vld [vmem:[#allocation2 + $0x64] sm:$0xf]
        %v3122 = vld [vmem:[#allocation2 + $0x68] sm:$0xf]
        %v3123 = vld [vmem:[#allocation2 + $0x6c] sm:$0xf]
        %v3124 = vld [vmem:[#allocation2 + $0x70] sm:$0xf]
        %v3125 = vld [vmem:[#allocation2 + $0x74] sm:$0xf]
        %v3126 = vld [vmem:[#allocation2 + $0x78] sm:$0x1]
        %s3127 = scalar_lea.vmem [#allocation9], 512
        %v3128 = vld [vmem:[%s3127] sm:$0xf]
        %v3129 = vld [vmem:[%s3127 + $0x4] sm:$0xf]
        %v3130 = vld [vmem:[%s3127 + $0x8] sm:$0xf]
        %v3131 = vld [vmem:[%s3127 + $0xc] sm:$0xf]
        %v3132 = vld [vmem:[%s3127 + $0x10] sm:$0xf]
        %v3133 = vld [vmem:[%s3127 + $0x14] sm:$0xf]
        %v3134 = vld [vmem:[%s3127 + $0x18] sm:$0xf]
        %v3135 = vld [vmem:[%s3127 + $0x1c] sm:$0xf]
        %v3136 = vld [vmem:[%s3127 + $0x20] sm:$0xf]
        %v3137 = vld [vmem:[%s3127 + $0x24] sm:$0xf]
        %v3138 = vld [vmem:[%s3127 + $0x28] sm:$0xf]
        %v3139 = vld [vmem:[%s3127 + $0x2c] sm:$0xf]
        %v3140 = vld [vmem:[%s3127 + $0x30] sm:$0xf]
        %v3141 = vld [vmem:[%s3127 + $0x34] sm:$0xf]
        %v3142 = vld [vmem:[%s3127 + $0x38] sm:$0xf]
        %v3143 = vld [vmem:[%s3127 + $0x3c] sm:$0xf]
        %v3169 = vunpack.c.l.b16 %v3102
        %v3170 = vunpack.c.l.b16 %v3103
        %v3171 = vunpack.c.l.b16 %v3104
        %v3172 = vunpack.c.l.b16 %v3105
        %v3173 = vunpack.c.l.b16 %v3106
        %v3174 = vunpack.c.l.b16 %v3107
        %v3175 = vunpack.c.l.b16 %v3108
        %v3176 = vunpack.c.l.b16 %v3109
        %v3177 = vunpack.c.l.b16 %v3110
        %v3178 = vunpack.c.l.b16 %v3111
        %v3179 = vunpack.c.l.b16 %v3112
        %v3180 = vunpack.c.l.b16 %v3113
        %v3181 = vunpack.c.l.b16 %v3114
        %v3182 = vunpack.c.l.b16 %v3115
        %v3183 = vunpack.c.l.b16 %v3116
        %v3184 = vunpack.c.l.b16 %v3117
        %v3185 = vunpack.c.l.b16 %v3118
        %v3186 = vunpack.c.l.b16 %v3119
        %v3187 = vunpack.c.l.b16 %v3120
        %v3188 = vunpack.c.l.b16 %v3121
        %v3189 = vunpack.c.l.b16 %v3122
        %v3190 = vunpack.c.l.b16 %v3123
        %v3191 = vunpack.c.l.b16 %v3124
        %v3192 = vunpack.c.l.b16 %v3125
        %v3193 = vunpack.c.l.b16 %v3126
        %v3194 = vpack.c.b16 %v3170, %v3169
        %v3195 = vpack.c.b16 %v3172, %v3171
        %v3196 = vpack.c.b16 %v3174, %v3173
        %v3197 = vpack.c.b16 %v3176, %v3175
        %v3198 = vpack.c.b16 %v3178, %v3177
        %v3199 = vpack.c.b16 %v3180, %v3179
        %v3200 = vpack.c.b16 %v3182, %v3181
        %v3201 = vpack.c.b16 %v3184, %v3183
        %v3202 = vpack.c.b16 %v3186, %v3185
        %v3203 = vpack.c.b16 %v3188, %v3187
        %v3204 = vpack.c.b16 %v3190, %v3189
        %v3205 = vpack.c.b16 %v3192, %v3191
        %v3206 = vpack.c.b16 %v3193, %v3193
        %v3207 = vrot.slane %v3194, 1
        %v3208 = vrot.slane %v3195, 1
        %v3209 = vsel %vm1128, %v3207, %v3208
        %v3210 = vrot.slane %v3196, 1
        %v3211 = vsel %vm1128, %v3208, %v3210
        %v3212 = vrot.slane %v3197, 1
        %v3213 = vsel %vm1128, %v3210, %v3212
        %v3214 = vrot.slane %v3198, 1
        %v3215 = vsel %vm1128, %v3212, %v3214
        %v3216 = vrot.slane %v3199, 1
        %v3217 = vsel %vm1128, %v3214, %v3216
        %v3218 = vrot.slane %v3200, 1
        %v3219 = vsel %vm1128, %v3216, %v3218
        %v3220 = vrot.slane %v3201, 1
        %v3221 = vsel %vm1128, %v3218, %v3220
        %v3222 = vrot.slane %v3202, 1
        %v3223 = vsel %vm1128, %v3220, %v3222
        %v3224 = vrot.slane %v3203, 1
        %v3225 = vsel %vm1128, %v3222, %v3224
        %v3226 = vrot.slane %v3204, 1
        %v3227 = vsel %vm1128, %v3224, %v3226
        %v3228 = vrot.slane %v3205, 1
        %v3229 = vsel %vm1128, %v3226, %v3228
        %v3230 = vrot.slane %v3206, 1
        %v3231 = vsel %vm1128, %v3228, %v3230
        %v3260 = vunpack.c.l.b16 %v3128
        %v3261 = vunpack.c.l.b16 %v3129
        %v3262 = vunpack.c.l.b16 %v3130
        %v3263 = vunpack.c.l.b16 %v3131
        %v3264 = vunpack.c.l.b16 %v3132
        %v3265 = vunpack.c.l.b16 %v3133
        %v3266 = vunpack.c.l.b16 %v3134
        %v3267 = vunpack.c.l.b16 %v3135
        %v3268 = vunpack.c.l.b16 %v3136
        %v3269 = vunpack.c.l.b16 %v3137
        %v3270 = vunpack.c.l.b16 %v3138
        %v3271 = vunpack.c.l.b16 %v3139
        %v3272 = vunpack.c.l.b16 %v3140
        %v3273 = vunpack.c.l.b16 %v3141
        %v3274 = vunpack.c.l.b16 %v3142
        %v3275 = vunpack.c.l.b16 %v3143
        %v3276 = vpack.c.b16 %v3261, %v3260
        %v3277 = vpack.c.b16 %v3263, %v3262
        %v3278 = vpack.c.b16 %v3265, %v3264
        %v3279 = vpack.c.b16 %v3267, %v3266
        %v3280 = vpack.c.b16 %v3269, %v3268
        %v3281 = vpack.c.b16 %v3271, %v3270
        %v3282 = vpack.c.b16 %v3273, %v3272
        %v3283 = vpack.c.b16 %v3275, %v3274
        %3292 = vmatpush.bf16.msra.mxu0 %v3283
        %3293 = vmatpush.bf16.msra.mxu0 %v3282
        %3294 = vmatpush.bf16.msra.mxu0 %v3281
        %3295 = vmatpush.bf16.msra.mxu0 %v3280
        %3296 = vmatpush.bf16.msra.mxu0 %v3279
        %3297 = vmatpush.bf16.msra.mxu0 %v3278
        %3298 = vmatpush.bf16.msra.mxu0 %v3277
        %3299 = vmatpush.bf16.msra.mxu0 %v3276
        %3300 = vmatmul.bf16.gmra.mxu0 %v3209
        %v3301 = vpop.f32.mrf.mxu0
        %v3302 = vadd.f32 0.0, %v3301
        %v3303 = vpop.f32.mrf.mxu0
        %v3304 = vadd.f32 0.0, %v3303
        %3305 = vmatmul.bf16.gmra.mxu0 %v3211
        %v3306 = vpop.f32.mrf.mxu0
        %v3307 = vadd.f32 0.0, %v3306
        %v3308 = vpop.f32.mrf.mxu0
        %v3309 = vadd.f32 0.0, %v3308
        %3310 = vmatmul.bf16.gmra.mxu0 %v3213
        %v3311 = vpop.f32.mrf.mxu0
        %v3312 = vadd.f32 0.0, %v3311
        %v3313 = vpop.f32.mrf.mxu0
        %v3314 = vadd.f32 0.0, %v3313
        %3315 = vmatmul.bf16.gmra.mxu0 %v3215
        %v3316 = vpop.f32.mrf.mxu0
        %v3317 = vadd.f32 0.0, %v3316
        %v3318 = vpop.f32.mrf.mxu0
        %v3319 = vadd.f32 0.0, %v3318
        %3320 = vmatmul.bf16.gmra.mxu0 %v3217
        %v3321 = vpop.f32.mrf.mxu0
        %v3322 = vadd.f32 0.0, %v3321
        %v3323 = vpop.f32.mrf.mxu0
        %v3324 = vadd.f32 0.0, %v3323
        %3325 = vmatmul.bf16.gmra.mxu0 %v3219
        %v3326 = vpop.f32.mrf.mxu0
        %v3327 = vadd.f32 0.0, %v3326
        %v3328 = vpop.f32.mrf.mxu0
        %v3329 = vadd.f32 0.0, %v3328
        %3330 = vmatmul.bf16.gmra.mxu0 %v3221
        %v3331 = vpop.f32.mrf.mxu0
        %v3332 = vadd.f32 0.0, %v3331
        %v3333 = vpop.f32.mrf.mxu0
        %v3334 = vadd.f32 0.0, %v3333
        %3335 = vmatmul.bf16.gmra.mxu0 %v3223
        %v3336 = vpop.f32.mrf.mxu0
        %v3337 = vadd.f32 0.0, %v3336
        %v3338 = vpop.f32.mrf.mxu0
        %v3339 = vadd.f32 0.0, %v3338
        %3340 = vmatmul.bf16.gmra.mxu0 %v3225
        %v3341 = vpop.f32.mrf.mxu0
        %v3342 = vadd.f32 0.0, %v3341
        %v3343 = vpop.f32.mrf.mxu0
        %v3344 = vadd.f32 0.0, %v3343
        %3345 = vmatmul.bf16.gmra.mxu0 %v3227
        %v3346 = vpop.f32.mrf.mxu0
        %v3347 = vadd.f32 0.0, %v3346
        %v3348 = vpop.f32.mrf.mxu0
        %v3349 = vadd.f32 0.0, %v3348
        %3350 = vmatmul.bf16.gmra.mxu0 %v3229
        %v3351 = vpop.f32.mrf.mxu0
        %v3352 = vadd.f32 0.0, %v3351
        %v3353 = vpop.f32.mrf.mxu0
        %v3354 = vadd.f32 0.0, %v3353
        %3355 = vmatmul.bf16.gmra.mxu0 %v3231
        %v3356 = vpop.f32.mrf.mxu0
        %v3357 = vadd.f32 0.0, %v3356
        %v3358 = vpop.f32.mrf.mxu0
        %v3359 = vadd.f32 0.0, %v3358
        %3360 = vdwg.mxu0
        %v3361 = vld [vmem:[#allocation3] sm:$0xff]
        %v3362 = vld [vmem:[#allocation3 + $0x8] sm:$0xff]
        %v3363 = vld [vmem:[#allocation3 + $0x10] sm:$0xff]
        %v3364 = vld [vmem:[#allocation3 + $0x18] sm:$0xff]
        %v3365 = vld [vmem:[#allocation3 + $0x20] sm:$0xff]
        %v3366 = vld [vmem:[#allocation3 + $0x28] sm:$0xff]
        %v3367 = vld [vmem:[#allocation3 + $0x30] sm:$0xff]
        %v3368 = vld [vmem:[#allocation3 + $0x38] sm:$0xff]
        %v3369 = vld [vmem:[#allocation3 + $0x40] sm:$0xff]
        %v3370 = vld [vmem:[#allocation3 + $0x48] sm:$0xff]
        %v3371 = vld [vmem:[#allocation3 + $0x50] sm:$0xff]
        %v3372 = vld [vmem:[#allocation3 + $0x58] sm:$0xff]
        %v3373 = vld [vmem:[#allocation3 + $0x60] sm:$0xff]
        %v3374 = vld [vmem:[#allocation3 + $0x68] sm:$0xff]
        %v3375 = vld [vmem:[#allocation3 + $0x70] sm:$0xff]
        %v3376 = vld [vmem:[#allocation3 + $0x78] sm:$0xff]
        %v3377 = vld [vmem:[#allocation3 + $0x80] sm:$0xff]
        %v3378 = vld [vmem:[#allocation3 + $0x88] sm:$0xff]
        %v3379 = vld [vmem:[#allocation3 + $0x90] sm:$0xff]
        %v3380 = vld [vmem:[#allocation3 + $0x98] sm:$0xff]
        %v3381 = vld [vmem:[#allocation3 + $0xa0] sm:$0xff]
        %v3382 = vld [vmem:[#allocation3 + $0xa8] sm:$0xff]
        %v3383 = vld [vmem:[#allocation3 + $0xb0] sm:$0xff]
        %v3384 = vld [vmem:[#allocation3 + $0xb8] sm:$0xff]
        %v3385 = vadd.f32 %v3361, %v3302
        %v3386 = vadd.f32 %v3362, %v3304
        %v3387 = vadd.f32 %v3363, %v3307
        %v3388 = vadd.f32 %v3364, %v3309
        %v3389 = vadd.f32 %v3365, %v3312
        %v3390 = vadd.f32 %v3366, %v3314
        %v3391 = vadd.f32 %v3367, %v3317
        %v3392 = vadd.f32 %v3368, %v3319
        %v3393 = vadd.f32 %v3369, %v3322
        %v3394 = vadd.f32 %v3370, %v3324
        %v3395 = vadd.f32 %v3371, %v3327
        %v3396 = vadd.f32 %v3372, %v3329
        %v3397 = vadd.f32 %v3373, %v3332
        %v3398 = vadd.f32 %v3374, %v3334
        %v3399 = vadd.f32 %v3375, %v3337
        %v3400 = vadd.f32 %v3376, %v3339
        %v3401 = vadd.f32 %v3377, %v3342
        %v3402 = vadd.f32 %v3378, %v3344
        %v3403 = vadd.f32 %v3379, %v3347
        %v3404 = vadd.f32 %v3380, %v3349
        %v3405 = vadd.f32 %v3381, %v3352
        %v3406 = vadd.f32 %v3382, %v3354
        %v3407 = vadd.f32 %v3383, %v3357
        %v3408 = vadd.f32 %v3384, %v3359
        %3409 = vst [vmem:[#allocation3] sm:$0xff] %v3385
        %3410 = vst [vmem:[#allocation3 + $0x8] sm:$0xff] %v3386
        %3411 = vst [vmem:[#allocation3 + $0x10] sm:$0xff] %v3387
        %3412 = vst [vmem:[#allocation3 + $0x18] sm:$0xff] %v3388
        %3413 = vst [vmem:[#allocation3 + $0x20] sm:$0xff] %v3389
        %3414 = vst [vmem:[#allocation3 + $0x28] sm:$0xff] %v3390
        %3415 = vst [vmem:[#allocation3 + $0x30] sm:$0xff] %v3391
        %3416 = vst [vmem:[#allocation3 + $0x38] sm:$0xff] %v3392
        %3417 = vst [vmem:[#allocation3 + $0x40] sm:$0xff] %v3393
        %3418 = vst [vmem:[#allocation3 + $0x48] sm:$0xff] %v3394
        %3419 = vst [vmem:[#allocation3 + $0x50] sm:$0xff] %v3395
        %3420 = vst [vmem:[#allocation3 + $0x58] sm:$0xff] %v3396
        %3421 = vst [vmem:[#allocation3 + $0x60] sm:$0xff] %v3397
        %3422 = vst [vmem:[#allocation3 + $0x68] sm:$0xff] %v3398
        %3423 = vst [vmem:[#allocation3 + $0x70] sm:$0xff] %v3399
        %3424 = vst [vmem:[#allocation3 + $0x78] sm:$0xff] %v3400
        %3425 = vst [vmem:[#allocation3 + $0x80] sm:$0xff] %v3401
        %3426 = vst [vmem:[#allocation3 + $0x88] sm:$0xff] %v3402
        %3427 = vst [vmem:[#allocation3 + $0x90] sm:$0xff] %v3403
        %3428 = vst [vmem:[#allocation3 + $0x98] sm:$0xff] %v3404
        %3429 = vst [vmem:[#allocation3 + $0xa0] sm:$0xff] %v3405
        %3430 = vst [vmem:[#allocation3 + $0xa8] sm:$0xff] %v3406
        %3431 = vst [vmem:[#allocation3 + $0xb0] sm:$0xff] %v3407
        %3432 = vst [vmem:[#allocation3 + $0xb8] sm:$0xff] %v3408
        %v3433 = vld [vmem:[#allocation3] sm:$0xff]
        %v3434 = vld [vmem:[#allocation3 + $0x8] sm:$0xff]
        %v3435 = vld [vmem:[#allocation3 + $0x18] sm:$0xff]
        %v3436 = vld [vmem:[#allocation3 + $0x20] sm:$0xff]
        %v3437 = vld [vmem:[#allocation3 + $0x30] sm:$0xff]
        %v3438 = vld [vmem:[#allocation3 + $0x38] sm:$0xff]
        %v3439 = vld [vmem:[#allocation3 + $0x48] sm:$0xff]
        %v3440 = vld [vmem:[#allocation3 + $0x50] sm:$0xff]
        %v3441 = vld [vmem:[#allocation3 + $0x60] sm:$0xff]
        %v3442 = vld [vmem:[#allocation3 + $0x68] sm:$0xff]
        %v3443 = vld [vmem:[#allocation3 + $0x78] sm:$0xff]
        %v3444 = vld [vmem:[#allocation3 + $0x80] sm:$0xff]
        %v3445 = vld [vmem:[#allocation3 + $0x90] sm:$0xff]
        %v3446 = vld [vmem:[#allocation3 + $0x98] sm:$0xff]
        %v3447 = vld [vmem:[#allocation3 + $0xa8] sm:$0xff]
        %v3448 = vld [vmem:[#allocation3 + $0xb0] sm:$0xff]
        %v3449 = vld [vmem:[%s3] sm:$0x1]
        %v3451 = vperm.slane %v3449, 0
        %v3453 = vadd.f32 %v3433, %v3451
        %v3454 = vadd.f32 %v3434, %v3451
        %v3455 = vadd.f32 %v3435, %v3451
        %v3456 = vadd.f32 %v3436, %v3451
        %v3457 = vadd.f32 %v3437, %v3451
        %v3458 = vadd.f32 %v3438, %v3451
        %v3459 = vadd.f32 %v3439, %v3451
        %v3460 = vadd.f32 %v3440, %v3451
        %v3461 = vadd.f32 %v3441, %v3451
        %v3462 = vadd.f32 %v3442, %v3451
        %v3463 = vadd.f32 %v3443, %v3451
        %v3464 = vadd.f32 %v3444, %v3451
        %v3465 = vadd.f32 %v3445, %v3451
        %v3466 = vadd.f32 %v3446, %v3451
        %v3467 = vadd.f32 %v3447, %v3451
        %v3468 = vadd.f32 %v3448, %v3451
        %v3469 = vpack.c.bf16 %v3453, %v3453
        %v3470 = vpack.c.bf16 %v3454, %v3454
        %v3471 = vpack.c.bf16 %v3455, %v3455
        %v3472 = vpack.c.bf16 %v3456, %v3456
        %v3473 = vpack.c.bf16 %v3457, %v3457
        %v3474 = vpack.c.bf16 %v3458, %v3458
        %v3475 = vpack.c.bf16 %v3459, %v3459
        %v3476 = vpack.c.bf16 %v3460, %v3460
        %v3477 = vpack.c.bf16 %v3461, %v3461
        %v3478 = vpack.c.bf16 %v3462, %v3462
        %v3479 = vpack.c.bf16 %v3463, %v3463
        %v3480 = vpack.c.bf16 %v3464, %v3464
        %v3481 = vpack.c.bf16 %v3465, %v3465
        %v3482 = vpack.c.bf16 %v3466, %v3466
        %v3483 = vpack.c.bf16 %v3467, %v3467
        %v3484 = vpack.c.bf16 %v3468, %v3468
        %3485 = vst [vmem:[%s297] sm:$0xf] %v3469
        %3486 = vst [vmem:[%s297 + $0x4] sm:$0xf] %v3470
        %3487 = vst [vmem:[%s297 + $0x8] sm:$0xf] %v3471
        %3488 = vst [vmem:[%s297 + $0xc] sm:$0xf] %v3472
        %3489 = vst [vmem:[%s297 + $0x10] sm:$0xf] %v3473
        %3490 = vst [vmem:[%s297 + $0x14] sm:$0xf] %v3474
        %3491 = vst [vmem:[%s297 + $0x18] sm:$0xf] %v3475
        %3492 = vst [vmem:[%s297 + $0x1c] sm:$0xf] %v3476
        %3493 = vst [vmem:[%s297 + $0x20] sm:$0xf] %v3477
        %3494 = vst [vmem:[%s297 + $0x24] sm:$0xf] %v3478
        %3495 = vst [vmem:[%s297 + $0x28] sm:$0xf] %v3479
        %3496 = vst [vmem:[%s297 + $0x2c] sm:$0xf] %v3480
        %3497 = vst [vmem:[%s297 + $0x30] sm:$0xf] %v3481
        %3498 = vst [vmem:[%s297 + $0x34] sm:$0xf] %v3482
        %3499 = vst [vmem:[%s297 + $0x38] sm:$0xf] %v3483
        %3500 = vst [vmem:[%s297 + $0x3c] sm:$0xf] %v3484
        %s3501 = sand.u32 %s144, 1
        %s3502 = scalar_lea.sflag [#allocation6], %s3501
        %s3503 = sand.u32 %s144, 1
        %s3504 = smul.addr %s3503, 64
        %s3505 = scalar_lea.vmem [#allocation10], %s3504
        // Predicated region
        $region49: #{tpu_custom_call.1} parent=35 // pred_check
          %p3506 = pneg %p154
        $region50: #{tpu_custom_call.1} parent=35 // pred_check_branch
          %3508 = sbr.rel (%p3506) target = $region52
        $region51: #{tpu_custom_call.1} parent=35 // pred_region
          %s3509 = smul.u32 8, %s29
          %3511 = vsyncadd %s3502, 0
          %s3512 = smul.addr %s3509, 2
          %s3513 = smul.addr %s28, 32
          %s3514 = sadd.s32 %s3512, %s3513
          %s3515 = smul.addr %s3514, 4
          %s3516 = scalar_lea.hbm %s4, %s3515
          %s3517 = sshll.u32 %s3505, 4
          %s3518 = int_to_ptr.vmem [resolvable:$true] %s3517
          %s3519 = sshll.u32 %s3516, 4
          %s3520 = int_to_ptr.hbm [resolvable:$true] %s3519
          %3525 = dma.vmem_to_hbm [thread:$0]  %s3518, 1024, %s3520, %s3502, 64, 64, 4
        $region52: #{tpu_custom_call.1} parent=35 // pred_fallthru
          _
      $region36: #{tpu_custom_call.1} parent=5 // pred_fallthru
        _
      %p3526 = scmp.le.s32.totalorder 2, %s19
      // Predicated region
      $region53: #{tpu_custom_call.1} parent=5 // pred_check
        %p3527 = pneg %p3526
      $region54: #{tpu_custom_call.1} parent=5 // pred_check_branch
        %3529 = sbr.rel (%p3527) target = $region56
      $region55: #{tpu_custom_call.1} parent=5 // pred_region
        %s3530 = ssub.s32 %s19, 2
        // Predicated region
        $region57: #{tpu_custom_call.1} parent=55 // pred_check
          %p3531 = pneg %p160
        $region58: #{tpu_custom_call.1} parent=55 // pred_check_branch
          %3533 = sbr.rel (%p3531) target = $region60
        $region59: #{tpu_custom_call.1} parent=55 // pred_region
          %s3534 = sand.u32 %s145, 1
          %s3535 = scalar_lea.sflag [#allocation6], %s3534
          %s3536 = sand.u32 %s145, 1
          %s3537 = smul.addr %s3536, 64
          %s3538 = scalar_lea.vmem [#allocation10], %s3537
          %3540 = dma.done %s3535, 1024
        $region60: #{tpu_custom_call.1} parent=55 // pred_fallthru
          _
      $region56: #{tpu_custom_call.1} parent=5 // pred_fallthru
        _
    $region6: #{tpu_custom_call.1} parent=1 // loop_footer
      %s23 = sadd.s32 1, %s19
    $region7: #{tpu_custom_call.1} parent=1 // loop_footer_branch
      %18 = sbr.rel target = $region3
    $region8: #{tpu_custom_call.1} parent=1 // loop_exit
      _
    %3541 = vsyncpa [#allocation5], 1
    %s3542 = scalar_lea.sflag [#allocation5], 1
    %3543 = vsyncpa %s3542, 1
    %3544 = vsyncpa [#allocation8], 1
    %s3545 = scalar_lea.sflag [#allocation8], 1
    %3546 = vsyncpa %s3545, 1
    %3547 = vsyncpa [#allocation6], 1
    %s3548 = scalar_lea.sflag [#allocation6], 1
    %3549 = vsyncpa %s3548, 1

</llo_original>
